<compile_context>
chip_gen: v5e
topology: v5e:2x2
jax: 0.10.0
libtpu: 0.0.40
codegen_flags: <defaults>
</compile_context>

<pallas_src>
import functools
import math

import jax
import jax.numpy as jnp
from jax import lax
from jax.experimental import pallas as pl
from jax.experimental.pallas import tpu as pltpu


_SCALE_FACTOR = 20.0
_INV_SQRT2 = float(2.0 ** -0.5)


def _round_up(n, m):
    return ((n + m - 1) // m) * m


# ----------------------------------------------------------------------------
# weight / bias preprocessing (done once at init)
# ----------------------------------------------------------------------------
def _prep_conv_w_mat(w):
    """Conv2d weight [C_out, C_in, kh, kw] -> im2col matrix [Kp, C_out] bf16.

    Row order is (kh, kw, C_in) to match the wrapper's patch concatenation.
    """
    c_out, c_in, kh, kw = w.shape
    k = kh * kw * c_in
    wm = jnp.transpose(w, (2, 3, 1, 0)).reshape(k, c_out)
    kp = _round_up(k, 128)
    wm = jnp.pad(wm, ((0, kp - k), (0, 0)))
    return wm.astype(jnp.bfloat16)


def _prep_deconv_s1_w_mat(w):
    """ConvTranspose2d weight [C_in, C_out, k, k] (stride 1) -> equivalent
    stride-1 conv im2col matrix (spatial flip + in/out swap)."""
    wc = jnp.transpose(jnp.flip(w, axis=(2, 3)), (1, 0, 2, 3))
    return _prep_conv_w_mat(wc)


# Sub-pixel decomposition of ConvTranspose2d(k=5, stride=2, padding=2,
# output_padding=1).  Output row oh = 2q + ph:
#   ph=0: y = x[q-1]*W[4] + x[q]*W[2] + x[q+1]*W[0]   (pad 1 before / 1 after)
#   ph=1: y = x[q]  *W[3] + x[q+1]*W[1]               (pad 0 before / 1 after)
_PH_TAPS = ([4, 2, 0], [3, 1])
_PH_PADS = ((1, 1), (0, 1))


def _prep_deconv_s2_w_mats(w):
    """ConvTranspose2d weight [C_in, C_out, 5, 5] -> 4 phase im2col matrices."""
    mats = []
    for ph in range(2):
        for pw in range(2):
            khs, kws = _PH_TAPS[ph], _PH_TAPS[pw]
            sub = w[:, :, khs, :][:, :, :, kws]        # [C_in, C_out, nkh, nkw]
            sub = jnp.transpose(sub, (1, 0, 2, 3))     # conv layout
            mats.append(_prep_conv_w_mat(sub))
    return tuple(mats)


def _prep_row(v):
    """[N] vector -> [1, N] f32 row (bias / channel-scale row, no padding)."""
    return jnp.asarray(v, jnp.float32).reshape(1, -1)


# ----------------------------------------------------------------------------
# Pallas kernels: single deep-K matmul per M tile, fused epilogues
# ----------------------------------------------------------------------------
def _conv_kernel(a_ref, w_ref, b_ref, o_ref, *, relu):
    r = jnp.dot(a_ref[...], w_ref[...], preferred_element_type=jnp.float32)
    r = r + b_ref[...]
    if relu:
        r = jnp.maximum(r, 0.0)
    o_ref[...] = r.astype(o_ref.dtype)


def _conv_quant_kernel(a_ref, w_ref, b_ref, yq_ref):
    """a4 conv + fused RoundWithNoise hot path (global fallback in wrapper)."""
    y = jnp.dot(a_ref[...], w_ref[...], preferred_element_type=jnp.float32)
    y = y + b_ref[...]
    yq_ref[...] = jnp.round(y * _SCALE_FACTOR) * (1.0 / _SCALE_FACTOR)


def _erfc_poly(z):
    """erfc(z) for z >= 0 via Abramowitz-Stegun 7.1.26 (abs err ~1.5e-7)."""
    t = pl.reciprocal(1.0 + 0.3275911 * z, approx=True)
    poly = t * (0.254829592 + t * (-0.284496736 + t * (1.421413741
                + t * (-1.453152027 + t * 1.061405429))))
    return poly * jnp.exp(-z * z)


def _std_cumulative(x):
    # CompressAI: 0.5 * erfc(-(2**-0.5) * x), any sign.
    u = -x * _INV_SQRT2
    e = _erfc_poly(jnp.abs(u))
    return 0.5 * jnp.where(u >= 0.0, e, 2.0 - e)


def _std_cumulative_nonpos(x):
    # x <= 0 guaranteed -> -x/sqrt(2) >= 0 -> branch-free erfc path.
    return 0.5 * _erfc_poly(-x * _INV_SQRT2)


def _conv_entropy_kernel(a_ref, w_ref, b_ref, yq_ref, ch_ref,
                         yhat_ref, lik_ref):
    """c3 conv + fused EntropyBottleneck / GaussianConditional epilogue."""
    raw = jnp.dot(a_ref[...], w_ref[...], preferred_element_type=jnp.float32)
    raw = raw + b_ref[...]
    # scales = exp(context_pred) + clamp(channel, 0.1, 4.0); the per-channel
    # clamp is hoisted to init (ch_ref is pre-clipped).  Scale bound 0.11.
    scales = jnp.maximum(jnp.exp(raw) + ch_ref[...], 0.11)
    inv_s = pl.reciprocal(scales, approx=True)
    y_hat = jnp.round(yq_ref[...])            # eval-mode dequantize, means=None
    v = jnp.abs(y_hat)
    upper = _std_cumulative((0.5 - v) * inv_s)
    lower = _std_cumulative_nonpos((-0.5 - v) * inv_s)
    # LowerBound(1e-9) followed by clamp(1e-10, 1.0) == clip(1e-9, 1.0)
    lik = jnp.clip(upper - lower, 1e-9, 1.0)
    yhat_ref[...] = y_hat
    lik_ref[...] = lik


# ----------------------------------------------------------------------------
# conv wrapper: im2col + single gridded pallas_call per layer
# ----------------------------------------------------------------------------
def _conv_block(x_nhwc, w_mat, bias_row, *, c_out, kh, kw, stride=1,
                pad_h=(0, 0), pad_w=(0, 0), mode="plain", relu=True,
                out_dtype=jnp.bfloat16, yq=None, ch_row=None, tm_max=1024):
    B, H, W, C = x_nhwc.shape
    K = kh * kw * C
    Kp = w_mat.shape[0]
    assert Kp == _round_up(K, 128)
    Ho = (H + pad_h[0] + pad_h[1] - kh) // stride + 1
    Wo = (W + pad_w[0] + pad_w[1] - kw) // stride + 1
    M = B * Ho * Wo

    # im2col: one lane-dense [M, Kp] patch matrix so the kernel does a single
    # deep-contraction matmul per tile (no per-tap grid steps).
    # TODO(synk): this still reads the activation kh*kw times through XLA; an
    # in-kernel halo gather from a resident NHWC block would remove that.
    xp = x_nhwc.astype(jnp.bfloat16)
    if pad_h != (0, 0) or pad_w != (0, 0):
        xp = jnp.pad(xp, ((0, 0), pad_h, pad_w, (0, 0)))
    hi = stride * (Ho - 1) + 1
    wi = stride * (Wo - 1) + 1
    cols = [xp[:, i:i + hi:stride, j:j + wi:stride, :]
            for i in range(kh) for j in range(kw)]
    A = jnp.concatenate(cols, axis=-1).reshape(M, K)
    if Kp != K:
        A = jnp.pad(A, ((0, 0), (0, Kp - K)))

    # >= 2 M tiles so dimension_semantics=("parallel",) can shard across both
    # v7x TensorCores; TM multiple of 16 keeps bf16 blocks tile-aligned.
    TM = max(16, min(tm_max, _round_up((M + 1) // 2, 16)))
    Mp = _round_up(M, TM)
    if Mp != M:
        A = jnp.pad(A, ((0, Mp - M), (0, 0)))
    grid = (Mp // TM,)

    a_spec = pl.BlockSpec((TM, Kp), lambda i: (i, 0))
    w_spec = pl.BlockSpec((Kp, c_out), lambda i: (0, 0))      # resident weight
    row_spec = pl.BlockSpec((1, c_out), lambda i: (0, 0))
    out_spec = pl.BlockSpec((TM, c_out), lambda i: (i, 0))
    cparams = pltpu.CompilerParams(dimension_semantics=("parallel",))

    if mode == "plain":
        out = pl.pallas_call(
            functools.partial(_conv_kernel, relu=relu),
            out_shape=jax.ShapeDtypeStruct((Mp, c_out), out_dtype),
            grid=grid,
            in_specs=[a_spec, w_spec, row_spec],
            out_specs=out_spec,
            compiler_params=cparams,
        )(A, w_mat, bias_row)
        return out[:M].reshape(B, Ho, Wo, c_out)

    if mode == "quant":
        yq_o = pl.pallas_call(
            _conv_quant_kernel,
            out_shape=jax.ShapeDtypeStruct((Mp, c_out), jnp.float32),
            grid=grid,
            in_specs=[a_spec, w_spec, row_spec],
            out_specs=out_spec,
            compiler_params=cparams,
        )(A, w_mat, bias_row)
        yq_flat = yq_o[:M]
        # RoundWithNoise global all-zero fallback (exact torch.all semantics);
        # y_pre is only recomputed inside lax.cond, so the hot path never
        # writes a full-resolution f32 pre-quantization tensor to HBM.
        all_small = jnp.max(jnp.abs(yq_flat)) * _SCALE_FACTOR < 1e-6

        def _fallback(_):
            y_pre = (jnp.dot(A[:M], w_mat, preferred_element_type=jnp.float32)
                     + bias_row)
            s = y_pre * _SCALE_FACTOR
            return (jnp.sign(s) * jnp.maximum(jnp.abs(s), 0.25)
                    * (1.0 / _SCALE_FACTOR))

        yq_flat = lax.cond(all_small, _fallback, lambda _: yq_flat, None)
        return yq_flat.reshape(B, Ho, Wo, c_out)

    # mode == "entropy": extra inputs y_quantized and the pre-clipped
    # per-channel scale row.
    assert yq is not None and ch_row is not None
    assert yq.shape == (B, Ho, Wo, c_out)
    yq2 = yq.reshape(M, c_out).astype(jnp.float32)
    if Mp != M:
        yq2 = jnp.pad(yq2, ((0, Mp - M), (0, 0)))
    yq_spec = pl.BlockSpec((TM, c_out), lambda i: (i, 0))
    ch_spec = pl.BlockSpec((1, c_out), lambda i: (0, 0))
    yhat_o, lik_o = pl.pallas_call(
        _conv_entropy_kernel,
        out_shape=(jax.ShapeDtypeStruct((Mp, c_out), jnp.float32),
                   jax.ShapeDtypeStruct((Mp, c_out), jnp.float32)),
        grid=grid,
        in_specs=[a_spec, w_spec, row_spec, yq_spec, ch_spec],
        out_specs=(pl.BlockSpec((TM, c_out), lambda i: (i, 0)),
                   pl.BlockSpec((TM, c_out), lambda i: (i, 0))),
        compiler_params=cparams,
    )(A, w_mat, bias_row, yq2, ch_row)
    y_hat = yhat_o[:M].reshape(B, Ho, Wo, c_out)
    lik = lik_o[:M].reshape(B, Ho, Wo, c_out)
    return y_hat, lik


# ----------------------------------------------------------------------------
# transposed-conv wrappers
# ----------------------------------------------------------------------------
def _deconv_s1_block(x, w_mat, bias_row, *, c_out, k, padding,
                     relu=True, out_dtype=jnp.bfloat16):
    """ConvTranspose2d stride 1 == stride-1 conv with pre-flipped weights."""
    pb = k - 1 - padding
    return _conv_block(x, w_mat, bias_row, c_out=c_out, kh=k, kw=k, stride=1,
                       pad_h=(pb, pb), pad_w=(pb, pb), relu=relu,
                       out_dtype=out_dtype)


def _deconv_s2_block(x, w_mats, bias_row, *, c_out, relu=True,
                     out_dtype=jnp.bfloat16):
    """ConvTranspose2d(k=5, s=2, p=2, op=1) via sub-pixel decomposition:
    4 stride-1 phase convs on the un-dilated input, outputs interleaved."""
    B, H, W, _ = x.shape
    outs = []
    for ph in range(2):
        for pw in range(2):
            nkh, nkw = len(_PH_TAPS[ph]), len(_PH_TAPS[pw])
            o = _conv_block(x, w_mats[ph * 2 + pw], bias_row, c_out=c_out,
                            kh=nkh, kw=nkw, stride=1,
                            pad_h=_PH_PADS[ph], pad_w=_PH_PADS[pw],
                            relu=relu, out_dtype=out_dtype)
            outs.append(o)                                   # [B, H, W, c_out]
    o = jnp.stack(outs, axis=0).reshape(2, 2, B, H, W, c_out)
    o = jnp.transpose(o, (2, 3, 0, 4, 1, 5)).reshape(B, 2 * H, 2 * W, c_out)
    return o


# ----------------------------------------------------------------------------
# parameter construction (deterministic He-style init; pre-packed once)
# ----------------------------------------------------------------------------
def init_params(key, input_channels=8, latent_channels=16):
    Ci, L = input_channels, latent_channels
    keys = jax.random.split(key, 32)
    ki = iter(range(32))

    def conv_w(k, c_out, c_in, ks):
        std = math.sqrt(2.0 / (c_in * ks * ks))
        return jax.random.normal(k, (c_out, c_in, ks, ks), jnp.float32) * std

    def deconv_w(k, c_in, c_out, ks):
        std = math.sqrt(2.0 / (c_in * ks * ks))
        return jax.random.normal(k, (c_in, c_out, ks, ks), jnp.float32) * std

    def bias(k, n):
        return jax.random.normal(k, (n,), jnp.float32) * 0.01

    p = {}

    def add_conv(name, c_out, c_in, ks):
        p[name + "_w"] = _prep_conv_w_mat(conv_w(keys[next(ki)], c_out, c_in, ks))
        p[name + "_b"] = _prep_row(bias(keys[next(ki)], c_out))

    def add_deconv_s1(name, c_in, c_out, ks):
        p[name + "_w"] = _prep_deconv_s1_w_mat(deconv_w(keys[next(ki)], c_in, c_out, ks))
        p[name + "_b"] = _prep_row(bias(keys[next(ki)], c_out))

    def add_deconv_s2(name, c_in, c_out):
        p[name + "_w"] = _prep_deconv_s2_w_mats(deconv_w(keys[next(ki)], c_in, c_out, 5))
        p[name + "_b"] = _prep_row(bias(keys[next(ki)], c_out))

    # analysis_transform
    add_conv("a1", L, Ci, 5); add_conv("a2", L, L, 5)
    add_conv("a3", L, L, 3);  add_conv("a4", L, L, 3)
    # entropy bottleneck context_prediction
    add_conv("c1", L, L, 5); add_conv("c2", L, L, 5); add_conv("c3", L, L, 5)
    # synthesis_transform
    add_deconv_s1("s1", L, L, 3); add_deconv_s1("s2", L, L, 3)
    add_deconv_s2("s3", L, L);    add_deconv_s2("s4", L, Ci)

    eb_scales = jnp.ones((L,), jnp.float32) * 0.1            # init_scale
    # clamp(0.1, 4.0) hoisted out of the kernel once.
    p["eb_ch_row"] = _prep_row(jnp.clip(eb_scales, 0.1, 4.0))
    # TODO(synk): _medians parameter exists in the module but is unused in forward.
    return p


# ----------------------------------------------------------------------------
# full forward pass (MultiLambdaCompressorVNVC.forward == one CompressorVNVC;
# lambda only affects the loss, not the forward computation)
# ----------------------------------------------------------------------------
def make_forward(input_channels=8, latent_channels=16):
    Ci, L = input_channels, latent_channels

    def forward(params, x):
        p = params
        xh = jnp.transpose(x, (0, 2, 3, 1))       # NCHW -> NHWC (boundary only)

        # analysis transform
        h = _conv_block(xh, p["a1_w"], p["a1_b"], c_out=L, kh=5, kw=5, stride=2,
                        pad_h=(2, 2), pad_w=(2, 2))
        h = _conv_block(h, p["a2_w"], p["a2_b"], c_out=L, kh=5, kw=5, stride=2,
                        pad_h=(2, 2), pad_w=(2, 2))
        h = _conv_block(h, p["a3_w"], p["a3_b"], c_out=L, kh=3, kw=3, stride=1,
                        pad_h=(1, 1), pad_w=(1, 1))
        # a4 conv with RoundWithNoise fused into the epilogue (no ReLU after a4)
        y_quantized = _conv_block(h, p["a4_w"], p["a4_b"], c_out=L, kh=3, kw=3,
                                  stride=1, pad_h=(1, 1), pad_w=(1, 1),
                                  mode="quant")

        # entropy bottleneck: context prediction + fused Gaussian likelihood
        # TODO(synk): c1->c2->c3 (and a3->a4, s1->s2) could be fused into a
        # single pallas_call with in-kernel halo exchange to drop the im2col
        # glue between same-resolution layers.
        s = _conv_block(y_quantized, p["c1_w"], p["c1_b"], c_out=L, kh=5, kw=5,
                        stride=1, pad_h=(2, 2), pad_w=(2, 2))
        s = _conv_block(s, p["c2_w"], p["c2_b"], c_out=L, kh=5, kw=5,
                        stride=1, pad_h=(2, 2), pad_w=(2, 2))
        y_hat, likelihoods = _conv_block(
            s, p["c3_w"], p["c3_b"], c_out=L, kh=5, kw=5, stride=1,
            pad_h=(2, 2), pad_w=(2, 2), mode="entropy",
            yq=y_quantized, ch_row=p["eb_ch_row"])

        # synthesis transform
        g = _deconv_s1_block(y_hat, p["s1_w"], p["s1_b"], c_out=L, k=3, padding=1)
        g = _deconv_s1_block(g, p["s2_w"], p["s2_b"], c_out=L, k=3, padding=1)
        g = _deconv_s2_block(g, p["s3_w"], p["s3_b"], c_out=L)
        x_hat = _deconv_s2_block(g, p["s4_w"], p["s4_b"], c_out=Ci,
                                 relu=False, out_dtype=jnp.float32)

        to_nchw = lambda a: jnp.transpose(a, (0, 3, 1, 2))   # boundary only
        return to_nchw(x_hat), to_nchw(likelihoods), to_nchw(y_quantized)

    return forward


if __name__ == "__main__":
    key = jax.random.PRNGKey(0)
    k_par, k_x = jax.random.split(key)

    B, Ci, L, H, W = 2, 8, 16, 16, 16
    params = init_params(k_par, input_channels=Ci, latent_channels=L)
    x = jax.random.normal(k_x, (B, Ci, H, W), jnp.float32)

    fwd = jax.jit(make_forward(input_channels=Ci, latent_channels=L))
    x_hat, likelihoods, y_quantized = fwd(params, x)
    jax.block_until_ready((x_hat, likelihoods, y_quantized))

    assert x_hat.shape == (B, Ci, H, W)
    assert likelihoods.shape == (B, L, H // 4, W // 4)
    assert y_quantized.shape == (B, L, H // 4, W // 4)
    assert bool(jnp.all(jnp.isfinite(x_hat)))
    assert bool(jnp.all(likelihoods >= 1e-10)) and bool(jnp.all(likelihoods <= 1.0))

    print("KERNEL_OK")
</pallas_src>

<mosaic_0001>
module attributes {stable_mosaic.version = 11 : i64} {
  func.func @_conv_kernel(%arg0: i32, %arg1: memref<64x256xbf16, #tpu.memory_space<vmem>>, %arg2: memref<256x16xbf16, #tpu.memory_space<vmem>>, %arg3: memref<1x16xf32, #tpu.memory_space<vmem>>, %arg4: memref<64x16xbf16, #tpu.memory_space<vmem>>) attributes {dimension_semantics = [#tpu.dimension_semantics<parallel>], iteration_bounds = array<i64: 2>, scalar_prefetch = 0 : i64, scratch_operands = 0 : i64, tpu.core_type = #tpu.core_type<tc>, window_params = [{transform_indices = @transform_0, window_bounds = array<i64: 64, 256>}, {pipeline_mode = #tpu.pipeline_mode<synchronous>, transform_indices = @transform_1, window_bounds = array<i64: 256, 16>}, {pipeline_mode = #tpu.pipeline_mode<synchronous>, transform_indices = @transform_2, window_bounds = array<i64: 1, 16>}, {transform_indices = @transform_3, window_bounds = array<i64: 64, 16>}]} {
    %c0 = arith.constant 0 : index
    %c0_0 = arith.constant 0 : index
    %0 = vector.load %arg1[%c0, %c0_0] : memref<64x256xbf16, #tpu.memory_space<vmem>>, vector<64x256xbf16>
    %c0_1 = arith.constant 0 : index
    %c0_2 = arith.constant 0 : index
    %1 = vector.load %arg2[%c0_1, %c0_2] : memref<256x16xbf16, #tpu.memory_space<vmem>>, vector<256x16xbf16>
    %cst = arith.constant dense<0.000000e+00> : vector<64x16xf32>
    %2 = tpu.matmul %0, %1, %cst {dimension_numbers = #tpu.dot_dimension_numbers<[1], [0], [0], [1], [0, 0, 1, 1], [], []>} : vector<64x256xbf16>, vector<256x16xbf16>, vector<64x16xf32> -> vector<64x16xf32>
    %c0_3 = arith.constant 0 : index
    %c0_4 = arith.constant 0 : index
    %3 = vector.load %arg3[%c0_3, %c0_4] : memref<1x16xf32, #tpu.memory_space<vmem>>, vector<1x16xf32>
    %4 = vector.broadcast %3 : vector<1x16xf32> to vector<64x16xf32>
    %5 = arith.addf %2, %4 : vector<64x16xf32>
    %cst_5 = arith.constant 0.000000e+00 : f32
    %6 = vector.broadcast %cst_5 : f32 to vector<64x16xf32>
    %7 = arith.maximumf %5, %6 : vector<64x16xf32>
    %8 = arith.truncf %7 : vector<64x16xf32> to vector<64x16xbf16>
    %c0_6 = arith.constant 0 : index
    %c0_7 = arith.constant 0 : index
    %9 = vector.load %arg4[%c0_6, %c0_7] : memref<64x16xbf16, #tpu.memory_space<vmem>>, vector<64x16xbf16>
    tpu.vector_store %arg4[%c0_6, %c0_7], %8 {strides = array<i32>} : memref<64x16xbf16, #tpu.memory_space<vmem>>, vector<64x16xbf16>,
    return
  }
  func.func @transform_0(%arg0: i32) -> (i32, i32) {
    %c0_i32 = arith.constant 0 : i32
    %c0_i32_0 = arith.constant 0 : i32
    return %arg0, %c0_i32 : i32, i32
  }
  func.func @transform_1(%arg0: i32) -> (i32, i32) {
    %c0_i32 = arith.constant 0 : i32
    %c0_i32_0 = arith.constant 0 : i32
    %c0_i32_1 = arith.constant 0 : i32
    return %c0_i32, %c0_i32_0 : i32, i32
  }
  func.func @transform_2(%arg0: i32) -> (i32, i32) {
    %c0_i32 = arith.constant 0 : i32
    %c0_i32_0 = arith.constant 0 : i32
    %c0_i32_1 = arith.constant 0 : i32
    return %c0_i32, %c0_i32_0 : i32, i32
  }
  func.func @transform_3(%arg0: i32) -> (i32, i32) {
    %c0_i32 = arith.constant 0 : i32
    %c0_i32_0 = arith.constant 0 : i32
    return %arg0, %c0_i32 : i32, i32
  }
}

module attributes {stable_mosaic.version = 11 : i64} {
  func.func @_conv_kernel(%arg0: i32, %arg1: memref<16x512xbf16, #tpu.memory_space<vmem>>, %arg2: memref<512x16xbf16, #tpu.memory_space<vmem>>, %arg3: memref<1x16xf32, #tpu.memory_space<vmem>>, %arg4: memref<16x16xbf16, #tpu.memory_space<vmem>>) attributes {dimension_semantics = [#tpu.dimension_semantics<parallel>], iteration_bounds = array<i64: 2>, scalar_prefetch = 0 : i64, scratch_operands = 0 : i64, tpu.core_type = #tpu.core_type<tc>, window_params = [{transform_indices = @transform_0, window_bounds = array<i64: 16, 512>}, {pipeline_mode = #tpu.pipeline_mode<synchronous>, transform_indices = @transform_1, window_bounds = array<i64: 512, 16>}, {pipeline_mode = #tpu.pipeline_mode<synchronous>, transform_indices = @transform_2, window_bounds = array<i64: 1, 16>}, {transform_indices = @transform_3, window_bounds = array<i64: 16, 16>}]} {
    %c0 = arith.constant 0 : index
    %c0_0 = arith.constant 0 : index
    %0 = vector.load %arg1[%c0, %c0_0] : memref<16x512xbf16, #tpu.memory_space<vmem>>, vector<16x512xbf16>
    %c0_1 = arith.constant 0 : index
    %c0_2 = arith.constant 0 : index
    %1 = vector.load %arg2[%c0_1, %c0_2] : memref<512x16xbf16, #tpu.memory_space<vmem>>, vector<512x16xbf16>
    %cst = arith.constant dense<0.000000e+00> : vector<16x16xf32>
    %2 = tpu.matmul %0, %1, %cst {dimension_numbers = #tpu.dot_dimension_numbers<[1], [0], [0], [1], [0, 0, 1, 1], [], []>} : vector<16x512xbf16>, vector<512x16xbf16>, vector<16x16xf32> -> vector<16x16xf32>
    %c0_3 = arith.constant 0 : index
    %c0_4 = arith.constant 0 : index
    %3 = vector.load %arg3[%c0_3, %c0_4] : memref<1x16xf32, #tpu.memory_space<vmem>>, vector<1x16xf32>
    %4 = vector.broadcast %3 : vector<1x16xf32> to vector<16x16xf32>
    %5 = arith.addf %2, %4 : vector<16x16xf32>
    %cst_5 = arith.constant 0.000000e+00 : f32
    %6 = vector.broadcast %cst_5 : f32 to vector<16x16xf32>
    %7 = arith.maximumf %5, %6 : vector<16x16xf32>
    %8 = arith.truncf %7 : vector<16x16xf32> to vector<16x16xbf16>
    %c0_6 = arith.constant 0 : index
    %c0_7 = arith.constant 0 : index
    %9 = vector.load %arg4[%c0_6, %c0_7] : memref<16x16xbf16, #tpu.memory_space<vmem>>, vector<16x16xbf16>
    tpu.vector_store %arg4[%c0_6, %c0_7], %8 {strides = array<i32>} : memref<16x16xbf16, #tpu.memory_space<vmem>>, vector<16x16xbf16>,
    return
  }
  func.func @transform_0(%arg0: i32) -> (i32, i32) {
    %c0_i32 = arith.constant 0 : i32
    %c0_i32_0 = arith.constant 0 : i32
    return %arg0, %c0_i32 : i32, i32
  }
  func.func @transform_1(%arg0: i32) -> (i32, i32) {
    %c0_i32 = arith.constant 0 : i32
    %c0_i32_0 = arith.constant 0 : i32
    %c0_i32_1 = arith.constant 0 : i32
    return %c0_i32, %c0_i32_0 : i32, i32
  }
  func.func @transform_2(%arg0: i32) -> (i32, i32) {
    %c0_i32 = arith.constant 0 : i32
    %c0_i32_0 = arith.constant 0 : i32
    %c0_i32_1 = arith.constant 0 : i32
    return %c0_i32, %c0_i32_0 : i32, i32
  }
  func.func @transform_3(%arg0: i32) -> (i32, i32) {
    %c0_i32 = arith.constant 0 : i32
    %c0_i32_0 = arith.constant 0 : i32
    return %arg0, %c0_i32 : i32, i32
  }
}

module attributes {stable_mosaic.version = 11 : i64} {
  func.func @_conv_quant_kernel(%arg0: i32, %arg1: memref<16x256xbf16, #tpu.memory_space<vmem>>, %arg2: memref<256x16xbf16, #tpu.memory_space<vmem>>, %arg3: memref<1x16xf32, #tpu.memory_space<vmem>>, %arg4: memref<16x16xf32, #tpu.memory_space<vmem>>) attributes {dimension_semantics = [#tpu.dimension_semantics<parallel>], iteration_bounds = array<i64: 2>, scalar_prefetch = 0 : i64, scratch_operands = 0 : i64, tpu.core_type = #tpu.core_type<tc>, window_params = [{transform_indices = @transform_0, window_bounds = array<i64: 16, 256>}, {pipeline_mode = #tpu.pipeline_mode<synchronous>, transform_indices = @transform_1, window_bounds = array<i64: 256, 16>}, {pipeline_mode = #tpu.pipeline_mode<synchronous>, transform_indices = @transform_2, window_bounds = array<i64: 1, 16>}, {transform_indices = @transform_3, window_bounds = array<i64: 16, 16>}]} {
    %c0 = arith.constant 0 : index
    %c0_0 = arith.constant 0 : index
    %0 = vector.load %arg1[%c0, %c0_0] : memref<16x256xbf16, #tpu.memory_space<vmem>>, vector<16x256xbf16>
    %c0_1 = arith.constant 0 : index
    %c0_2 = arith.constant 0 : index
    %1 = vector.load %arg2[%c0_1, %c0_2] : memref<256x16xbf16, #tpu.memory_space<vmem>>, vector<256x16xbf16>
    %cst = arith.constant dense<0.000000e+00> : vector<16x16xf32>
    %2 = tpu.matmul %0, %1, %cst {dimension_numbers = #tpu.dot_dimension_numbers<[1], [0], [0], [1], [0, 0, 1, 1], [], []>} : vector<16x256xbf16>, vector<256x16xbf16>, vector<16x16xf32> -> vector<16x16xf32>
    %c0_3 = arith.constant 0 : index
    %c0_4 = arith.constant 0 : index
    %3 = vector.load %arg3[%c0_3, %c0_4] : memref<1x16xf32, #tpu.memory_space<vmem>>, vector<1x16xf32>
    %4 = vector.broadcast %3 : vector<1x16xf32> to vector<16x16xf32>
    %5 = arith.addf %2, %4 : vector<16x16xf32>
    %cst_5 = arith.constant 2.000000e+01 : f32
    %6 = vector.broadcast %cst_5 : f32 to vector<16x16xf32>
    %7 = arith.mulf %5, %6 : vector<16x16xf32>
    %8 = math.roundeven %7 : vector<16x16xf32>
    %cst_6 = arith.constant 5.000000e-02 : f32
    %9 = vector.broadcast %cst_6 : f32 to vector<16x16xf32>
    %10 = arith.mulf %8, %9 : vector<16x16xf32>
    %c0_7 = arith.constant 0 : index
    %c0_8 = arith.constant 0 : index
    %11 = vector.load %arg4[%c0_7, %c0_8] : memref<16x16xf32, #tpu.memory_space<vmem>>, vector<16x16xf32>
    tpu.vector_store %arg4[%c0_7, %c0_8], %10 {strides = array<i32>} : memref<16x16xf32, #tpu.memory_space<vmem>>, vector<16x16xf32>,
    return
  }
  func.func @transform_0(%arg0: i32) -> (i32, i32) {
    %c0_i32 = arith.constant 0 : i32
    %c0_i32_0 = arith.constant 0 : i32
    return %arg0, %c0_i32 : i32, i32
  }
  func.func @transform_1(%arg0: i32) -> (i32, i32) {
    %c0_i32 = arith.constant 0 : i32
    %c0_i32_0 = arith.constant 0 : i32
    %c0_i32_1 = arith.constant 0 : i32
    return %c0_i32, %c0_i32_0 : i32, i32
  }
  func.func @transform_2(%arg0: i32) -> (i32, i32) {
    %c0_i32 = arith.constant 0 : i32
    %c0_i32_0 = arith.constant 0 : i32
    %c0_i32_1 = arith.constant 0 : i32
    return %c0_i32, %c0_i32_0 : i32, i32
  }
  func.func @transform_3(%arg0: i32) -> (i32, i32) {
    %c0_i32 = arith.constant 0 : i32
    %c0_i32_0 = arith.constant 0 : i32
    return %arg0, %c0_i32 : i32, i32
  }
}

module attributes {stable_mosaic.version = 11 : i64} {
  func.func @_conv_kernel(%arg0: i32, %arg1: memref<16x256xbf16, #tpu.memory_space<vmem>>, %arg2: memref<256x16xbf16, #tpu.memory_space<vmem>>, %arg3: memref<1x16xf32, #tpu.memory_space<vmem>>, %arg4: memref<16x16xbf16, #tpu.memory_space<vmem>>) attributes {dimension_semantics = [#tpu.dimension_semantics<parallel>], iteration_bounds = array<i64: 2>, scalar_prefetch = 0 : i64, scratch_operands = 0 : i64, tpu.core_type = #tpu.core_type<tc>, window_params = [{transform_indices = @transform_0, window_bounds = array<i64: 16, 256>}, {pipeline_mode = #tpu.pipeline_mode<synchronous>, transform_indices = @transform_1, window_bounds = array<i64: 256, 16>}, {pipeline_mode = #tpu.pipeline_mode<synchronous>, transform_indices = @transform_2, window_bounds = array<i64: 1, 16>}, {transform_indices = @transform_3, window_bounds = array<i64: 16, 16>}]} {
    %c0 = arith.constant 0 : index
    %c0_0 = arith.constant 0 : index
    %0 = vector.load %arg1[%c0, %c0_0] : memref<16x256xbf16, #tpu.memory_space<vmem>>, vector<16x256xbf16>
    %c0_1 = arith.constant 0 : index
    %c0_2 = arith.constant 0 : index
    %1 = vector.load %arg2[%c0_1, %c0_2] : memref<256x16xbf16, #tpu.memory_space<vmem>>, vector<256x16xbf16>
    %cst = arith.constant dense<0.000000e+00> : vector<16x16xf32>
    %2 = tpu.matmul %0, %1, %cst {dimension_numbers = #tpu.dot_dimension_numbers<[1], [0], [0], [1], [0, 0, 1, 1], [], []>} : vector<16x256xbf16>, vector<256x16xbf16>, vector<16x16xf32> -> vector<16x16xf32>
    %c0_3 = arith.constant 0 : index
    %c0_4 = arith.constant 0 : index
    %3 = vector.load %arg3[%c0_3, %c0_4] : memref<1x16xf32, #tpu.memory_space<vmem>>, vector<1x16xf32>
    %4 = vector.broadcast %3 : vector<1x16xf32> to vector<16x16xf32>
    %5 = arith.addf %2, %4 : vector<16x16xf32>
    %cst_5 = arith.constant 0.000000e+00 : f32
    %6 = vector.broadcast %cst_5 : f32 to vector<16x16xf32>
    %7 = arith.maximumf %5, %6 : vector<16x16xf32>
    %8 = arith.truncf %7 : vector<16x16xf32> to vector<16x16xbf16>
    %c0_6 = arith.constant 0 : index
    %c0_7 = arith.constant 0 : index
    %9 = vector.load %arg4[%c0_6, %c0_7] : memref<16x16xbf16, #tpu.memory_space<vmem>>, vector<16x16xbf16>
    tpu.vector_store %arg4[%c0_6, %c0_7], %8 {strides = array<i32>} : memref<16x16xbf16, #tpu.memory_space<vmem>>, vector<16x16xbf16>,
    return
  }
  func.func @transform_0(%arg0: i32) -> (i32, i32) {
    %c0_i32 = arith.constant 0 : i32
    %c0_i32_0 = arith.constant 0 : i32
    return %arg0, %c0_i32 : i32, i32
  }
  func.func @transform_1(%arg0: i32) -> (i32, i32) {
    %c0_i32 = arith.constant 0 : i32
    %c0_i32_0 = arith.constant 0 : i32
    %c0_i32_1 = arith.constant 0 : i32
    return %c0_i32, %c0_i32_0 : i32, i32
  }
  func.func @transform_2(%arg0: i32) -> (i32, i32) {
    %c0_i32 = arith.constant 0 : i32
    %c0_i32_0 = arith.constant 0 : i32
    %c0_i32_1 = arith.constant 0 : i32
    return %c0_i32, %c0_i32_0 : i32, i32
  }
  func.func @transform_3(%arg0: i32) -> (i32, i32) {
    %c0_i32 = arith.constant 0 : i32
    %c0_i32_0 = arith.constant 0 : i32
    return %arg0, %c0_i32 : i32, i32
  }
}

module attributes {stable_mosaic.version = 11 : i64} {
  func.func @_conv_entropy_kernel(%arg0: i32, %arg1: memref<16x512xbf16, #tpu.memory_space<vmem>>, %arg2: memref<512x16xbf16, #tpu.memory_space<vmem>>, %arg3: memref<1x16xf32, #tpu.memory_space<vmem>>, %arg4: memref<16x16xf32, #tpu.memory_space<vmem>>, %arg5: memref<1x16xf32, #tpu.memory_space<vmem>>, %arg6: memref<16x16xf32, #tpu.memory_space<vmem>>, %arg7: memref<16x16xf32, #tpu.memory_space<vmem>>) attributes {dimension_semantics = [#tpu.dimension_semantics<parallel>], iteration_bounds = array<i64: 2>, scalar_prefetch = 0 : i64, scratch_operands = 0 : i64, tpu.core_type = #tpu.core_type<tc>, window_params = [{transform_indices = @transform_0, window_bounds = array<i64: 16, 512>}, {pipeline_mode = #tpu.pipeline_mode<synchronous>, transform_indices = @transform_1, window_bounds = array<i64: 512, 16>}, {pipeline_mode = #tpu.pipeline_mode<synchronous>, transform_indices = @transform_2, window_bounds = array<i64: 1, 16>}, {transform_indices = @transform_3, window_bounds = array<i64: 16, 16>}, {pipeline_mode = #tpu.pipeline_mode<synchronous>, transform_indices = @transform_4, window_bounds = array<i64: 1, 16>}, {transform_indices = @transform_5, window_bounds = array<i64: 16, 16>}, {transform_indices = @transform_6, window_bounds = array<i64: 16, 16>}]} {
    %c0 = arith.constant 0 : index
    %c0_0 = arith.constant 0 : index
    %0 = vector.load %arg1[%c0, %c0_0] : memref<16x512xbf16, #tpu.memory_space<vmem>>, vector<16x512xbf16>
    %c0_1 = arith.constant 0 : index
    %c0_2 = arith.constant 0 : index
    %1 = vector.load %arg2[%c0_1, %c0_2] : memref<512x16xbf16, #tpu.memory_space<vmem>>, vector<512x16xbf16>
    %cst = arith.constant dense<0.000000e+00> : vector<16x16xf32>
    %2 = tpu.matmul %0, %1, %cst {dimension_numbers = #tpu.dot_dimension_numbers<[1], [0], [0], [1], [0, 0, 1, 1], [], []>} : vector<16x512xbf16>, vector<512x16xbf16>, vector<16x16xf32> -> vector<16x16xf32>
    %c0_3 = arith.constant 0 : index
    %c0_4 = arith.constant 0 : index
    %3 = vector.load %arg3[%c0_3, %c0_4] : memref<1x16xf32, #tpu.memory_space<vmem>>, vector<1x16xf32>
    %4 = vector.broadcast %3 : vector<1x16xf32> to vector<16x16xf32>
    %5 = arith.addf %2, %4 : vector<16x16xf32>
    %6 = math.exp %5 : vector<16x16xf32>
    %c0_5 = arith.constant 0 : index
    %c0_6 = arith.constant 0 : index
    %7 = vector.load %arg5[%c0_5, %c0_6] : memref<1x16xf32, #tpu.memory_space<vmem>>, vector<1x16xf32>
    %8 = vector.broadcast %7 : vector<1x16xf32> to vector<16x16xf32>
    %9 = arith.addf %6, %8 : vector<16x16xf32>
    %cst_7 = arith.constant 1.100000e-01 : f32
    %10 = vector.broadcast %cst_7 : f32 to vector<16x16xf32>
    %11 = arith.maximumf %9, %10 : vector<16x16xf32>
    %12 = tpu.reciprocal %11 {approx = true} : vector<16x16xf32> -> vector<16x16xf32>
    %c0_8 = arith.constant 0 : index
    %c0_9 = arith.constant 0 : index
    %13 = vector.load %arg4[%c0_8, %c0_9] : memref<16x16xf32, #tpu.memory_space<vmem>>, vector<16x16xf32>
    %14 = math.roundeven %13 : vector<16x16xf32>
    %15 = math.absf %14 : vector<16x16xf32>
    %cst_10 = arith.constant 5.000000e-01 : f32
    %16 = vector.broadcast %cst_10 : f32 to vector<16x16xf32>
    %17 = arith.subf %16, %15 : vector<16x16xf32>
    %18 = arith.mulf %17, %12 : vector<16x16xf32>
    %cst_11 = arith.constant 0.000000e+00 : f32
    %19 = vector.broadcast %cst_11 : f32 to vector<16x16xf32>
    %20 = arith.subf %19, %18 : vector<16x16xf32>
    %cst_12 = arith.constant 0.707106769 : f32
    %21 = vector.broadcast %cst_12 : f32 to vector<16x16xf32>
    %22 = arith.mulf %20, %21 : vector<16x16xf32>
    %23 = math.absf %22 : vector<16x16xf32>
    %cst_13 = arith.constant 0.327591091 : f32
    %24 = vector.broadcast %cst_13 : f32 to vector<16x16xf32>
    %25 = arith.mulf %24, %23 : vector<16x16xf32>
    %cst_14 = arith.constant 1.000000e+00 : f32
    %26 = vector.broadcast %cst_14 : f32 to vector<16x16xf32>
    %27 = arith.addf %26, %25 : vector<16x16xf32>
    %28 = tpu.reciprocal %27 {approx = true} : vector<16x16xf32> -> vector<16x16xf32>
    %cst_15 = arith.constant 1.06140542 : f32
    %29 = vector.broadcast %cst_15 : f32 to vector<16x16xf32>
    %30 = arith.mulf %28, %29 : vector<16x16xf32>
    %cst_16 = arith.constant -1.45315206 : f32
    %31 = vector.broadcast %cst_16 : f32 to vector<16x16xf32>
    %32 = arith.addf %31, %30 : vector<16x16xf32>
    %33 = arith.mulf %28, %32 : vector<16x16xf32>
    %cst_17 = arith.constant 1.42141378 : f32
    %34 = vector.broadcast %cst_17 : f32 to vector<16x16xf32>
    %35 = arith.addf %34, %33 : vector<16x16xf32>
    %36 = arith.mulf %28, %35 : vector<16x16xf32>
    %cst_18 = arith.constant -0.284496725 : f32
    %37 = vector.broadcast %cst_18 : f32 to vector<16x16xf32>
    %38 = arith.addf %37, %36 : vector<16x16xf32>
    %39 = arith.mulf %28, %38 : vector<16x16xf32>
    %cst_19 = arith.constant 0.254829586 : f32
    %40 = vector.broadcast %cst_19 : f32 to vector<16x16xf32>
    %41 = arith.addf %40, %39 : vector<16x16xf32>
    %42 = arith.mulf %28, %41 : vector<16x16xf32>
    %cst_20 = arith.constant 0.000000e+00 : f32
    %43 = vector.broadcast %cst_20 : f32 to vector<16x16xf32>
    %44 = arith.subf %43, %23 : vector<16x16xf32>
    %45 = arith.mulf %44, %23 : vector<16x16xf32>
    %46 = math.exp %45 : vector<16x16xf32>
    %47 = arith.mulf %42, %46 : vector<16x16xf32>
    %cst_21 = arith.constant 0.000000e+00 : f32
    %48 = vector.broadcast %cst_21 : f32 to vector<16x16xf32>
    %49 = arith.cmpf oge, %22, %48 : vector<16x16xf32>
    %cst_22 = arith.constant 2.000000e+00 : f32
    %50 = vector.broadcast %cst_22 : f32 to vector<16x16xf32>
    %51 = arith.subf %50, %47 : vector<16x16xf32>
    %52 = arith.select %49, %47, %51 : vector<16x16xi1>, vector<16x16xf32>
    %cst_23 = arith.constant 5.000000e-01 : f32
    %53 = vector.broadcast %cst_23 : f32 to vector<16x16xf32>
    %54 = arith.mulf %53, %52 : vector<16x16xf32>
    %cst_24 = arith.constant -5.000000e-01 : f32
    %55 = vector.broadcast %cst_24 : f32 to vector<16x16xf32>
    %56 = arith.subf %55, %15 : vector<16x16xf32>
    %57 = arith.mulf %56, %12 : vector<16x16xf32>
    %cst_25 = arith.constant 0.000000e+00 : f32
    %58 = vector.broadcast %cst_25 : f32 to vector<16x16xf32>
    %59 = arith.subf %58, %57 : vector<16x16xf32>
    %cst_26 = arith.constant 0.707106769 : f32
    %60 = vector.broadcast %cst_26 : f32 to vector<16x16xf32>
    %61 = arith.mulf %59, %60 : vector<16x16xf32>
    %cst_27 = arith.constant 0.327591091 : f32
    %62 = vector.broadcast %cst_27 : f32 to vector<16x16xf32>
    %63 = arith.mulf %62, %61 : vector<16x16xf32>
    %cst_28 = arith.constant 1.000000e+00 : f32
    %64 = vector.broadcast %cst_28 : f32 to vector<16x16xf32>
    %65 = arith.addf %64, %63 : vector<16x16xf32>
    %66 = tpu.reciprocal %65 {approx = true} : vector<16x16xf32> -> vector<16x16xf32>
    %cst_29 = arith.constant 1.06140542 : f32
    %67 = vector.broadcast %cst_29 : f32 to vector<16x16xf32>
    %68 = arith.mulf %66, %67 : vector<16x16xf32>
    %cst_30 = arith.constant -1.45315206 : f32
    %69 = vector.broadcast %cst_30 : f32 to vector<16x16xf32>
    %70 = arith.addf %69, %68 : vector<16x16xf32>
    %71 = arith.mulf %66, %70 : vector<16x16xf32>
    %cst_31 = arith.constant 1.42141378 : f32
    %72 = vector.broadcast %cst_31 : f32 to vector<16x16xf32>
    %73 = arith.addf %72, %71 : vector<16x16xf32>
    %74 = arith.mulf %66, %73 : vector<16x16xf32>
    %cst_32 = arith.constant -0.284496725 : f32
    %75 = vector.broadcast %cst_32 : f32 to vector<16x16xf32>
    %76 = arith.addf %75, %74 : vector<16x16xf32>
    %77 = arith.mulf %66, %76 : vector<16x16xf32>
    %cst_33 = arith.constant 0.254829586 : f32
    %78 = vector.broadcast %cst_33 : f32 to vector<16x16xf32>
    %79 = arith.addf %78, %77 : vector<16x16xf32>
    %80 = arith.mulf %66, %79 : vector<16x16xf32>
    %cst_34 = arith.constant 0.000000e+00 : f32
    %81 = vector.broadcast %cst_34 : f32 to vector<16x16xf32>
    %82 = arith.subf %81, %61 : vector<16x16xf32>
    %83 = arith.mulf %82, %61 : vector<16x16xf32>
    %84 = math.exp %83 : vector<16x16xf32>
    %85 = arith.mulf %80, %84 : vector<16x16xf32>
    %cst_35 = arith.constant 5.000000e-01 : f32
    %86 = vector.broadcast %cst_35 : f32 to vector<16x16xf32>
    %87 = arith.mulf %86, %85 : vector<16x16xf32>
    %88 = arith.subf %54, %87 : vector<16x16xf32>
    %cst_36 = arith.constant 9.99999971E-10 : f32
    %cst_37 = arith.constant 1.000000e+00 : f32
    %89 = vector.broadcast %cst_36 : f32 to vector<16x16xf32>
    %90 = arith.maximumf %89, %88 : vector<16x16xf32>
    %91 = vector.broadcast %cst_37 : f32 to vector<16x16xf32>
    %92 = arith.minimumf %91, %90 : vector<16x16xf32>
    %c0_38 = arith.constant 0 : index
    %c0_39 = arith.constant 0 : index
    %93 = vector.load %arg6[%c0_38, %c0_39] : memref<16x16xf32, #tpu.memory_space<vmem>>, vector<16x16xf32>
    tpu.vector_store %arg6[%c0_38, %c0_39], %14 {strides = array<i32>} : memref<16x16xf32, #tpu.memory_space<vmem>>, vector<16x16xf32>,
    %c0_40 = arith.constant 0 : index
    %c0_41 = arith.constant 0 : index
    %94 = vector.load %arg7[%c0_40, %c0_41] : memref<16x16xf32, #tpu.memory_space<vmem>>, vector<16x16xf32>
    tpu.vector_store %arg7[%c0_40, %c0_41], %92 {strides = array<i32>} : memref<16x16xf32, #tpu.memory_space<vmem>>, vector<16x16xf32>,
    return
  }
  func.func @transform_0(%arg0: i32) -> (i32, i32) {
    %c0_i32 = arith.constant 0 : i32
    %c0_i32_0 = arith.constant 0 : i32
    return %arg0, %c0_i32 : i32, i32
  }
  func.func @transform_1(%arg0: i32) -> (i32, i32) {
    %c0_i32 = arith.constant 0 : i32
    %c0_i32_0 = arith.constant 0 : i32
    %c0_i32_1 = arith.constant 0 : i32
    return %c0_i32, %c0_i32_0 : i32, i32
  }
  func.func @transform_2(%arg0: i32) -> (i32, i32) {
    %c0_i32 = arith.constant 0 : i32
    %c0_i32_0 = arith.constant 0 : i32
    %c0_i32_1 = arith.constant 0 : i32
    return %c0_i32, %c0_i32_0 : i32, i32
  }
  func.func @transform_3(%arg0: i32) -> (i32, i32) {
    %c0_i32 = arith.constant 0 : i32
    %c0_i32_0 = arith.constant 0 : i32
    return %arg0, %c0_i32 : i32, i32
  }
  func.func @transform_4(%arg0: i32) -> (i32, i32) {
    %c0_i32 = arith.constant 0 : i32
    %c0_i32_0 = arith.constant 0 : i32
    %c0_i32_1 = arith.constant 0 : i32
    return %c0_i32, %c0_i32_0 : i32, i32
  }
  func.func @transform_5(%arg0: i32) -> (i32, i32) {
    %c0_i32 = arith.constant 0 : i32
    %c0_i32_0 = arith.constant 0 : i32
    return %arg0, %c0_i32 : i32, i32
  }
  func.func @transform_6(%arg0: i32) -> (i32, i32) {
    %c0_i32 = arith.constant 0 : i32
    %c0_i32_0 = arith.constant 0 : i32
    return %arg0, %c0_i32 : i32, i32
  }
}

module attributes {stable_mosaic.version = 11 : i64} {
  func.func @_conv_kernel(%arg0: i32, %arg1: memref<16x128xbf16, #tpu.memory_space<vmem>>, %arg2: memref<128x16xbf16, #tpu.memory_space<vmem>>, %arg3: memref<1x16xf32, #tpu.memory_space<vmem>>, %arg4: memref<16x16xbf16, #tpu.memory_space<vmem>>) attributes {dimension_semantics = [#tpu.dimension_semantics<parallel>], iteration_bounds = array<i64: 2>, scalar_prefetch = 0 : i64, scratch_operands = 0 : i64, tpu.core_type = #tpu.core_type<tc>, window_params = [{transform_indices = @transform_0, window_bounds = array<i64: 16, 128>}, {pipeline_mode = #tpu.pipeline_mode<synchronous>, transform_indices = @transform_1, window_bounds = array<i64: 128, 16>}, {pipeline_mode = #tpu.pipeline_mode<synchronous>, transform_indices = @transform_2, window_bounds = array<i64: 1, 16>}, {transform_indices = @transform_3, window_bounds = array<i64: 16, 16>}]} {
    %c0 = arith.constant 0 : index
    %c0_0 = arith.constant 0 : index
    %0 = vector.load %arg1[%c0, %c0_0] : memref<16x128xbf16, #tpu.memory_space<vmem>>, vector<16x128xbf16>
    %c0_1 = arith.constant 0 : index
    %c0_2 = arith.constant 0 : index
    %1 = vector.load %arg2[%c0_1, %c0_2] : memref<128x16xbf16, #tpu.memory_space<vmem>>, vector<128x16xbf16>
    %cst = arith.constant dense<0.000000e+00> : vector<16x16xf32>
    %2 = tpu.matmul %0, %1, %cst {dimension_numbers = #tpu.dot_dimension_numbers<[1], [0], [0], [1], [0, 0, 1, 1], [], []>} : vector<16x128xbf16>, vector<128x16xbf16>, vector<16x16xf32> -> vector<16x16xf32>
    %c0_3 = arith.constant 0 : index
    %c0_4 = arith.constant 0 : index
    %3 = vector.load %arg3[%c0_3, %c0_4] : memref<1x16xf32, #tpu.memory_space<vmem>>, vector<1x16xf32>
    %4 = vector.broadcast %3 : vector<1x16xf32> to vector<16x16xf32>
    %5 = arith.addf %2, %4 : vector<16x16xf32>
    %cst_5 = arith.constant 0.000000e+00 : f32
    %6 = vector.broadcast %cst_5 : f32 to vector<16x16xf32>
    %7 = arith.maximumf %5, %6 : vector<16x16xf32>
    %8 = arith.truncf %7 : vector<16x16xf32> to vector<16x16xbf16>
    %c0_6 = arith.constant 0 : index
    %c0_7 = arith.constant 0 : index
    %9 = vector.load %arg4[%c0_6, %c0_7] : memref<16x16xbf16, #tpu.memory_space<vmem>>, vector<16x16xbf16>
    tpu.vector_store %arg4[%c0_6, %c0_7], %8 {strides = array<i32>} : memref<16x16xbf16, #tpu.memory_space<vmem>>, vector<16x16xbf16>,
    return
  }
  func.func @transform_0(%arg0: i32) -> (i32, i32) {
    %c0_i32 = arith.constant 0 : i32
    %c0_i32_0 = arith.constant 0 : i32
    return %arg0, %c0_i32 : i32, i32
  }
  func.func @transform_1(%arg0: i32) -> (i32, i32) {
    %c0_i32 = arith.constant 0 : i32
    %c0_i32_0 = arith.constant 0 : i32
    %c0_i32_1 = arith.constant 0 : i32
    return %c0_i32, %c0_i32_0 : i32, i32
  }
  func.func @transform_2(%arg0: i32) -> (i32, i32) {
    %c0_i32 = arith.constant 0 : i32
    %c0_i32_0 = arith.constant 0 : i32
    %c0_i32_1 = arith.constant 0 : i32
    return %c0_i32, %c0_i32_0 : i32, i32
  }
  func.func @transform_3(%arg0: i32) -> (i32, i32) {
    %c0_i32 = arith.constant 0 : i32
    %c0_i32_0 = arith.constant 0 : i32
    return %arg0, %c0_i32 : i32, i32
  }
}

module attributes {stable_mosaic.version = 11 : i64} {
  func.func @_conv_kernel(%arg0: i32, %arg1: memref<64x256xbf16, #tpu.memory_space<vmem>>, %arg2: memref<256x8xbf16, #tpu.memory_space<vmem>>, %arg3: memref<1x8xf32, #tpu.memory_space<vmem>>, %arg4: memref<64x8xf32, #tpu.memory_space<vmem>>) attributes {dimension_semantics = [#tpu.dimension_semantics<parallel>], iteration_bounds = array<i64: 2>, scalar_prefetch = 0 : i64, scratch_operands = 0 : i64, tpu.core_type = #tpu.core_type<tc>, window_params = [{transform_indices = @transform_0, window_bounds = array<i64: 64, 256>}, {pipeline_mode = #tpu.pipeline_mode<synchronous>, transform_indices = @transform_1, window_bounds = array<i64: 256, 8>}, {pipeline_mode = #tpu.pipeline_mode<synchronous>, transform_indices = @transform_2, window_bounds = array<i64: 1, 8>}, {transform_indices = @transform_3, window_bounds = array<i64: 64, 8>}]} {
    %c0 = arith.constant 0 : index
    %c0_0 = arith.constant 0 : index
    %0 = vector.load %arg1[%c0, %c0_0] : memref<64x256xbf16, #tpu.memory_space<vmem>>, vector<64x256xbf16>
    %c0_1 = arith.constant 0 : index
    %c0_2 = arith.constant 0 : index
    %1 = vector.load %arg2[%c0_1, %c0_2] : memref<256x8xbf16, #tpu.memory_space<vmem>>, vector<256x8xbf16>
    %cst = arith.constant dense<0.000000e+00> : vector<64x8xf32>
    %2 = tpu.matmul %0, %1, %cst {dimension_numbers = #tpu.dot_dimension_numbers<[1], [0], [0], [1], [0, 0, 1, 1], [], []>} : vector<64x256xbf16>, vector<256x8xbf16>, vector<64x8xf32> -> vector<64x8xf32>
    %c0_3 = arith.constant 0 : index
    %c0_4 = arith.constant 0 : index
    %3 = vector.load %arg3[%c0_3, %c0_4] : memref<1x8xf32, #tpu.memory_space<vmem>>, vector<1x8xf32>
    %4 = vector.broadcast %3 : vector<1x8xf32> to vector<64x8xf32>
    %5 = arith.addf %2, %4 : vector<64x8xf32>
    %c0_5 = arith.constant 0 : index
    %c0_6 = arith.constant 0 : index
    %6 = vector.load %arg4[%c0_5, %c0_6] : memref<64x8xf32, #tpu.memory_space<vmem>>, vector<64x8xf32>
    tpu.vector_store %arg4[%c0_5, %c0_6], %5 {strides = array<i32>} : memref<64x8xf32, #tpu.memory_space<vmem>>, vector<64x8xf32>,
    return
  }
  func.func @transform_0(%arg0: i32) -> (i32, i32) {
    %c0_i32 = arith.constant 0 : i32
    %c0_i32_0 = arith.constant 0 : i32
    return %arg0, %c0_i32 : i32, i32
  }
  func.func @transform_1(%arg0: i32) -> (i32, i32) {
    %c0_i32 = arith.constant 0 : i32
    %c0_i32_0 = arith.constant 0 : i32
    %c0_i32_1 = arith.constant 0 : i32
    return %c0_i32, %c0_i32_0 : i32, i32
  }
  func.func @transform_2(%arg0: i32) -> (i32, i32) {
    %c0_i32 = arith.constant 0 : i32
    %c0_i32_0 = arith.constant 0 : i32
    %c0_i32_1 = arith.constant 0 : i32
    return %c0_i32, %c0_i32_0 : i32, i32
  }
  func.func @transform_3(%arg0: i32) -> (i32, i32) {
    %c0_i32 = arith.constant 0 : i32
    %c0_i32_0 = arith.constant 0 : i32
    return %arg0, %c0_i32 : i32, i32
  }
}

module attributes {stable_mosaic.version = 11 : i64} {
  func.func @_conv_kernel(%arg0: i32, %arg1: memref<64x128xbf16, #tpu.memory_space<vmem>>, %arg2: memref<128x8xbf16, #tpu.memory_space<vmem>>, %arg3: memref<1x8xf32, #tpu.memory_space<vmem>>, %arg4: memref<64x8xf32, #tpu.memory_space<vmem>>) attributes {dimension_semantics = [#tpu.dimension_semantics<parallel>], iteration_bounds = array<i64: 2>, scalar_prefetch = 0 : i64, scratch_operands = 0 : i64, tpu.core_type = #tpu.core_type<tc>, window_params = [{transform_indices = @transform_0, window_bounds = array<i64: 64, 128>}, {pipeline_mode = #tpu.pipeline_mode<synchronous>, transform_indices = @transform_1, window_bounds = array<i64: 128, 8>}, {pipeline_mode = #tpu.pipeline_mode<synchronous>, transform_indices = @transform_2, window_bounds = array<i64: 1, 8>}, {transform_indices = @transform_3, window_bounds = array<i64: 64, 8>}]} {
    %c0 = arith.constant 0 : index
    %c0_0 = arith.constant 0 : index
    %0 = vector.load %arg1[%c0, %c0_0] : memref<64x128xbf16, #tpu.memory_space<vmem>>, vector<64x128xbf16>
    %c0_1 = arith.constant 0 : index
    %c0_2 = arith.constant 0 : index
    %1 = vector.load %arg2[%c0_1, %c0_2] : memref<128x8xbf16, #tpu.memory_space<vmem>>, vector<128x8xbf16>
    %cst = arith.constant dense<0.000000e+00> : vector<64x8xf32>
    %2 = tpu.matmul %0, %1, %cst {dimension_numbers = #tpu.dot_dimension_numbers<[1], [0], [0], [1], [0, 0, 1, 1], [], []>} : vector<64x128xbf16>, vector<128x8xbf16>, vector<64x8xf32> -> vector<64x8xf32>
    %c0_3 = arith.constant 0 : index
    %c0_4 = arith.constant 0 : index
    %3 = vector.load %arg3[%c0_3, %c0_4] : memref<1x8xf32, #tpu.memory_space<vmem>>, vector<1x8xf32>
    %4 = vector.broadcast %3 : vector<1x8xf32> to vector<64x8xf32>
    %5 = arith.addf %2, %4 : vector<64x8xf32>
    %c0_5 = arith.constant 0 : index
    %c0_6 = arith.constant 0 : index
    %6 = vector.load %arg4[%c0_5, %c0_6] : memref<64x8xf32, #tpu.memory_space<vmem>>, vector<64x8xf32>
    tpu.vector_store %arg4[%c0_5, %c0_6], %5 {strides = array<i32>} : memref<64x8xf32, #tpu.memory_space<vmem>>, vector<64x8xf32>,
    return
  }
  func.func @transform_0(%arg0: i32) -> (i32, i32) {
    %c0_i32 = arith.constant 0 : i32
    %c0_i32_0 = arith.constant 0 : i32
    return %arg0, %c0_i32 : i32, i32
  }
  func.func @transform_1(%arg0: i32) -> (i32, i32) {
    %c0_i32 = arith.constant 0 : i32
    %c0_i32_0 = arith.constant 0 : i32
    %c0_i32_1 = arith.constant 0 : i32
    return %c0_i32, %c0_i32_0 : i32, i32
  }
  func.func @transform_2(%arg0: i32) -> (i32, i32) {
    %c0_i32 = arith.constant 0 : i32
    %c0_i32_0 = arith.constant 0 : i32
    %c0_i32_1 = arith.constant 0 : i32
    return %c0_i32, %c0_i32_0 : i32, i32
  }
  func.func @transform_3(%arg0: i32) -> (i32, i32) {
    %c0_i32 = arith.constant 0 : i32
    %c0_i32_0 = arith.constant 0 : i32
    return %arg0, %c0_i32 : i32, i32
  }
}

</mosaic_0001>

<llo_original>
// kernel: forward.17
$region0: #{forward.17}
  #allocation0 [shape = 'u32[]', space=smem, size = 0x4, offset = 0x4, fixed_abs, tag = 'smem constant byte address 0x4 - core index']
  #allocation1 [shape = 'u32[72,128]{1,0:T(1,128)}', space=vmem, size = 0x9000, scoped, tag = 'internal scratch']
  %s0 = inlined_call_operand.vmem [shape: bf16[128,256], index: 0, kind: input, shape index: {}]
  %s1 = inlined_call_operand.vmem [shape: bf16[256,16], index: 1, kind: input, shape index: {}]
  %s2 = inlined_call_operand.vmem [shape: f32[1,16], index: 2, kind: input, shape index: {}]
  %s3 = inlined_call_operand.vmem [shape: bf16[128,16], index: 3, kind: output, shape index: {}]
  %s4 = sld [smem:[#allocation0]]
  $region45: #{forward.17} parent=0
    _
  %s6 = ssub.s32 1, %s4
  %s7 = scalar_select 0, %s6, %s4
  loop: start=0, step=1, limit=4
  $region2: #{forward.17} parent=0 // loop_pre_header
    _
  $region3: #{forward.17} parent=0 // loop_header
    %s9 = sphi 0, %s13
    %p10 = scmp.ge.s32.totalorder %s9, 4
    %s19 = sphi 0, %s21
    %s22 = sphi 0, %s19
    %s23 = sphi 0, %s22
    %s39 = sphi 0, %s23
    %s43 = sphi 0, %s43
    %s45 = sphi 0, %s43
    %s46 = sphi 0, %s45
    %s60 = sphi 0, %s46
    %s64 = sphi 0, %s64
    %s66 = sphi 0, %s64
    %s67 = sphi 0, %s66
    %s81 = sphi 0, %s67
    %s87 = sphi 0, %s89
    %s90 = sphi 0, %s87
    %s91 = sphi 0, %s90
    %s107 = sphi 0, %s91
  $region4: #{forward.17} parent=0 // loop_header_branch
    %12 = sbr.rel (%p10) target = $region8
  $region5: #{forward.17} parent=0 // loop_body
    %s14 = ssub.s32 %s9, 1
    %s15 = ssub.s32 %s9, 2
    %s16 = sadd.s32 %s9, 1
    %s17 = ssub.s32 %s9, %s16
    %p18 = scmp.eq.s32.totalorder %s17, 0
    %s20 = sadd.s32 %s19, 1
    %s21 = scalar_select %p18, %s19, %s20
    %p24 = pneg %p18
    %p25 = scmp.eq.s32.totalorder %s9, 1
    %p26 = por %p24, %p25
    %p27 = scmp.ne.s32.totalorder %s19, %s22
    %p28 = scmp.eq.s32.totalorder %s9, 0
    %p29 = por %p27, %p28
    %p30 = scmp.ne.s32.totalorder %s19, %s22
    %p31 = scmp.eq.s32.totalorder %s14, 1
    %p32 = por %p30, %p31
    %p33 = scmp.ne.s32.totalorder %s22, %s23
    %p34 = scmp.eq.s32.totalorder %s14, 0
    %p35 = por %p33, %p34
    %p36 = scmp.ne.s32.totalorder %s22, %s23
    %p37 = scmp.eq.s32.totalorder %s15, 1
    %p38 = por %p36, %p37
    %p40 = scmp.ne.s32.totalorder %s23, %s39
    %p41 = scmp.eq.s32.totalorder %s15, 0
    %p42 = por %p40, %p41
    %s44 = sadd.s32 %s43, 1
    %p47 = scmp.eq.s32.totalorder %s9, 1
    %p48 = scmp.ne.s32.totalorder %s43, %s45
    %p49 = scmp.eq.s32.totalorder %s9, 0
    %p50 = por %p48, %p49
    %p51 = scmp.ne.s32.totalorder %s43, %s45
    %p52 = scmp.eq.s32.totalorder %s14, 1
    %p53 = por %p51, %p52
    %p54 = scmp.ne.s32.totalorder %s45, %s46
    %p55 = scmp.eq.s32.totalorder %s14, 0
    %p56 = por %p54, %p55
    %p57 = scmp.ne.s32.totalorder %s45, %s46
    %p58 = scmp.eq.s32.totalorder %s15, 1
    %p59 = por %p57, %p58
    %p61 = scmp.ne.s32.totalorder %s46, %s60
    %p62 = scmp.eq.s32.totalorder %s15, 0
    %p63 = por %p61, %p62
    %s65 = sadd.s32 %s64, 1
    %p68 = scmp.eq.s32.totalorder %s9, 1
    %p69 = scmp.ne.s32.totalorder %s64, %s66
    %p70 = scmp.eq.s32.totalorder %s9, 0
    %p71 = por %p69, %p70
    %p72 = scmp.ne.s32.totalorder %s64, %s66
    %p73 = scmp.eq.s32.totalorder %s14, 1
    %p74 = por %p72, %p73
    %p75 = scmp.ne.s32.totalorder %s66, %s67
    %p76 = scmp.eq.s32.totalorder %s14, 0
    %p77 = por %p75, %p76
    %p78 = scmp.ne.s32.totalorder %s66, %s67
    %p79 = scmp.eq.s32.totalorder %s15, 1
    %p80 = por %p78, %p79
    %p82 = scmp.ne.s32.totalorder %s67, %s81
    %p83 = scmp.eq.s32.totalorder %s15, 0
    %p84 = por %p82, %p83
    %s85 = ssub.s32 %s9, %s16
    %p86 = scmp.eq.s32.totalorder %s85, 0
    %s88 = sadd.s32 %s87, 1
    %s89 = scalar_select %p86, %s87, %s88
    %p92 = pneg %p86
    %p93 = scmp.eq.s32.totalorder %s9, 1
    %p94 = por %p92, %p93
    %p95 = scmp.ne.s32.totalorder %s87, %s90
    %p96 = scmp.eq.s32.totalorder %s9, 0
    %p97 = por %p95, %p96
    %p98 = scmp.ne.s32.totalorder %s87, %s90
    %p99 = scmp.eq.s32.totalorder %s14, 1
    %p100 = por %p98, %p99
    %p101 = scmp.ne.s32.totalorder %s90, %s91
    %p102 = scmp.eq.s32.totalorder %s14, 0
    %p103 = por %p101, %p102
    %p104 = scmp.ne.s32.totalorder %s90, %s91
    %p105 = scmp.eq.s32.totalorder %s15, 1
    %p106 = por %p104, %p105
    %p108 = scmp.ne.s32.totalorder %s91, %s107
    %p109 = scmp.eq.s32.totalorder %s15, 0
    %p110 = por %p108, %p109
    %p111 = scmp.le.s32.totalorder 1, %s9
    %p112 = scmp.lt.s32.totalorder %s9, 3
    %p113 = pnand %p111, %p112
    %p114 = pneg %p113
    // Predicated region
    $region9: #{forward.17} parent=5 // pred_check
      _
    $region10: #{forward.17} parent=5 // pred_check_branch
      %116 = sbr.rel (%p113) target = $region12
    $region11: #{forward.17} parent=5 // pred_region
      %s117 = ssub.s32 %s9, 1
      // Predicated region
      $region13: #{forward.17} parent=11 // pred_check
        %p118 = pneg %p56
      $region14: #{forward.17} parent=11 // pred_check_branch
        %120 = sbr.rel (%p118) target = $region16
      $region15: #{forward.17} parent=11 // pred_region
        _
      $region16: #{forward.17} parent=11 // pred_fallthru
        _
      // Predicated region
      $region17: #{forward.17} parent=11 // pred_check
        %p121 = pneg %p77
      $region18: #{forward.17} parent=11 // pred_check_branch
        %123 = sbr.rel (%p121) target = $region20
      $region19: #{forward.17} parent=11 // pred_region
        _
      $region20: #{forward.17} parent=11 // pred_fallthru
        _
    $region12: #{forward.17} parent=5 // pred_fallthru
      _
    %p124 = scmp.lt.s32.totalorder %s9, 2
    // Predicated region
    $region21: #{forward.17} parent=5 // pred_check
      %p125 = pneg %p124
    $region22: #{forward.17} parent=5 // pred_check_branch
      %127 = sbr.rel (%p125) target = $region24
    $region23: #{forward.17} parent=5 // pred_region
      // Predicated region
      $region25: #{forward.17} parent=23 // pred_check
        %p128 = pneg %p29
      $region26: #{forward.17} parent=23 // pred_check_branch
        %130 = sbr.rel (%p128) target = $region28
      $region27: #{forward.17} parent=23 // pred_region
        %s131 = smul.u32 8, %s9
        %p132 = scmp.lt.s32.totalorder %s131, 15
        %s133 = scalar_select %p132, %s131, 15
        %s134 = smul.addr %s133, 2
        %s135 = smul.addr %s134, 4
        %s136 = scalar_lea.vmem %s0, %s135
        %s137 = smul.u32 8, %s9
      $region28: #{forward.17} parent=23 // pred_fallthru
        _
    $region24: #{forward.17} parent=5 // pred_fallthru
      _
    %p138 = scmp.le.s32.totalorder 1, %s9
    %p139 = scmp.lt.s32.totalorder %s9, 3
    %p140 = pnand %p138, %p139
    %p141 = pneg %p140
    // Predicated region
    $region29: #{forward.17} parent=5 // pred_check
      _
    $region30: #{forward.17} parent=5 // pred_check_branch
      %143 = sbr.rel (%p140) target = $region32
    $region31: #{forward.17} parent=5 // pred_region
      %s144 = ssub.s32 %s9, 1
      %s145 = smul.u32 8, %s14
      %p146 = scmp.lt.s32.totalorder %s145, 15
      %s147 = scalar_select %p146, %s145, 15
      %s148 = smul.addr %s147, 2
      %s149 = smul.addr %s148, 4
      %s150 = scalar_lea.vmem %s0, %s149
      %p151 = pneg %p35
      %p152 = pneg %p32
      %p153 = pneg %p56
      %p154 = pneg %p53
      %p155 = pneg %p77
      %p156 = pneg %p74
      %p157 = pneg %p103
      %p158 = pneg %p100
      %s159 = smul.u32 8, %s14
      %p160 = scmp.lt.s32.totalorder %s159, 15
      %s161 = scalar_select %p160, %s159, 15
      %s162 = smul.addr %s161, 4
      %s163 = scalar_lea.vmem %s3, %s162
      %s164 = smul.u32 8, %s14
      %p165 = scmp.lt.s32.totalorder %s164, 15
      %s166 = scalar_select %p165, %s164, 15
      %s167 = smul.addr %s166, 2
      %s168 = smul.addr %s167, 4
      %s169 = scalar_lea.vmem %s0, %s168
      %s170 = smul.u32 8, %s14
      %s171 = smul.u32 8, %s14
      %p172 = scmp.lt.s32.totalorder %s171, 15
      %s173 = scalar_select %p172, %s171, 15
      %s174 = smul.addr %s173, 4
      %s175 = scalar_lea.vmem %s3, %s174
      %s176 = smul.u32 8, %s14
      %v177 = vld [vmem:[%s169] sm:$0xff]
      %v178 = vld [vmem:[%s169 + $0x8] sm:$0xff]
      %v179 = vld [vmem:[%s169 + $0x10] sm:$0xff]
      %v180 = vld [vmem:[%s169 + $0x18] sm:$0xff]
      %v181 = vld [vmem:[%s169 + $0x20] sm:$0xff]
      %v182 = vld [vmem:[%s169 + $0x28] sm:$0xff]
      %v183 = vld [vmem:[%s169 + $0x30] sm:$0xff]
      %v184 = vld [vmem:[%s169 + $0x38] sm:$0xff]
      %v185 = vld [vmem:[%s1] sm:$0xf]
      %v186 = vld [vmem:[%s1 + $0x4] sm:$0xf]
      %v187 = vld [vmem:[%s1 + $0x8] sm:$0xf]
      %v188 = vld [vmem:[%s1 + $0xc] sm:$0xf]
      %v189 = vld [vmem:[%s1 + $0x10] sm:$0xf]
      %v190 = vld [vmem:[%s1 + $0x14] sm:$0xf]
      %v191 = vld [vmem:[%s1 + $0x18] sm:$0xf]
      %v192 = vld [vmem:[%s1 + $0x1c] sm:$0xf]
      %v193 = vld [vmem:[%s1 + $0x20] sm:$0xf]
      %v194 = vld [vmem:[%s1 + $0x24] sm:$0xf]
      %v195 = vld [vmem:[%s1 + $0x28] sm:$0xf]
      %v196 = vld [vmem:[%s1 + $0x2c] sm:$0xf]
      %v197 = vld [vmem:[%s1 + $0x30] sm:$0xf]
      %v198 = vld [vmem:[%s1 + $0x34] sm:$0xf]
      %v199 = vld [vmem:[%s1 + $0x38] sm:$0xf]
      %v200 = vld [vmem:[%s1 + $0x3c] sm:$0xf]
      %v201 = vld [vmem:[%s1 + $0x40] sm:$0xf]
      %v202 = vld [vmem:[%s1 + $0x44] sm:$0xf]
      %v203 = vld [vmem:[%s1 + $0x48] sm:$0xf]
      %v204 = vld [vmem:[%s1 + $0x4c] sm:$0xf]
      %v205 = vld [vmem:[%s1 + $0x50] sm:$0xf]
      %v206 = vld [vmem:[%s1 + $0x54] sm:$0xf]
      %v207 = vld [vmem:[%s1 + $0x58] sm:$0xf]
      %v208 = vld [vmem:[%s1 + $0x5c] sm:$0xf]
      %v209 = vld [vmem:[%s1 + $0x60] sm:$0xf]
      %v210 = vld [vmem:[%s1 + $0x64] sm:$0xf]
      %v211 = vld [vmem:[%s1 + $0x68] sm:$0xf]
      %v212 = vld [vmem:[%s1 + $0x6c] sm:$0xf]
      %v213 = vld [vmem:[%s1 + $0x70] sm:$0xf]
      %v214 = vld [vmem:[%s1 + $0x74] sm:$0xf]
      %v215 = vld [vmem:[%s1 + $0x78] sm:$0xf]
      %v216 = vld [vmem:[%s1 + $0x7c] sm:$0xf]
      %v217 = vld [vmem:[%s2] sm:$0x1]
      %v219 = vperm.slane %v217, 0
      %v229 = vunpack.c.l.b16 %v177
      %v230 = vunpack.c.h.b16 %v177
      %v231 = vunpack.c.l.b16 %v178
      %v232 = vunpack.c.h.b16 %v178
      %v233 = vunpack.c.l.b16 %v179
      %v234 = vunpack.c.h.b16 %v179
      %v235 = vunpack.c.l.b16 %v180
      %v236 = vunpack.c.h.b16 %v180
      %v237 = vunpack.c.l.b16 %v181
      %v238 = vunpack.c.h.b16 %v181
      %v239 = vunpack.c.l.b16 %v182
      %v240 = vunpack.c.h.b16 %v182
      %v241 = vunpack.c.l.b16 %v183
      %v242 = vunpack.c.h.b16 %v183
      %v243 = vunpack.c.l.b16 %v184
      %v244 = vunpack.c.h.b16 %v184
      %v245 = vpack.c.b16 %v231, %v229
      %v246 = vpack.c.b16 %v232, %v230
      %v247 = vpack.c.b16 %v235, %v233
      %v248 = vpack.c.b16 %v236, %v234
      %v249 = vpack.c.b16 %v239, %v237
      %v250 = vpack.c.b16 %v240, %v238
      %v251 = vpack.c.b16 %v243, %v241
      %v252 = vpack.c.b16 %v244, %v242
      %v293 = vunpack.c.l.b16 %v185
      %v294 = vunpack.c.l.b16 %v186
      %v295 = vunpack.c.l.b16 %v187
      %v296 = vunpack.c.l.b16 %v188
      %v297 = vunpack.c.l.b16 %v189
      %v298 = vunpack.c.l.b16 %v190
      %v299 = vunpack.c.l.b16 %v191
      %v300 = vunpack.c.l.b16 %v192
      %v301 = vunpack.c.l.b16 %v193
      %v302 = vunpack.c.l.b16 %v194
      %v303 = vunpack.c.l.b16 %v195
      %v304 = vunpack.c.l.b16 %v196
      %v305 = vunpack.c.l.b16 %v197
      %v306 = vunpack.c.l.b16 %v198
      %v307 = vunpack.c.l.b16 %v199
      %v308 = vunpack.c.l.b16 %v200
      %v309 = vunpack.c.l.b16 %v201
      %v310 = vunpack.c.l.b16 %v202
      %v311 = vunpack.c.l.b16 %v203
      %v312 = vunpack.c.l.b16 %v204
      %v313 = vunpack.c.l.b16 %v205
      %v314 = vunpack.c.l.b16 %v206
      %v315 = vunpack.c.l.b16 %v207
      %v316 = vunpack.c.l.b16 %v208
      %v317 = vunpack.c.l.b16 %v209
      %v318 = vunpack.c.l.b16 %v210
      %v319 = vunpack.c.l.b16 %v211
      %v320 = vunpack.c.l.b16 %v212
      %v321 = vunpack.c.l.b16 %v213
      %v322 = vunpack.c.l.b16 %v214
      %v323 = vunpack.c.l.b16 %v215
      %v324 = vunpack.c.l.b16 %v216
      %v325 = vpack.c.b16 %v294, %v293
      %v326 = vpack.c.b16 %v296, %v295
      %v327 = vpack.c.b16 %v298, %v297
      %v328 = vpack.c.b16 %v300, %v299
      %v329 = vpack.c.b16 %v302, %v301
      %v330 = vpack.c.b16 %v304, %v303
      %v331 = vpack.c.b16 %v306, %v305
      %v332 = vpack.c.b16 %v308, %v307
      %v333 = vpack.c.b16 %v310, %v309
      %v334 = vpack.c.b16 %v312, %v311
      %v335 = vpack.c.b16 %v314, %v313
      %v336 = vpack.c.b16 %v316, %v315
      %v337 = vpack.c.b16 %v318, %v317
      %v338 = vpack.c.b16 %v320, %v319
      %v339 = vpack.c.b16 %v322, %v321
      %v340 = vpack.c.b16 %v324, %v323
      %357 = vmatpush.bf16.msra.mxu0 %v332
      %358 = vmatpush.bf16.msra.mxu0 %v331
      %359 = vmatpush.bf16.msra.mxu0 %v330
      %360 = vmatpush.bf16.msra.mxu0 %v329
      %361 = vmatpush.bf16.msra.mxu0 %v328
      %362 = vmatpush.bf16.msra.mxu0 %v327
      %363 = vmatpush.bf16.msra.mxu0 %v326
      %364 = vmatpush.bf16.msra.mxu0 %v325
      %365 = vmatmul.bf16.gmra.mxu0 %v245
      %v366 = vpop.f32.mrf.mxu0
      %v367 = vadd.f32 %v219, %v366
      %v368 = vpop.f32.mrf.mxu0
      %v369 = vadd.f32 %v219, %v368
      %370 = vmatmul.bf16.gmra.mxu0 %v247
      %v371 = vpop.f32.mrf.mxu0
      %v372 = vadd.f32 %v219, %v371
      %v373 = vpop.f32.mrf.mxu0
      %v374 = vadd.f32 %v219, %v373
      %375 = vmatmul.bf16.gmra.mxu0 %v249
      %v376 = vpop.f32.mrf.mxu0
      %v377 = vadd.f32 %v219, %v376
      %v378 = vpop.f32.mrf.mxu0
      %v379 = vadd.f32 %v219, %v378
      %380 = vmatmul.bf16.gmra.mxu0 %v251
      %v381 = vpop.f32.mrf.mxu0
      %v382 = vadd.f32 %v219, %v381
      %v383 = vpop.f32.mrf.mxu0
      %v384 = vadd.f32 %v219, %v383
      %385 = vdwg.mxu0
      %386 = vmatpush.bf16.msra.mxu0 %v340
      %387 = vmatpush.bf16.msra.mxu0 %v339
      %388 = vmatpush.bf16.msra.mxu0 %v338
      %389 = vmatpush.bf16.msra.mxu0 %v337
      %390 = vmatpush.bf16.msra.mxu0 %v336
      %391 = vmatpush.bf16.msra.mxu0 %v335
      %392 = vmatpush.bf16.msra.mxu0 %v334
      %393 = vmatpush.bf16.msra.mxu0 %v333
      %394 = vmatmul.bf16.gmra.mxu0 %v246
      %v395 = vpop.f32.mrf.mxu0
      %v396 = vadd.f32 %v367, %v395
      %v397 = vpop.f32.mrf.mxu0
      %v398 = vadd.f32 %v369, %v397
      %399 = vmatmul.bf16.gmra.mxu0 %v248
      %v400 = vpop.f32.mrf.mxu0
      %v401 = vadd.f32 %v372, %v400
      %v402 = vpop.f32.mrf.mxu0
      %v403 = vadd.f32 %v374, %v402
      %404 = vmatmul.bf16.gmra.mxu0 %v250
      %v405 = vpop.f32.mrf.mxu0
      %v406 = vadd.f32 %v377, %v405
      %v407 = vpop.f32.mrf.mxu0
      %v408 = vadd.f32 %v379, %v407
      %409 = vmatmul.bf16.gmra.mxu0 %v252
      %v410 = vpop.f32.mrf.mxu0
      %v411 = vadd.f32 %v382, %v410
      %v412 = vpop.f32.mrf.mxu0
      %v413 = vadd.f32 %v384, %v412
      %414 = vdwg.mxu0
      %v415 = vmax.f32 %v396, 0.0
      %v416 = vmax.f32 %v398, 0.0
      %v417 = vmax.f32 %v401, 0.0
      %v418 = vmax.f32 %v403, 0.0
      %v419 = vmax.f32 %v406, 0.0
      %v420 = vmax.f32 %v408, 0.0
      %v421 = vmax.f32 %v411, 0.0
      %v422 = vmax.f32 %v413, 0.0
      %v423 = vpack.c.bf16 %v415, %v415
      %v424 = vpack.c.bf16 %v416, %v416
      %v425 = vpack.c.bf16 %v417, %v417
      %v426 = vpack.c.bf16 %v418, %v418
      %v427 = vpack.c.bf16 %v419, %v419
      %v428 = vpack.c.bf16 %v420, %v420
      %v429 = vpack.c.bf16 %v421, %v421
      %v430 = vpack.c.bf16 %v422, %v422
      %vm431 = vcmask 125952
      %432 = vst.msk [vmem:[%s175] sm:$0xf] %vm431, %v423
      %433 = vst.msk [vmem:[%s175 + $0x4] sm:$0xf] %vm431, %v424
      %434 = vst.msk [vmem:[%s175 + $0x8] sm:$0xf] %vm431, %v425
      %435 = vst.msk [vmem:[%s175 + $0xc] sm:$0xf] %vm431, %v426
      %436 = vst.msk [vmem:[%s175 + $0x10] sm:$0xf] %vm431, %v427
      %437 = vst.msk [vmem:[%s175 + $0x14] sm:$0xf] %vm431, %v428
      %438 = vst.msk [vmem:[%s175 + $0x18] sm:$0xf] %vm431, %v429
      %439 = vst.msk [vmem:[%s175 + $0x1c] sm:$0xf] %vm431, %v430
      %s440 = smul.u32 8, %s14
      %p441 = scmp.lt.s32.totalorder %s440, 15
      %s442 = scalar_select %p441, %s440, 15
      %s443 = smul.addr %s442, 4
      %s444 = scalar_lea.vmem %s3, %s443
      // Predicated region
      $region33: #{forward.17} parent=31 // pred_check
        %p445 = pneg %p100
      $region34: #{forward.17} parent=31 // pred_check_branch
        %447 = sbr.rel (%p445) target = $region36
      $region35: #{forward.17} parent=31 // pred_region
        %s448 = smul.u32 8, %s14
      $region36: #{forward.17} parent=31 // pred_fallthru
        _
    $region32: #{forward.17} parent=5 // pred_fallthru
      _
    %p449 = scmp.le.s32.totalorder 2, %s9
    // Predicated region
    $region37: #{forward.17} parent=5 // pred_check
      %p450 = pneg %p449
    $region38: #{forward.17} parent=5 // pred_check_branch
      %452 = sbr.rel (%p450) target = $region40
    $region39: #{forward.17} parent=5 // pred_region
      %s453 = ssub.s32 %s9, 2
      // Predicated region
      $region41: #{forward.17} parent=39 // pred_check
        %p454 = pneg %p106
      $region42: #{forward.17} parent=39 // pred_check_branch
        %456 = sbr.rel (%p454) target = $region44
      $region43: #{forward.17} parent=39 // pred_region
        %s457 = smul.u32 8, %s15
        %p458 = scmp.lt.s32.totalorder %s457, 15
        %s459 = scalar_select %p458, %s457, 15
        %s460 = smul.addr %s459, 4
        %s461 = scalar_lea.vmem %s3, %s460
      $region44: #{forward.17} parent=39 // pred_fallthru
        _
    $region40: #{forward.17} parent=5 // pred_fallthru
      _
  $region6: #{forward.17} parent=0 // loop_footer
    %s13 = sadd.s32 1, %s9
  $region7: #{forward.17} parent=0 // loop_footer_branch
    %8 = sbr.rel target = $region3
  $region8: #{forward.17} parent=0 // loop_exit
    _

// kernel: forward.18
$region0: #{forward.18}
  #allocation0 [shape = 'u32[]', space=smem, size = 0x4, offset = 0x4, fixed_abs, tag = 'smem constant byte address 0x4 - core index']
  #allocation1 [shape = 'u32[72,128]{1,0:T(1,128)}', space=vmem, size = 0x9000, scoped, tag = 'internal scratch']
  %s0 = inlined_call_operand.vmem [shape: bf16[32,512], index: 0, kind: input, shape index: {}]
  %s1 = inlined_call_operand.vmem [shape: bf16[512,16], index: 1, kind: input, shape index: {}]
  %s2 = inlined_call_operand.vmem [shape: f32[1,16], index: 2, kind: input, shape index: {}]
  %s3 = inlined_call_operand.vmem [shape: bf16[32,16], index: 3, kind: output, shape index: {}]
  %s4 = sld [smem:[#allocation0]]
  $region45: #{forward.18} parent=0
    _
  %s6 = ssub.s32 1, %s4
  %s7 = scalar_select 0, %s6, %s4
  loop: start=0, step=1, limit=4
  $region2: #{forward.18} parent=0 // loop_pre_header
    _
  $region3: #{forward.18} parent=0 // loop_header
    %s9 = sphi 0, %s13
    %p10 = scmp.ge.s32.totalorder %s9, 4
    %s19 = sphi 0, %s21
    %s22 = sphi 0, %s19
    %s23 = sphi 0, %s22
    %s39 = sphi 0, %s23
    %s43 = sphi 0, %s43
    %s45 = sphi 0, %s43
    %s46 = sphi 0, %s45
    %s60 = sphi 0, %s46
    %s64 = sphi 0, %s64
    %s66 = sphi 0, %s64
    %s67 = sphi 0, %s66
    %s81 = sphi 0, %s67
    %s87 = sphi 0, %s89
    %s90 = sphi 0, %s87
    %s91 = sphi 0, %s90
    %s107 = sphi 0, %s91
  $region4: #{forward.18} parent=0 // loop_header_branch
    %12 = sbr.rel (%p10) target = $region8
  $region5: #{forward.18} parent=0 // loop_body
    %s14 = ssub.s32 %s9, 1
    %s15 = ssub.s32 %s9, 2
    %s16 = sadd.s32 %s9, 1
    %s17 = ssub.s32 %s9, %s16
    %p18 = scmp.eq.s32.totalorder %s17, 0
    %s20 = sadd.s32 %s19, 1
    %s21 = scalar_select %p18, %s19, %s20
    %p24 = pneg %p18
    %p25 = scmp.eq.s32.totalorder %s9, 1
    %p26 = por %p24, %p25
    %p27 = scmp.ne.s32.totalorder %s19, %s22
    %p28 = scmp.eq.s32.totalorder %s9, 0
    %p29 = por %p27, %p28
    %p30 = scmp.ne.s32.totalorder %s19, %s22
    %p31 = scmp.eq.s32.totalorder %s14, 1
    %p32 = por %p30, %p31
    %p33 = scmp.ne.s32.totalorder %s22, %s23
    %p34 = scmp.eq.s32.totalorder %s14, 0
    %p35 = por %p33, %p34
    %p36 = scmp.ne.s32.totalorder %s22, %s23
    %p37 = scmp.eq.s32.totalorder %s15, 1
    %p38 = por %p36, %p37
    %p40 = scmp.ne.s32.totalorder %s23, %s39
    %p41 = scmp.eq.s32.totalorder %s15, 0
    %p42 = por %p40, %p41
    %s44 = sadd.s32 %s43, 1
    %p47 = scmp.eq.s32.totalorder %s9, 1
    %p48 = scmp.ne.s32.totalorder %s43, %s45
    %p49 = scmp.eq.s32.totalorder %s9, 0
    %p50 = por %p48, %p49
    %p51 = scmp.ne.s32.totalorder %s43, %s45
    %p52 = scmp.eq.s32.totalorder %s14, 1
    %p53 = por %p51, %p52
    %p54 = scmp.ne.s32.totalorder %s45, %s46
    %p55 = scmp.eq.s32.totalorder %s14, 0
    %p56 = por %p54, %p55
    %p57 = scmp.ne.s32.totalorder %s45, %s46
    %p58 = scmp.eq.s32.totalorder %s15, 1
    %p59 = por %p57, %p58
    %p61 = scmp.ne.s32.totalorder %s46, %s60
    %p62 = scmp.eq.s32.totalorder %s15, 0
    %p63 = por %p61, %p62
    %s65 = sadd.s32 %s64, 1
    %p68 = scmp.eq.s32.totalorder %s9, 1
    %p69 = scmp.ne.s32.totalorder %s64, %s66
    %p70 = scmp.eq.s32.totalorder %s9, 0
    %p71 = por %p69, %p70
    %p72 = scmp.ne.s32.totalorder %s64, %s66
    %p73 = scmp.eq.s32.totalorder %s14, 1
    %p74 = por %p72, %p73
    %p75 = scmp.ne.s32.totalorder %s66, %s67
    %p76 = scmp.eq.s32.totalorder %s14, 0
    %p77 = por %p75, %p76
    %p78 = scmp.ne.s32.totalorder %s66, %s67
    %p79 = scmp.eq.s32.totalorder %s15, 1
    %p80 = por %p78, %p79
    %p82 = scmp.ne.s32.totalorder %s67, %s81
    %p83 = scmp.eq.s32.totalorder %s15, 0
    %p84 = por %p82, %p83
    %s85 = ssub.s32 %s9, %s16
    %p86 = scmp.eq.s32.totalorder %s85, 0
    %s88 = sadd.s32 %s87, 1
    %s89 = scalar_select %p86, %s87, %s88
    %p92 = pneg %p86
    %p93 = scmp.eq.s32.totalorder %s9, 1
    %p94 = por %p92, %p93
    %p95 = scmp.ne.s32.totalorder %s87, %s90
    %p96 = scmp.eq.s32.totalorder %s9, 0
    %p97 = por %p95, %p96
    %p98 = scmp.ne.s32.totalorder %s87, %s90
    %p99 = scmp.eq.s32.totalorder %s14, 1
    %p100 = por %p98, %p99
    %p101 = scmp.ne.s32.totalorder %s90, %s91
    %p102 = scmp.eq.s32.totalorder %s14, 0
    %p103 = por %p101, %p102
    %p104 = scmp.ne.s32.totalorder %s90, %s91
    %p105 = scmp.eq.s32.totalorder %s15, 1
    %p106 = por %p104, %p105
    %p108 = scmp.ne.s32.totalorder %s91, %s107
    %p109 = scmp.eq.s32.totalorder %s15, 0
    %p110 = por %p108, %p109
    %p111 = scmp.le.s32.totalorder 1, %s9
    %p112 = scmp.lt.s32.totalorder %s9, 3
    %p113 = pnand %p111, %p112
    %p114 = pneg %p113
    // Predicated region
    $region9: #{forward.18} parent=5 // pred_check
      _
    $region10: #{forward.18} parent=5 // pred_check_branch
      %116 = sbr.rel (%p113) target = $region12
    $region11: #{forward.18} parent=5 // pred_region
      %s117 = ssub.s32 %s9, 1
      // Predicated region
      $region13: #{forward.18} parent=11 // pred_check
        %p118 = pneg %p56
      $region14: #{forward.18} parent=11 // pred_check_branch
        %120 = sbr.rel (%p118) target = $region16
      $region15: #{forward.18} parent=11 // pred_region
        _
      $region16: #{forward.18} parent=11 // pred_fallthru
        _
      // Predicated region
      $region17: #{forward.18} parent=11 // pred_check
        %p121 = pneg %p77
      $region18: #{forward.18} parent=11 // pred_check_branch
        %123 = sbr.rel (%p121) target = $region20
      $region19: #{forward.18} parent=11 // pred_region
        _
      $region20: #{forward.18} parent=11 // pred_fallthru
        _
    $region12: #{forward.18} parent=5 // pred_fallthru
      _
    %p124 = scmp.lt.s32.totalorder %s9, 2
    // Predicated region
    $region21: #{forward.18} parent=5 // pred_check
      %p125 = pneg %p124
    $region22: #{forward.18} parent=5 // pred_check_branch
      %127 = sbr.rel (%p125) target = $region24
    $region23: #{forward.18} parent=5 // pred_region
      // Predicated region
      $region25: #{forward.18} parent=23 // pred_check
        %p128 = pneg %p29
      $region26: #{forward.18} parent=23 // pred_check_branch
        %130 = sbr.rel (%p128) target = $region28
      $region27: #{forward.18} parent=23 // pred_region
        %s131 = smul.u32 2, %s9
        %p132 = scmp.lt.s32.totalorder %s131, 3
        %s133 = scalar_select %p132, %s131, 3
        %s134 = smul.addr %s133, 4
        %s135 = smul.addr %s134, 4
        %s136 = scalar_lea.vmem %s0, %s135
        %s137 = smul.u32 2, %s9
      $region28: #{forward.18} parent=23 // pred_fallthru
        _
    $region24: #{forward.18} parent=5 // pred_fallthru
      _
    %p138 = scmp.le.s32.totalorder 1, %s9
    %p139 = scmp.lt.s32.totalorder %s9, 3
    %p140 = pnand %p138, %p139
    %p141 = pneg %p140
    // Predicated region
    $region29: #{forward.18} parent=5 // pred_check
      _
    $region30: #{forward.18} parent=5 // pred_check_branch
      %143 = sbr.rel (%p140) target = $region32
    $region31: #{forward.18} parent=5 // pred_region
      %s144 = ssub.s32 %s9, 1
      %s145 = smul.u32 2, %s14
      %p146 = scmp.lt.s32.totalorder %s145, 3
      %s147 = scalar_select %p146, %s145, 3
      %s148 = smul.addr %s147, 4
      %s149 = smul.addr %s148, 4
      %s150 = scalar_lea.vmem %s0, %s149
      %p151 = pneg %p35
      %p152 = pneg %p32
      %p153 = pneg %p56
      %p154 = pneg %p53
      %p155 = pneg %p77
      %p156 = pneg %p74
      %p157 = pneg %p103
      %p158 = pneg %p100
      %s159 = smul.u32 2, %s14
      %p160 = scmp.lt.s32.totalorder %s159, 3
      %s161 = scalar_select %p160, %s159, 3
      %s162 = smul.addr %s161, 4
      %s163 = scalar_lea.vmem %s3, %s162
      %s164 = smul.u32 2, %s14
      %p165 = scmp.lt.s32.totalorder %s164, 3
      %s166 = scalar_select %p165, %s164, 3
      %s167 = smul.addr %s166, 4
      %s168 = smul.addr %s167, 4
      %s169 = scalar_lea.vmem %s0, %s168
      %s170 = smul.u32 2, %s14
      %s171 = smul.u32 2, %s14
      %p172 = scmp.lt.s32.totalorder %s171, 3
      %s173 = scalar_select %p172, %s171, 3
      %s174 = smul.addr %s173, 4
      %s175 = scalar_lea.vmem %s3, %s174
      %s176 = smul.u32 2, %s14
      %v177 = vld [vmem:[%s169] sm:$0xff]
      %v178 = vld [vmem:[%s169 + $0x8] sm:$0xff]
      %v179 = vld [vmem:[%s169 + $0x10] sm:$0xff]
      %v180 = vld [vmem:[%s169 + $0x18] sm:$0xff]
      %v181 = vld [vmem:[%s1] sm:$0xf]
      %v182 = vld [vmem:[%s1 + $0x4] sm:$0xf]
      %v183 = vld [vmem:[%s1 + $0x8] sm:$0xf]
      %v184 = vld [vmem:[%s1 + $0xc] sm:$0xf]
      %v185 = vld [vmem:[%s1 + $0x10] sm:$0xf]
      %v186 = vld [vmem:[%s1 + $0x14] sm:$0xf]
      %v187 = vld [vmem:[%s1 + $0x18] sm:$0xf]
      %v188 = vld [vmem:[%s1 + $0x1c] sm:$0xf]
      %v189 = vld [vmem:[%s1 + $0x20] sm:$0xf]
      %v190 = vld [vmem:[%s1 + $0x24] sm:$0xf]
      %v191 = vld [vmem:[%s1 + $0x28] sm:$0xf]
      %v192 = vld [vmem:[%s1 + $0x2c] sm:$0xf]
      %v193 = vld [vmem:[%s1 + $0x30] sm:$0xf]
      %v194 = vld [vmem:[%s1 + $0x34] sm:$0xf]
      %v195 = vld [vmem:[%s1 + $0x38] sm:$0xf]
      %v196 = vld [vmem:[%s1 + $0x3c] sm:$0xf]
      %v197 = vld [vmem:[%s1 + $0x40] sm:$0xf]
      %v198 = vld [vmem:[%s1 + $0x44] sm:$0xf]
      %v199 = vld [vmem:[%s1 + $0x48] sm:$0xf]
      %v200 = vld [vmem:[%s1 + $0x4c] sm:$0xf]
      %v201 = vld [vmem:[%s1 + $0x50] sm:$0xf]
      %v202 = vld [vmem:[%s1 + $0x54] sm:$0xf]
      %v203 = vld [vmem:[%s1 + $0x58] sm:$0xf]
      %v204 = vld [vmem:[%s1 + $0x5c] sm:$0xf]
      %v205 = vld [vmem:[%s1 + $0x60] sm:$0xf]
      %v206 = vld [vmem:[%s1 + $0x64] sm:$0xf]
      %v207 = vld [vmem:[%s1 + $0x68] sm:$0xf]
      %v208 = vld [vmem:[%s1 + $0x6c] sm:$0xf]
      %v209 = vld [vmem:[%s1 + $0x70] sm:$0xf]
      %v210 = vld [vmem:[%s1 + $0x74] sm:$0xf]
      %v211 = vld [vmem:[%s1 + $0x78] sm:$0xf]
      %v212 = vld [vmem:[%s1 + $0x7c] sm:$0xf]
      %v213 = vld [vmem:[%s1 + $0x80] sm:$0xf]
      %v214 = vld [vmem:[%s1 + $0x84] sm:$0xf]
      %v215 = vld [vmem:[%s1 + $0x88] sm:$0xf]
      %v216 = vld [vmem:[%s1 + $0x8c] sm:$0xf]
      %v217 = vld [vmem:[%s1 + $0x90] sm:$0xf]
      %v218 = vld [vmem:[%s1 + $0x94] sm:$0xf]
      %v219 = vld [vmem:[%s1 + $0x98] sm:$0xf]
      %v220 = vld [vmem:[%s1 + $0x9c] sm:$0xf]
      %v221 = vld [vmem:[%s1 + $0xa0] sm:$0xf]
      %v222 = vld [vmem:[%s1 + $0xa4] sm:$0xf]
      %v223 = vld [vmem:[%s1 + $0xa8] sm:$0xf]
      %v224 = vld [vmem:[%s1 + $0xac] sm:$0xf]
      %v225 = vld [vmem:[%s1 + $0xb0] sm:$0xf]
      %v226 = vld [vmem:[%s1 + $0xb4] sm:$0xf]
      %v227 = vld [vmem:[%s1 + $0xb8] sm:$0xf]
      %v228 = vld [vmem:[%s1 + $0xbc] sm:$0xf]
      %v229 = vld [vmem:[%s1 + $0xc0] sm:$0xf]
      %v230 = vld [vmem:[%s1 + $0xc4] sm:$0xf]
      %v231 = vld [vmem:[%s1 + $0xc8] sm:$0xf]
      %v232 = vld [vmem:[%s1 + $0xcc] sm:$0xf]
      %v233 = vld [vmem:[%s1 + $0xd0] sm:$0xf]
      %v234 = vld [vmem:[%s1 + $0xd4] sm:$0xf]
      %v235 = vld [vmem:[%s1 + $0xd8] sm:$0xf]
      %v236 = vld [vmem:[%s1 + $0xdc] sm:$0xf]
      %v237 = vld [vmem:[%s1 + $0xe0] sm:$0xf]
      %v238 = vld [vmem:[%s1 + $0xe4] sm:$0xf]
      %v239 = vld [vmem:[%s1 + $0xe8] sm:$0xf]
      %v240 = vld [vmem:[%s1 + $0xec] sm:$0xf]
      %v241 = vld [vmem:[%s1 + $0xf0] sm:$0xf]
      %v242 = vld [vmem:[%s1 + $0xf4] sm:$0xf]
      %v243 = vld [vmem:[%s1 + $0xf8] sm:$0xf]
      %v244 = vld [vmem:[%s1 + $0xfc] sm:$0xf]
      %v245 = vld [vmem:[%s2] sm:$0x1]
      %v247 = vperm.slane %v245, 0
      %v253 = vunpack.c.l.b16 %v177
      %v254 = vunpack.c.h.b16 %v177
      %v255 = vunpack.c.l.b16 %v178
      %v256 = vunpack.c.h.b16 %v178
      %v257 = vunpack.c.l.b16 %v179
      %v258 = vunpack.c.h.b16 %v179
      %v259 = vunpack.c.l.b16 %v180
      %v260 = vunpack.c.h.b16 %v180
      %v261 = vpack.c.b16 %v257, %v253
      %v262 = vpack.c.b16 %v258, %v254
      %v263 = vpack.c.b16 %v259, %v255
      %v264 = vpack.c.b16 %v260, %v256
      %v333 = vunpack.c.l.b16 %v181
      %v334 = vunpack.c.l.b16 %v182
      %v335 = vunpack.c.l.b16 %v183
      %v336 = vunpack.c.l.b16 %v184
      %v337 = vunpack.c.l.b16 %v185
      %v338 = vunpack.c.l.b16 %v186
      %v339 = vunpack.c.l.b16 %v187
      %v340 = vunpack.c.l.b16 %v188
      %v341 = vunpack.c.l.b16 %v189
      %v342 = vunpack.c.l.b16 %v190
      %v343 = vunpack.c.l.b16 %v191
      %v344 = vunpack.c.l.b16 %v192
      %v345 = vunpack.c.l.b16 %v193
      %v346 = vunpack.c.l.b16 %v194
      %v347 = vunpack.c.l.b16 %v195
      %v348 = vunpack.c.l.b16 %v196
      %v349 = vunpack.c.l.b16 %v197
      %v350 = vunpack.c.l.b16 %v198
      %v351 = vunpack.c.l.b16 %v199
      %v352 = vunpack.c.l.b16 %v200
      %v353 = vunpack.c.l.b16 %v201
      %v354 = vunpack.c.l.b16 %v202
      %v355 = vunpack.c.l.b16 %v203
      %v356 = vunpack.c.l.b16 %v204
      %v357 = vunpack.c.l.b16 %v205
      %v358 = vunpack.c.l.b16 %v206
      %v359 = vunpack.c.l.b16 %v207
      %v360 = vunpack.c.l.b16 %v208
      %v361 = vunpack.c.l.b16 %v209
      %v362 = vunpack.c.l.b16 %v210
      %v363 = vunpack.c.l.b16 %v211
      %v364 = vunpack.c.l.b16 %v212
      %v365 = vunpack.c.l.b16 %v213
      %v366 = vunpack.c.l.b16 %v214
      %v367 = vunpack.c.l.b16 %v215
      %v368 = vunpack.c.l.b16 %v216
      %v369 = vunpack.c.l.b16 %v217
      %v370 = vunpack.c.l.b16 %v218
      %v371 = vunpack.c.l.b16 %v219
      %v372 = vunpack.c.l.b16 %v220
      %v373 = vunpack.c.l.b16 %v221
      %v374 = vunpack.c.l.b16 %v222
      %v375 = vunpack.c.l.b16 %v223
      %v376 = vunpack.c.l.b16 %v224
      %v377 = vunpack.c.l.b16 %v225
      %v378 = vunpack.c.l.b16 %v226
      %v379 = vunpack.c.l.b16 %v227
      %v380 = vunpack.c.l.b16 %v228
      %v381 = vunpack.c.l.b16 %v229
      %v382 = vunpack.c.l.b16 %v230
      %v383 = vunpack.c.l.b16 %v231
      %v384 = vunpack.c.l.b16 %v232
      %v385 = vunpack.c.l.b16 %v233
      %v386 = vunpack.c.l.b16 %v234
      %v387 = vunpack.c.l.b16 %v235
      %v388 = vunpack.c.l.b16 %v236
      %v389 = vunpack.c.l.b16 %v237
      %v390 = vunpack.c.l.b16 %v238
      %v391 = vunpack.c.l.b16 %v239
      %v392 = vunpack.c.l.b16 %v240
      %v393 = vunpack.c.l.b16 %v241
      %v394 = vunpack.c.l.b16 %v242
      %v395 = vunpack.c.l.b16 %v243
      %v396 = vunpack.c.l.b16 %v244
      %v397 = vpack.c.b16 %v334, %v333
      %v398 = vpack.c.b16 %v336, %v335
      %v399 = vpack.c.b16 %v338, %v337
      %v400 = vpack.c.b16 %v340, %v339
      %v401 = vpack.c.b16 %v342, %v341
      %v402 = vpack.c.b16 %v344, %v343
      %v403 = vpack.c.b16 %v346, %v345
      %v404 = vpack.c.b16 %v348, %v347
      %v405 = vpack.c.b16 %v350, %v349
      %v406 = vpack.c.b16 %v352, %v351
      %v407 = vpack.c.b16 %v354, %v353
      %v408 = vpack.c.b16 %v356, %v355
      %v409 = vpack.c.b16 %v358, %v357
      %v410 = vpack.c.b16 %v360, %v359
      %v411 = vpack.c.b16 %v362, %v361
      %v412 = vpack.c.b16 %v364, %v363
      %v413 = vpack.c.b16 %v366, %v365
      %v414 = vpack.c.b16 %v368, %v367
      %v415 = vpack.c.b16 %v370, %v369
      %v416 = vpack.c.b16 %v372, %v371
      %v417 = vpack.c.b16 %v374, %v373
      %v418 = vpack.c.b16 %v376, %v375
      %v419 = vpack.c.b16 %v378, %v377
      %v420 = vpack.c.b16 %v380, %v379
      %v421 = vpack.c.b16 %v382, %v381
      %v422 = vpack.c.b16 %v384, %v383
      %v423 = vpack.c.b16 %v386, %v385
      %v424 = vpack.c.b16 %v388, %v387
      %v425 = vpack.c.b16 %v390, %v389
      %v426 = vpack.c.b16 %v392, %v391
      %v427 = vpack.c.b16 %v394, %v393
      %v428 = vpack.c.b16 %v396, %v395
      %461 = vmatpush.bf16.msra.mxu0 %v404
      %462 = vmatpush.bf16.msra.mxu0 %v403
      %463 = vmatpush.bf16.msra.mxu0 %v402
      %464 = vmatpush.bf16.msra.mxu0 %v401
      %465 = vmatpush.bf16.msra.mxu0 %v400
      %466 = vmatpush.bf16.msra.mxu0 %v399
      %467 = vmatpush.bf16.msra.mxu0 %v398
      %468 = vmatpush.bf16.msra.mxu0 %v397
      %469 = vmatmul.bf16.gmra.mxu0 %v261
      %v470 = vpop.f32.mrf.mxu0
      %v471 = vadd.f32 %v247, %v470
      %v472 = vpop.f32.mrf.mxu0
      %v473 = vadd.f32 %v247, %v472
      %474 = vdwg.mxu0
      %475 = vmatpush.bf16.msra.mxu0 %v412
      %476 = vmatpush.bf16.msra.mxu0 %v411
      %477 = vmatpush.bf16.msra.mxu0 %v410
      %478 = vmatpush.bf16.msra.mxu0 %v409
      %479 = vmatpush.bf16.msra.mxu0 %v408
      %480 = vmatpush.bf16.msra.mxu0 %v407
      %481 = vmatpush.bf16.msra.mxu0 %v406
      %482 = vmatpush.bf16.msra.mxu0 %v405
      %483 = vmatmul.bf16.gmra.mxu0 %v262
      %v484 = vpop.f32.mrf.mxu0
      %v485 = vadd.f32 %v471, %v484
      %v486 = vpop.f32.mrf.mxu0
      %v487 = vadd.f32 %v473, %v486
      %488 = vdwg.mxu0
      %489 = vmatpush.bf16.msra.mxu0 %v420
      %490 = vmatpush.bf16.msra.mxu0 %v419
      %491 = vmatpush.bf16.msra.mxu0 %v418
      %492 = vmatpush.bf16.msra.mxu0 %v417
      %493 = vmatpush.bf16.msra.mxu0 %v416
      %494 = vmatpush.bf16.msra.mxu0 %v415
      %495 = vmatpush.bf16.msra.mxu0 %v414
      %496 = vmatpush.bf16.msra.mxu0 %v413
      %497 = vmatmul.bf16.gmra.mxu0 %v263
      %v498 = vpop.f32.mrf.mxu0
      %v499 = vadd.f32 %v485, %v498
      %v500 = vpop.f32.mrf.mxu0
      %v501 = vadd.f32 %v487, %v500
      %502 = vdwg.mxu0
      %503 = vmatpush.bf16.msra.mxu0 %v428
      %504 = vmatpush.bf16.msra.mxu0 %v427
      %505 = vmatpush.bf16.msra.mxu0 %v426
      %506 = vmatpush.bf16.msra.mxu0 %v425
      %507 = vmatpush.bf16.msra.mxu0 %v424
      %508 = vmatpush.bf16.msra.mxu0 %v423
      %509 = vmatpush.bf16.msra.mxu0 %v422
      %510 = vmatpush.bf16.msra.mxu0 %v421
      %511 = vmatmul.bf16.gmra.mxu0 %v264
      %v512 = vpop.f32.mrf.mxu0
      %v513 = vadd.f32 %v499, %v512
      %v514 = vpop.f32.mrf.mxu0
      %v515 = vadd.f32 %v501, %v514
      %516 = vdwg.mxu0
      %v517 = vmax.f32 %v513, 0.0
      %v518 = vmax.f32 %v515, 0.0
      %v519 = vpack.c.bf16 %v517, %v517
      %v520 = vpack.c.bf16 %v518, %v518
      %vm521 = vcmask 125952
      %522 = vst.msk [vmem:[%s175] sm:$0xf] %vm521, %v519
      %523 = vst.msk [vmem:[%s175 + $0x4] sm:$0xf] %vm521, %v520
      %s524 = smul.u32 2, %s14
      %p525 = scmp.lt.s32.totalorder %s524, 3
      %s526 = scalar_select %p525, %s524, 3
      %s527 = smul.addr %s526, 4
      %s528 = scalar_lea.vmem %s3, %s527
      // Predicated region
      $region33: #{forward.18} parent=31 // pred_check
        %p529 = pneg %p100
      $region34: #{forward.18} parent=31 // pred_check_branch
        %531 = sbr.rel (%p529) target = $region36
      $region35: #{forward.18} parent=31 // pred_region
        %s532 = smul.u32 2, %s14
      $region36: #{forward.18} parent=31 // pred_fallthru
        _
    $region32: #{forward.18} parent=5 // pred_fallthru
      _
    %p533 = scmp.le.s32.totalorder 2, %s9
    // Predicated region
    $region37: #{forward.18} parent=5 // pred_check
      %p534 = pneg %p533
    $region38: #{forward.18} parent=5 // pred_check_branch
      %536 = sbr.rel (%p534) target = $region40
    $region39: #{forward.18} parent=5 // pred_region
      %s537 = ssub.s32 %s9, 2
      // Predicated region
      $region41: #{forward.18} parent=39 // pred_check
        %p538 = pneg %p106
      $region42: #{forward.18} parent=39 // pred_check_branch
        %540 = sbr.rel (%p538) target = $region44
      $region43: #{forward.18} parent=39 // pred_region
        %s541 = smul.u32 2, %s15
        %p542 = scmp.lt.s32.totalorder %s541, 3
        %s543 = scalar_select %p542, %s541, 3
        %s544 = smul.addr %s543, 4
        %s545 = scalar_lea.vmem %s3, %s544
      $region44: #{forward.18} parent=39 // pred_fallthru
        _
    $region40: #{forward.18} parent=5 // pred_fallthru
      _
  $region6: #{forward.18} parent=0 // loop_footer
    %s13 = sadd.s32 1, %s9
  $region7: #{forward.18} parent=0 // loop_footer_branch
    %8 = sbr.rel target = $region3
  $region8: #{forward.18} parent=0 // loop_exit
    _

// kernel: forward.20
$region0: #{forward.20}
  #allocation0 [shape = 'u32[]', space=smem, size = 0x4, offset = 0x4, fixed_abs, tag = 'smem constant byte address 0x4 - core index']
  #allocation1 [shape = 'u32[72,128]{1,0:T(1,128)}', space=vmem, size = 0x9000, scoped, tag = 'internal scratch']
  %s0 = inlined_call_operand.vmem [shape: bf16[32,256], index: 0, kind: input, shape index: {}]
  %s1 = inlined_call_operand.vmem [shape: bf16[256,16], index: 1, kind: input, shape index: {}]
  %s2 = inlined_call_operand.vmem [shape: f32[1,16], index: 2, kind: input, shape index: {}]
  %s3 = inlined_call_operand.vmem [shape: f32[32,16], index: 3, kind: output, shape index: {}]
  %s4 = sld [smem:[#allocation0]]
  $region45: #{forward.20} parent=0
    _
  %s6 = ssub.s32 1, %s4
  %s7 = scalar_select 0, %s6, %s4
  loop: start=0, step=1, limit=4
  $region2: #{forward.20} parent=0 // loop_pre_header
    _
  $region3: #{forward.20} parent=0 // loop_header
    %s9 = sphi 0, %s13
    %p10 = scmp.ge.s32.totalorder %s9, 4
    %s19 = sphi 0, %s21
    %s22 = sphi 0, %s19
    %s23 = sphi 0, %s22
    %s39 = sphi 0, %s23
    %s43 = sphi 0, %s43
    %s45 = sphi 0, %s43
    %s46 = sphi 0, %s45
    %s60 = sphi 0, %s46
    %s64 = sphi 0, %s64
    %s66 = sphi 0, %s64
    %s67 = sphi 0, %s66
    %s81 = sphi 0, %s67
    %s87 = sphi 0, %s89
    %s90 = sphi 0, %s87
    %s91 = sphi 0, %s90
    %s107 = sphi 0, %s91
  $region4: #{forward.20} parent=0 // loop_header_branch
    %12 = sbr.rel (%p10) target = $region8
  $region5: #{forward.20} parent=0 // loop_body
    %s14 = ssub.s32 %s9, 1
    %s15 = ssub.s32 %s9, 2
    %s16 = sadd.s32 %s9, 1
    %s17 = ssub.s32 %s9, %s16
    %p18 = scmp.eq.s32.totalorder %s17, 0
    %s20 = sadd.s32 %s19, 1
    %s21 = scalar_select %p18, %s19, %s20
    %p24 = pneg %p18
    %p25 = scmp.eq.s32.totalorder %s9, 1
    %p26 = por %p24, %p25
    %p27 = scmp.ne.s32.totalorder %s19, %s22
    %p28 = scmp.eq.s32.totalorder %s9, 0
    %p29 = por %p27, %p28
    %p30 = scmp.ne.s32.totalorder %s19, %s22
    %p31 = scmp.eq.s32.totalorder %s14, 1
    %p32 = por %p30, %p31
    %p33 = scmp.ne.s32.totalorder %s22, %s23
    %p34 = scmp.eq.s32.totalorder %s14, 0
    %p35 = por %p33, %p34
    %p36 = scmp.ne.s32.totalorder %s22, %s23
    %p37 = scmp.eq.s32.totalorder %s15, 1
    %p38 = por %p36, %p37
    %p40 = scmp.ne.s32.totalorder %s23, %s39
    %p41 = scmp.eq.s32.totalorder %s15, 0
    %p42 = por %p40, %p41
    %s44 = sadd.s32 %s43, 1
    %p47 = scmp.eq.s32.totalorder %s9, 1
    %p48 = scmp.ne.s32.totalorder %s43, %s45
    %p49 = scmp.eq.s32.totalorder %s9, 0
    %p50 = por %p48, %p49
    %p51 = scmp.ne.s32.totalorder %s43, %s45
    %p52 = scmp.eq.s32.totalorder %s14, 1
    %p53 = por %p51, %p52
    %p54 = scmp.ne.s32.totalorder %s45, %s46
    %p55 = scmp.eq.s32.totalorder %s14, 0
    %p56 = por %p54, %p55
    %p57 = scmp.ne.s32.totalorder %s45, %s46
    %p58 = scmp.eq.s32.totalorder %s15, 1
    %p59 = por %p57, %p58
    %p61 = scmp.ne.s32.totalorder %s46, %s60
    %p62 = scmp.eq.s32.totalorder %s15, 0
    %p63 = por %p61, %p62
    %s65 = sadd.s32 %s64, 1
    %p68 = scmp.eq.s32.totalorder %s9, 1
    %p69 = scmp.ne.s32.totalorder %s64, %s66
    %p70 = scmp.eq.s32.totalorder %s9, 0
    %p71 = por %p69, %p70
    %p72 = scmp.ne.s32.totalorder %s64, %s66
    %p73 = scmp.eq.s32.totalorder %s14, 1
    %p74 = por %p72, %p73
    %p75 = scmp.ne.s32.totalorder %s66, %s67
    %p76 = scmp.eq.s32.totalorder %s14, 0
    %p77 = por %p75, %p76
    %p78 = scmp.ne.s32.totalorder %s66, %s67
    %p79 = scmp.eq.s32.totalorder %s15, 1
    %p80 = por %p78, %p79
    %p82 = scmp.ne.s32.totalorder %s67, %s81
    %p83 = scmp.eq.s32.totalorder %s15, 0
    %p84 = por %p82, %p83
    %s85 = ssub.s32 %s9, %s16
    %p86 = scmp.eq.s32.totalorder %s85, 0
    %s88 = sadd.s32 %s87, 1
    %s89 = scalar_select %p86, %s87, %s88
    %p92 = pneg %p86
    %p93 = scmp.eq.s32.totalorder %s9, 1
    %p94 = por %p92, %p93
    %p95 = scmp.ne.s32.totalorder %s87, %s90
    %p96 = scmp.eq.s32.totalorder %s9, 0
    %p97 = por %p95, %p96
    %p98 = scmp.ne.s32.totalorder %s87, %s90
    %p99 = scmp.eq.s32.totalorder %s14, 1
    %p100 = por %p98, %p99
    %p101 = scmp.ne.s32.totalorder %s90, %s91
    %p102 = scmp.eq.s32.totalorder %s14, 0
    %p103 = por %p101, %p102
    %p104 = scmp.ne.s32.totalorder %s90, %s91
    %p105 = scmp.eq.s32.totalorder %s15, 1
    %p106 = por %p104, %p105
    %p108 = scmp.ne.s32.totalorder %s91, %s107
    %p109 = scmp.eq.s32.totalorder %s15, 0
    %p110 = por %p108, %p109
    %p111 = scmp.le.s32.totalorder 1, %s9
    %p112 = scmp.lt.s32.totalorder %s9, 3
    %p113 = pnand %p111, %p112
    %p114 = pneg %p113
    // Predicated region
    $region9: #{forward.20} parent=5 // pred_check
      _
    $region10: #{forward.20} parent=5 // pred_check_branch
      %116 = sbr.rel (%p113) target = $region12
    $region11: #{forward.20} parent=5 // pred_region
      %s117 = ssub.s32 %s9, 1
      // Predicated region
      $region13: #{forward.20} parent=11 // pred_check
        %p118 = pneg %p56
      $region14: #{forward.20} parent=11 // pred_check_branch
        %120 = sbr.rel (%p118) target = $region16
      $region15: #{forward.20} parent=11 // pred_region
        _
      $region16: #{forward.20} parent=11 // pred_fallthru
        _
      // Predicated region
      $region17: #{forward.20} parent=11 // pred_check
        %p121 = pneg %p77
      $region18: #{forward.20} parent=11 // pred_check_branch
        %123 = sbr.rel (%p121) target = $region20
      $region19: #{forward.20} parent=11 // pred_region
        _
      $region20: #{forward.20} parent=11 // pred_fallthru
        _
    $region12: #{forward.20} parent=5 // pred_fallthru
      _
    %p124 = scmp.lt.s32.totalorder %s9, 2
    // Predicated region
    $region21: #{forward.20} parent=5 // pred_check
      %p125 = pneg %p124
    $region22: #{forward.20} parent=5 // pred_check_branch
      %127 = sbr.rel (%p125) target = $region24
    $region23: #{forward.20} parent=5 // pred_region
      // Predicated region
      $region25: #{forward.20} parent=23 // pred_check
        %p128 = pneg %p29
      $region26: #{forward.20} parent=23 // pred_check_branch
        %130 = sbr.rel (%p128) target = $region28
      $region27: #{forward.20} parent=23 // pred_region
        %s131 = smul.u32 2, %s9
        %p132 = scmp.lt.s32.totalorder %s131, 3
        %s133 = scalar_select %p132, %s131, 3
        %s134 = smul.addr %s133, 2
        %s135 = smul.addr %s134, 4
        %s136 = scalar_lea.vmem %s0, %s135
        %s137 = smul.u32 2, %s9
      $region28: #{forward.20} parent=23 // pred_fallthru
        _
    $region24: #{forward.20} parent=5 // pred_fallthru
      _
    %p138 = scmp.le.s32.totalorder 1, %s9
    %p139 = scmp.lt.s32.totalorder %s9, 3
    %p140 = pnand %p138, %p139
    %p141 = pneg %p140
    // Predicated region
    $region29: #{forward.20} parent=5 // pred_check
      _
    $region30: #{forward.20} parent=5 // pred_check_branch
      %143 = sbr.rel (%p140) target = $region32
    $region31: #{forward.20} parent=5 // pred_region
      %s144 = ssub.s32 %s9, 1
      %s145 = smul.u32 2, %s14
      %p146 = scmp.lt.s32.totalorder %s145, 3
      %s147 = scalar_select %p146, %s145, 3
      %s148 = smul.addr %s147, 2
      %s149 = smul.addr %s148, 4
      %s150 = scalar_lea.vmem %s0, %s149
      %p151 = pneg %p35
      %p152 = pneg %p32
      %p153 = pneg %p56
      %p154 = pneg %p53
      %p155 = pneg %p77
      %p156 = pneg %p74
      %p157 = pneg %p103
      %p158 = pneg %p100
      %s159 = smul.u32 2, %s14
      %p160 = scmp.lt.s32.totalorder %s159, 3
      %s161 = scalar_select %p160, %s159, 3
      %s162 = smul.addr %s161, 8
      %s163 = scalar_lea.vmem %s3, %s162
      %s164 = smul.u32 2, %s14
      %p165 = scmp.lt.s32.totalorder %s164, 3
      %s166 = scalar_select %p165, %s164, 3
      %s167 = smul.addr %s166, 2
      %s168 = smul.addr %s167, 4
      %s169 = scalar_lea.vmem %s0, %s168
      %s170 = smul.u32 2, %s14
      %s171 = smul.u32 2, %s14
      %p172 = scmp.lt.s32.totalorder %s171, 3
      %s173 = scalar_select %p172, %s171, 3
      %s174 = smul.addr %s173, 8
      %s175 = scalar_lea.vmem %s3, %s174
      %s176 = smul.u32 2, %s14
      %v177 = vld [vmem:[%s169] sm:$0xff]
      %v178 = vld [vmem:[%s169 + $0x8] sm:$0xff]
      %v179 = vld [vmem:[%s1] sm:$0xf]
      %v180 = vld [vmem:[%s1 + $0x4] sm:$0xf]
      %v181 = vld [vmem:[%s1 + $0x8] sm:$0xf]
      %v182 = vld [vmem:[%s1 + $0xc] sm:$0xf]
      %v183 = vld [vmem:[%s1 + $0x10] sm:$0xf]
      %v184 = vld [vmem:[%s1 + $0x14] sm:$0xf]
      %v185 = vld [vmem:[%s1 + $0x18] sm:$0xf]
      %v186 = vld [vmem:[%s1 + $0x1c] sm:$0xf]
      %v187 = vld [vmem:[%s1 + $0x20] sm:$0xf]
      %v188 = vld [vmem:[%s1 + $0x24] sm:$0xf]
      %v189 = vld [vmem:[%s1 + $0x28] sm:$0xf]
      %v190 = vld [vmem:[%s1 + $0x2c] sm:$0xf]
      %v191 = vld [vmem:[%s1 + $0x30] sm:$0xf]
      %v192 = vld [vmem:[%s1 + $0x34] sm:$0xf]
      %v193 = vld [vmem:[%s1 + $0x38] sm:$0xf]
      %v194 = vld [vmem:[%s1 + $0x3c] sm:$0xf]
      %v195 = vld [vmem:[%s1 + $0x40] sm:$0xf]
      %v196 = vld [vmem:[%s1 + $0x44] sm:$0xf]
      %v197 = vld [vmem:[%s1 + $0x48] sm:$0xf]
      %v198 = vld [vmem:[%s1 + $0x4c] sm:$0xf]
      %v199 = vld [vmem:[%s1 + $0x50] sm:$0xf]
      %v200 = vld [vmem:[%s1 + $0x54] sm:$0xf]
      %v201 = vld [vmem:[%s1 + $0x58] sm:$0xf]
      %v202 = vld [vmem:[%s1 + $0x5c] sm:$0xf]
      %v203 = vld [vmem:[%s1 + $0x60] sm:$0xf]
      %v204 = vld [vmem:[%s1 + $0x64] sm:$0xf]
      %v205 = vld [vmem:[%s1 + $0x68] sm:$0xf]
      %v206 = vld [vmem:[%s1 + $0x6c] sm:$0xf]
      %v207 = vld [vmem:[%s1 + $0x70] sm:$0xf]
      %v208 = vld [vmem:[%s1 + $0x74] sm:$0xf]
      %v209 = vld [vmem:[%s1 + $0x78] sm:$0xf]
      %v210 = vld [vmem:[%s1 + $0x7c] sm:$0xf]
      %v211 = vld [vmem:[%s2] sm:$0x1]
      %v213 = vperm.slane %v211, 0
      %v217 = vunpack.c.l.b16 %v177
      %v218 = vunpack.c.h.b16 %v177
      %v219 = vunpack.c.l.b16 %v178
      %v220 = vunpack.c.h.b16 %v178
      %v221 = vpack.c.b16 %v219, %v217
      %v222 = vpack.c.b16 %v220, %v218
      %v257 = vunpack.c.l.b16 %v179
      %v258 = vunpack.c.l.b16 %v180
      %v259 = vunpack.c.l.b16 %v181
      %v260 = vunpack.c.l.b16 %v182
      %v261 = vunpack.c.l.b16 %v183
      %v262 = vunpack.c.l.b16 %v184
      %v263 = vunpack.c.l.b16 %v185
      %v264 = vunpack.c.l.b16 %v186
      %v265 = vunpack.c.l.b16 %v187
      %v266 = vunpack.c.l.b16 %v188
      %v267 = vunpack.c.l.b16 %v189
      %v268 = vunpack.c.l.b16 %v190
      %v269 = vunpack.c.l.b16 %v191
      %v270 = vunpack.c.l.b16 %v192
      %v271 = vunpack.c.l.b16 %v193
      %v272 = vunpack.c.l.b16 %v194
      %v273 = vunpack.c.l.b16 %v195
      %v274 = vunpack.c.l.b16 %v196
      %v275 = vunpack.c.l.b16 %v197
      %v276 = vunpack.c.l.b16 %v198
      %v277 = vunpack.c.l.b16 %v199
      %v278 = vunpack.c.l.b16 %v200
      %v279 = vunpack.c.l.b16 %v201
      %v280 = vunpack.c.l.b16 %v202
      %v281 = vunpack.c.l.b16 %v203
      %v282 = vunpack.c.l.b16 %v204
      %v283 = vunpack.c.l.b16 %v205
      %v284 = vunpack.c.l.b16 %v206
      %v285 = vunpack.c.l.b16 %v207
      %v286 = vunpack.c.l.b16 %v208
      %v287 = vunpack.c.l.b16 %v209
      %v288 = vunpack.c.l.b16 %v210
      %v289 = vpack.c.b16 %v258, %v257
      %v290 = vpack.c.b16 %v260, %v259
      %v291 = vpack.c.b16 %v262, %v261
      %v292 = vpack.c.b16 %v264, %v263
      %v293 = vpack.c.b16 %v266, %v265
      %v294 = vpack.c.b16 %v268, %v267
      %v295 = vpack.c.b16 %v270, %v269
      %v296 = vpack.c.b16 %v272, %v271
      %v297 = vpack.c.b16 %v274, %v273
      %v298 = vpack.c.b16 %v276, %v275
      %v299 = vpack.c.b16 %v278, %v277
      %v300 = vpack.c.b16 %v280, %v279
      %v301 = vpack.c.b16 %v282, %v281
      %v302 = vpack.c.b16 %v284, %v283
      %v303 = vpack.c.b16 %v286, %v285
      %v304 = vpack.c.b16 %v288, %v287
      %321 = vmatpush.bf16.msra.mxu0 %v296
      %322 = vmatpush.bf16.msra.mxu0 %v295
      %323 = vmatpush.bf16.msra.mxu0 %v294
      %324 = vmatpush.bf16.msra.mxu0 %v293
      %325 = vmatpush.bf16.msra.mxu0 %v292
      %326 = vmatpush.bf16.msra.mxu0 %v291
      %327 = vmatpush.bf16.msra.mxu0 %v290
      %328 = vmatpush.bf16.msra.mxu0 %v289
      %329 = vmatmul.bf16.gmra.mxu0 %v221
      %v330 = vpop.f32.mrf.mxu0
      %v331 = vadd.f32 %v213, %v330
      %v332 = vpop.f32.mrf.mxu0
      %v333 = vadd.f32 %v213, %v332
      %334 = vdwg.mxu0
      %335 = vmatpush.bf16.msra.mxu0 %v304
      %336 = vmatpush.bf16.msra.mxu0 %v303
      %337 = vmatpush.bf16.msra.mxu0 %v302
      %338 = vmatpush.bf16.msra.mxu0 %v301
      %339 = vmatpush.bf16.msra.mxu0 %v300
      %340 = vmatpush.bf16.msra.mxu0 %v299
      %341 = vmatpush.bf16.msra.mxu0 %v298
      %342 = vmatpush.bf16.msra.mxu0 %v297
      %343 = vmatmul.bf16.gmra.mxu0 %v222
      %v344 = vpop.f32.mrf.mxu0
      %v345 = vadd.f32 %v331, %v344
      %v346 = vpop.f32.mrf.mxu0
      %v347 = vadd.f32 %v333, %v346
      %348 = vdwg.mxu0
      %v349 = vmul.f32 %v345, 20.0
      %v350 = vmul.f32 %v347, 20.0
      %v351 = vround.ne.pseudo %v349
      %v352 = vround.ne.pseudo %v350
      %v353 = vmul.f32 %v351, 0.05
      %v354 = vmul.f32 %v352, 0.05
      %vm355 = vcmask 130048
      %356 = vst.msk [vmem:[%s175] sm:$0xff] %vm355, %v353
      %357 = vst.msk [vmem:[%s175 + $0x8] sm:$0xff] %vm355, %v354
      %s358 = smul.u32 2, %s14
      %p359 = scmp.lt.s32.totalorder %s358, 3
      %s360 = scalar_select %p359, %s358, 3
      %s361 = smul.addr %s360, 8
      %s362 = scalar_lea.vmem %s3, %s361
      // Predicated region
      $region33: #{forward.20} parent=31 // pred_check
        %p363 = pneg %p100
      $region34: #{forward.20} parent=31 // pred_check_branch
        %365 = sbr.rel (%p363) target = $region36
      $region35: #{forward.20} parent=31 // pred_region
        %s366 = smul.u32 2, %s14
      $region36: #{forward.20} parent=31 // pred_fallthru
        _
    $region32: #{forward.20} parent=5 // pred_fallthru
      _
    %p367 = scmp.le.s32.totalorder 2, %s9
    // Predicated region
    $region37: #{forward.20} parent=5 // pred_check
      %p368 = pneg %p367
    $region38: #{forward.20} parent=5 // pred_check_branch
      %370 = sbr.rel (%p368) target = $region40
    $region39: #{forward.20} parent=5 // pred_region
      %s371 = ssub.s32 %s9, 2
      // Predicated region
      $region41: #{forward.20} parent=39 // pred_check
        %p372 = pneg %p106
      $region42: #{forward.20} parent=39 // pred_check_branch
        %374 = sbr.rel (%p372) target = $region44
      $region43: #{forward.20} parent=39 // pred_region
        %s375 = smul.u32 2, %s15
        %p376 = scmp.lt.s32.totalorder %s375, 3
        %s377 = scalar_select %p376, %s375, 3
        %s378 = smul.addr %s377, 8
        %s379 = scalar_lea.vmem %s3, %s378
      $region44: #{forward.20} parent=39 // pred_fallthru
        _
    $region40: #{forward.20} parent=5 // pred_fallthru
      _
  $region6: #{forward.20} parent=0 // loop_footer
    %s13 = sadd.s32 1, %s9
  $region7: #{forward.20} parent=0 // loop_footer_branch
    %8 = sbr.rel target = $region3
  $region8: #{forward.20} parent=0 // loop_exit
    _

// kernel: forward.19
$region0: #{forward.19}
  #allocation0 [shape = 'u32[]', space=smem, size = 0x4, offset = 0x4, fixed_abs, tag = 'smem constant byte address 0x4 - core index']
  #allocation1 [shape = 'u32[72,128]{1,0:T(1,128)}', space=vmem, size = 0x9000, scoped, tag = 'internal scratch']
  %s0 = inlined_call_operand.vmem [shape: bf16[32,256], index: 0, kind: input, shape index: {}]
  %s1 = inlined_call_operand.vmem [shape: bf16[256,16], index: 1, kind: input, shape index: {}]
  %s2 = inlined_call_operand.vmem [shape: f32[1,16], index: 2, kind: input, shape index: {}]
  %s3 = inlined_call_operand.vmem [shape: bf16[32,16], index: 3, kind: output, shape index: {}]
  %s4 = sld [smem:[#allocation0]]
  $region45: #{forward.19} parent=0
    _
  %s6 = ssub.s32 1, %s4
  %s7 = scalar_select 0, %s6, %s4
  loop: start=0, step=1, limit=4
  $region2: #{forward.19} parent=0 // loop_pre_header
    _
  $region3: #{forward.19} parent=0 // loop_header
    %s9 = sphi 0, %s13
    %p10 = scmp.ge.s32.totalorder %s9, 4
    %s19 = sphi 0, %s21
    %s22 = sphi 0, %s19
    %s23 = sphi 0, %s22
    %s39 = sphi 0, %s23
    %s43 = sphi 0, %s43
    %s45 = sphi 0, %s43
    %s46 = sphi 0, %s45
    %s60 = sphi 0, %s46
    %s64 = sphi 0, %s64
    %s66 = sphi 0, %s64
    %s67 = sphi 0, %s66
    %s81 = sphi 0, %s67
    %s87 = sphi 0, %s89
    %s90 = sphi 0, %s87
    %s91 = sphi 0, %s90
    %s107 = sphi 0, %s91
  $region4: #{forward.19} parent=0 // loop_header_branch
    %12 = sbr.rel (%p10) target = $region8
  $region5: #{forward.19} parent=0 // loop_body
    %s14 = ssub.s32 %s9, 1
    %s15 = ssub.s32 %s9, 2
    %s16 = sadd.s32 %s9, 1
    %s17 = ssub.s32 %s9, %s16
    %p18 = scmp.eq.s32.totalorder %s17, 0
    %s20 = sadd.s32 %s19, 1
    %s21 = scalar_select %p18, %s19, %s20
    %p24 = pneg %p18
    %p25 = scmp.eq.s32.totalorder %s9, 1
    %p26 = por %p24, %p25
    %p27 = scmp.ne.s32.totalorder %s19, %s22
    %p28 = scmp.eq.s32.totalorder %s9, 0
    %p29 = por %p27, %p28
    %p30 = scmp.ne.s32.totalorder %s19, %s22
    %p31 = scmp.eq.s32.totalorder %s14, 1
    %p32 = por %p30, %p31
    %p33 = scmp.ne.s32.totalorder %s22, %s23
    %p34 = scmp.eq.s32.totalorder %s14, 0
    %p35 = por %p33, %p34
    %p36 = scmp.ne.s32.totalorder %s22, %s23
    %p37 = scmp.eq.s32.totalorder %s15, 1
    %p38 = por %p36, %p37
    %p40 = scmp.ne.s32.totalorder %s23, %s39
    %p41 = scmp.eq.s32.totalorder %s15, 0
    %p42 = por %p40, %p41
    %s44 = sadd.s32 %s43, 1
    %p47 = scmp.eq.s32.totalorder %s9, 1
    %p48 = scmp.ne.s32.totalorder %s43, %s45
    %p49 = scmp.eq.s32.totalorder %s9, 0
    %p50 = por %p48, %p49
    %p51 = scmp.ne.s32.totalorder %s43, %s45
    %p52 = scmp.eq.s32.totalorder %s14, 1
    %p53 = por %p51, %p52
    %p54 = scmp.ne.s32.totalorder %s45, %s46
    %p55 = scmp.eq.s32.totalorder %s14, 0
    %p56 = por %p54, %p55
    %p57 = scmp.ne.s32.totalorder %s45, %s46
    %p58 = scmp.eq.s32.totalorder %s15, 1
    %p59 = por %p57, %p58
    %p61 = scmp.ne.s32.totalorder %s46, %s60
    %p62 = scmp.eq.s32.totalorder %s15, 0
    %p63 = por %p61, %p62
    %s65 = sadd.s32 %s64, 1
    %p68 = scmp.eq.s32.totalorder %s9, 1
    %p69 = scmp.ne.s32.totalorder %s64, %s66
    %p70 = scmp.eq.s32.totalorder %s9, 0
    %p71 = por %p69, %p70
    %p72 = scmp.ne.s32.totalorder %s64, %s66
    %p73 = scmp.eq.s32.totalorder %s14, 1
    %p74 = por %p72, %p73
    %p75 = scmp.ne.s32.totalorder %s66, %s67
    %p76 = scmp.eq.s32.totalorder %s14, 0
    %p77 = por %p75, %p76
    %p78 = scmp.ne.s32.totalorder %s66, %s67
    %p79 = scmp.eq.s32.totalorder %s15, 1
    %p80 = por %p78, %p79
    %p82 = scmp.ne.s32.totalorder %s67, %s81
    %p83 = scmp.eq.s32.totalorder %s15, 0
    %p84 = por %p82, %p83
    %s85 = ssub.s32 %s9, %s16
    %p86 = scmp.eq.s32.totalorder %s85, 0
    %s88 = sadd.s32 %s87, 1
    %s89 = scalar_select %p86, %s87, %s88
    %p92 = pneg %p86
    %p93 = scmp.eq.s32.totalorder %s9, 1
    %p94 = por %p92, %p93
    %p95 = scmp.ne.s32.totalorder %s87, %s90
    %p96 = scmp.eq.s32.totalorder %s9, 0
    %p97 = por %p95, %p96
    %p98 = scmp.ne.s32.totalorder %s87, %s90
    %p99 = scmp.eq.s32.totalorder %s14, 1
    %p100 = por %p98, %p99
    %p101 = scmp.ne.s32.totalorder %s90, %s91
    %p102 = scmp.eq.s32.totalorder %s14, 0
    %p103 = por %p101, %p102
    %p104 = scmp.ne.s32.totalorder %s90, %s91
    %p105 = scmp.eq.s32.totalorder %s15, 1
    %p106 = por %p104, %p105
    %p108 = scmp.ne.s32.totalorder %s91, %s107
    %p109 = scmp.eq.s32.totalorder %s15, 0
    %p110 = por %p108, %p109
    %p111 = scmp.le.s32.totalorder 1, %s9
    %p112 = scmp.lt.s32.totalorder %s9, 3
    %p113 = pnand %p111, %p112
    %p114 = pneg %p113
    // Predicated region
    $region9: #{forward.19} parent=5 // pred_check
      _
    $region10: #{forward.19} parent=5 // pred_check_branch
      %116 = sbr.rel (%p113) target = $region12
    $region11: #{forward.19} parent=5 // pred_region
      %s117 = ssub.s32 %s9, 1
      // Predicated region
      $region13: #{forward.19} parent=11 // pred_check
        %p118 = pneg %p56
      $region14: #{forward.19} parent=11 // pred_check_branch
        %120 = sbr.rel (%p118) target = $region16
      $region15: #{forward.19} parent=11 // pred_region
        _
      $region16: #{forward.19} parent=11 // pred_fallthru
        _
      // Predicated region
      $region17: #{forward.19} parent=11 // pred_check
        %p121 = pneg %p77
      $region18: #{forward.19} parent=11 // pred_check_branch
        %123 = sbr.rel (%p121) target = $region20
      $region19: #{forward.19} parent=11 // pred_region
        _
      $region20: #{forward.19} parent=11 // pred_fallthru
        _
    $region12: #{forward.19} parent=5 // pred_fallthru
      _
    %p124 = scmp.lt.s32.totalorder %s9, 2
    // Predicated region
    $region21: #{forward.19} parent=5 // pred_check
      %p125 = pneg %p124
    $region22: #{forward.19} parent=5 // pred_check_branch
      %127 = sbr.rel (%p125) target = $region24
    $region23: #{forward.19} parent=5 // pred_region
      // Predicated region
      $region25: #{forward.19} parent=23 // pred_check
        %p128 = pneg %p29
      $region26: #{forward.19} parent=23 // pred_check_branch
        %130 = sbr.rel (%p128) target = $region28
      $region27: #{forward.19} parent=23 // pred_region
        %s131 = smul.u32 2, %s9
        %p132 = scmp.lt.s32.totalorder %s131, 3
        %s133 = scalar_select %p132, %s131, 3
        %s134 = smul.addr %s133, 2
        %s135 = smul.addr %s134, 4
        %s136 = scalar_lea.vmem %s0, %s135
        %s137 = smul.u32 2, %s9
      $region28: #{forward.19} parent=23 // pred_fallthru
        _
    $region24: #{forward.19} parent=5 // pred_fallthru
      _
    %p138 = scmp.le.s32.totalorder 1, %s9
    %p139 = scmp.lt.s32.totalorder %s9, 3
    %p140 = pnand %p138, %p139
    %p141 = pneg %p140
    // Predicated region
    $region29: #{forward.19} parent=5 // pred_check
      _
    $region30: #{forward.19} parent=5 // pred_check_branch
      %143 = sbr.rel (%p140) target = $region32
    $region31: #{forward.19} parent=5 // pred_region
      %s144 = ssub.s32 %s9, 1
      %s145 = smul.u32 2, %s14
      %p146 = scmp.lt.s32.totalorder %s145, 3
      %s147 = scalar_select %p146, %s145, 3
      %s148 = smul.addr %s147, 2
      %s149 = smul.addr %s148, 4
      %s150 = scalar_lea.vmem %s0, %s149
      %p151 = pneg %p35
      %p152 = pneg %p32
      %p153 = pneg %p56
      %p154 = pneg %p53
      %p155 = pneg %p77
      %p156 = pneg %p74
      %p157 = pneg %p103
      %p158 = pneg %p100
      %s159 = smul.u32 2, %s14
      %p160 = scmp.lt.s32.totalorder %s159, 3
      %s161 = scalar_select %p160, %s159, 3
      %s162 = smul.addr %s161, 4
      %s163 = scalar_lea.vmem %s3, %s162
      %s164 = smul.u32 2, %s14
      %p165 = scmp.lt.s32.totalorder %s164, 3
      %s166 = scalar_select %p165, %s164, 3
      %s167 = smul.addr %s166, 2
      %s168 = smul.addr %s167, 4
      %s169 = scalar_lea.vmem %s0, %s168
      %s170 = smul.u32 2, %s14
      %s171 = smul.u32 2, %s14
      %p172 = scmp.lt.s32.totalorder %s171, 3
      %s173 = scalar_select %p172, %s171, 3
      %s174 = smul.addr %s173, 4
      %s175 = scalar_lea.vmem %s3, %s174
      %s176 = smul.u32 2, %s14
      %v177 = vld [vmem:[%s169] sm:$0xff]
      %v178 = vld [vmem:[%s169 + $0x8] sm:$0xff]
      %v179 = vld [vmem:[%s1] sm:$0xf]
      %v180 = vld [vmem:[%s1 + $0x4] sm:$0xf]
      %v181 = vld [vmem:[%s1 + $0x8] sm:$0xf]
      %v182 = vld [vmem:[%s1 + $0xc] sm:$0xf]
      %v183 = vld [vmem:[%s1 + $0x10] sm:$0xf]
      %v184 = vld [vmem:[%s1 + $0x14] sm:$0xf]
      %v185 = vld [vmem:[%s1 + $0x18] sm:$0xf]
      %v186 = vld [vmem:[%s1 + $0x1c] sm:$0xf]
      %v187 = vld [vmem:[%s1 + $0x20] sm:$0xf]
      %v188 = vld [vmem:[%s1 + $0x24] sm:$0xf]
      %v189 = vld [vmem:[%s1 + $0x28] sm:$0xf]
      %v190 = vld [vmem:[%s1 + $0x2c] sm:$0xf]
      %v191 = vld [vmem:[%s1 + $0x30] sm:$0xf]
      %v192 = vld [vmem:[%s1 + $0x34] sm:$0xf]
      %v193 = vld [vmem:[%s1 + $0x38] sm:$0xf]
      %v194 = vld [vmem:[%s1 + $0x3c] sm:$0xf]
      %v195 = vld [vmem:[%s1 + $0x40] sm:$0xf]
      %v196 = vld [vmem:[%s1 + $0x44] sm:$0xf]
      %v197 = vld [vmem:[%s1 + $0x48] sm:$0xf]
      %v198 = vld [vmem:[%s1 + $0x4c] sm:$0xf]
      %v199 = vld [vmem:[%s1 + $0x50] sm:$0xf]
      %v200 = vld [vmem:[%s1 + $0x54] sm:$0xf]
      %v201 = vld [vmem:[%s1 + $0x58] sm:$0xf]
      %v202 = vld [vmem:[%s1 + $0x5c] sm:$0xf]
      %v203 = vld [vmem:[%s1 + $0x60] sm:$0xf]
      %v204 = vld [vmem:[%s1 + $0x64] sm:$0xf]
      %v205 = vld [vmem:[%s1 + $0x68] sm:$0xf]
      %v206 = vld [vmem:[%s1 + $0x6c] sm:$0xf]
      %v207 = vld [vmem:[%s1 + $0x70] sm:$0xf]
      %v208 = vld [vmem:[%s1 + $0x74] sm:$0xf]
      %v209 = vld [vmem:[%s1 + $0x78] sm:$0xf]
      %v210 = vld [vmem:[%s1 + $0x7c] sm:$0xf]
      %v211 = vld [vmem:[%s2] sm:$0x1]
      %v213 = vperm.slane %v211, 0
      %v217 = vunpack.c.l.b16 %v177
      %v218 = vunpack.c.h.b16 %v177
      %v219 = vunpack.c.l.b16 %v178
      %v220 = vunpack.c.h.b16 %v178
      %v221 = vpack.c.b16 %v219, %v217
      %v222 = vpack.c.b16 %v220, %v218
      %v257 = vunpack.c.l.b16 %v179
      %v258 = vunpack.c.l.b16 %v180
      %v259 = vunpack.c.l.b16 %v181
      %v260 = vunpack.c.l.b16 %v182
      %v261 = vunpack.c.l.b16 %v183
      %v262 = vunpack.c.l.b16 %v184
      %v263 = vunpack.c.l.b16 %v185
      %v264 = vunpack.c.l.b16 %v186
      %v265 = vunpack.c.l.b16 %v187
      %v266 = vunpack.c.l.b16 %v188
      %v267 = vunpack.c.l.b16 %v189
      %v268 = vunpack.c.l.b16 %v190
      %v269 = vunpack.c.l.b16 %v191
      %v270 = vunpack.c.l.b16 %v192
      %v271 = vunpack.c.l.b16 %v193
      %v272 = vunpack.c.l.b16 %v194
      %v273 = vunpack.c.l.b16 %v195
      %v274 = vunpack.c.l.b16 %v196
      %v275 = vunpack.c.l.b16 %v197
      %v276 = vunpack.c.l.b16 %v198
      %v277 = vunpack.c.l.b16 %v199
      %v278 = vunpack.c.l.b16 %v200
      %v279 = vunpack.c.l.b16 %v201
      %v280 = vunpack.c.l.b16 %v202
      %v281 = vunpack.c.l.b16 %v203
      %v282 = vunpack.c.l.b16 %v204
      %v283 = vunpack.c.l.b16 %v205
      %v284 = vunpack.c.l.b16 %v206
      %v285 = vunpack.c.l.b16 %v207
      %v286 = vunpack.c.l.b16 %v208
      %v287 = vunpack.c.l.b16 %v209
      %v288 = vunpack.c.l.b16 %v210
      %v289 = vpack.c.b16 %v258, %v257
      %v290 = vpack.c.b16 %v260, %v259
      %v291 = vpack.c.b16 %v262, %v261
      %v292 = vpack.c.b16 %v264, %v263
      %v293 = vpack.c.b16 %v266, %v265
      %v294 = vpack.c.b16 %v268, %v267
      %v295 = vpack.c.b16 %v270, %v269
      %v296 = vpack.c.b16 %v272, %v271
      %v297 = vpack.c.b16 %v274, %v273
      %v298 = vpack.c.b16 %v276, %v275
      %v299 = vpack.c.b16 %v278, %v277
      %v300 = vpack.c.b16 %v280, %v279
      %v301 = vpack.c.b16 %v282, %v281
      %v302 = vpack.c.b16 %v284, %v283
      %v303 = vpack.c.b16 %v286, %v285
      %v304 = vpack.c.b16 %v288, %v287
      %321 = vmatpush.bf16.msra.mxu0 %v296
      %322 = vmatpush.bf16.msra.mxu0 %v295
      %323 = vmatpush.bf16.msra.mxu0 %v294
      %324 = vmatpush.bf16.msra.mxu0 %v293
      %325 = vmatpush.bf16.msra.mxu0 %v292
      %326 = vmatpush.bf16.msra.mxu0 %v291
      %327 = vmatpush.bf16.msra.mxu0 %v290
      %328 = vmatpush.bf16.msra.mxu0 %v289
      %329 = vmatmul.bf16.gmra.mxu0 %v221
      %v330 = vpop.f32.mrf.mxu0
      %v331 = vadd.f32 %v213, %v330
      %v332 = vpop.f32.mrf.mxu0
      %v333 = vadd.f32 %v213, %v332
      %334 = vdwg.mxu0
      %335 = vmatpush.bf16.msra.mxu0 %v304
      %336 = vmatpush.bf16.msra.mxu0 %v303
      %337 = vmatpush.bf16.msra.mxu0 %v302
      %338 = vmatpush.bf16.msra.mxu0 %v301
      %339 = vmatpush.bf16.msra.mxu0 %v300
      %340 = vmatpush.bf16.msra.mxu0 %v299
      %341 = vmatpush.bf16.msra.mxu0 %v298
      %342 = vmatpush.bf16.msra.mxu0 %v297
      %343 = vmatmul.bf16.gmra.mxu0 %v222
      %v344 = vpop.f32.mrf.mxu0
      %v345 = vadd.f32 %v331, %v344
      %v346 = vpop.f32.mrf.mxu0
      %v347 = vadd.f32 %v333, %v346
      %348 = vdwg.mxu0
      %v349 = vmax.f32 %v345, 0.0
      %v350 = vmax.f32 %v347, 0.0
      %v351 = vpack.c.bf16 %v349, %v349
      %v352 = vpack.c.bf16 %v350, %v350
      %vm353 = vcmask 125952
      %354 = vst.msk [vmem:[%s175] sm:$0xf] %vm353, %v351
      %355 = vst.msk [vmem:[%s175 + $0x4] sm:$0xf] %vm353, %v352
      %s356 = smul.u32 2, %s14
      %p357 = scmp.lt.s32.totalorder %s356, 3
      %s358 = scalar_select %p357, %s356, 3
      %s359 = smul.addr %s358, 4
      %s360 = scalar_lea.vmem %s3, %s359
      // Predicated region
      $region33: #{forward.19} parent=31 // pred_check
        %p361 = pneg %p100
      $region34: #{forward.19} parent=31 // pred_check_branch
        %363 = sbr.rel (%p361) target = $region36
      $region35: #{forward.19} parent=31 // pred_region
        %s364 = smul.u32 2, %s14
      $region36: #{forward.19} parent=31 // pred_fallthru
        _
    $region32: #{forward.19} parent=5 // pred_fallthru
      _
    %p365 = scmp.le.s32.totalorder 2, %s9
    // Predicated region
    $region37: #{forward.19} parent=5 // pred_check
      %p366 = pneg %p365
    $region38: #{forward.19} parent=5 // pred_check_branch
      %368 = sbr.rel (%p366) target = $region40
    $region39: #{forward.19} parent=5 // pred_region
      %s369 = ssub.s32 %s9, 2
      // Predicated region
      $region41: #{forward.19} parent=39 // pred_check
        %p370 = pneg %p106
      $region42: #{forward.19} parent=39 // pred_check_branch
        %372 = sbr.rel (%p370) target = $region44
      $region43: #{forward.19} parent=39 // pred_region
        %s373 = smul.u32 2, %s15
        %p374 = scmp.lt.s32.totalorder %s373, 3
        %s375 = scalar_select %p374, %s373, 3
        %s376 = smul.addr %s375, 4
        %s377 = scalar_lea.vmem %s3, %s376
      $region44: #{forward.19} parent=39 // pred_fallthru
        _
    $region40: #{forward.19} parent=5 // pred_fallthru
      _
  $region6: #{forward.19} parent=0 // loop_footer
    %s13 = sadd.s32 1, %s9
  $region7: #{forward.19} parent=0 // loop_footer_branch
    %8 = sbr.rel target = $region3
  $region8: #{forward.19} parent=0 // loop_exit
    _

// kernel: forward.23
$region0: #{forward.23}
  #allocation0 [shape = 'u32[]', space=smem, size = 0x4, offset = 0x4, fixed_abs, tag = 'smem constant byte address 0x4 - core index']
  #allocation1 [shape = 'u32[72,128]{1,0:T(1,128)}', space=vmem, size = 0x9000, scoped, tag = 'internal scratch']
  %s0 = inlined_call_operand.vmem [shape: bf16[32,512], index: 0, kind: input, shape index: {}]
  %s1 = inlined_call_operand.vmem [shape: bf16[512,16], index: 1, kind: input, shape index: {}]
  %s2 = inlined_call_operand.vmem [shape: f32[1,16], index: 2, kind: input, shape index: {}]
  %s3 = inlined_call_operand.vmem [shape: f32[32,16], index: 3, kind: input, shape index: {}]
  %s4 = inlined_call_operand.vmem [shape: f32[1,16], index: 4, kind: input, shape index: {}]
  %s5 = inlined_call_operand.vmem [shape: f32[32,16], index: 5, kind: output, shape index: {0}]
  %s6 = inlined_call_operand.hbm [shape: f32[32,16], index: 6, kind: output, shape index: {1}]
  %7 = xla_tuple %s5, %s6
  %s8 = sld [smem:[#allocation0]]
  $region61: #{forward.23} parent=0
    _
  %s10 = ssub.s32 1, %s8
  %s11 = scalar_select 0, %s10, %s8
  $region1: #{forward.23} parent=0
    #allocation2 [shape = 'u8[16384]{0}', space=vmem, size = 0x4000, scoped, tag = 'output window, operand 1']
    #allocation3 [shape = 's32[2]{0}', space=sflag, size = 0x8, scoped, tag = 'scoped memory for forward.23']
    %12 = vsyncpa [#allocation3], 0
    %s13 = scalar_lea.sflag [#allocation3], 1
    %14 = vsyncpa %s13, 0
    loop: start=0, step=1, limit=4
    $region2: #{forward.23} parent=1 // loop_pre_header
      _
    $region3: #{forward.23} parent=1 // loop_header
      %s16 = sphi 0, %s20
      %p17 = scmp.ge.s32.totalorder %s16, 4
      %s26 = sphi 0, %s28
      %s29 = sphi 0, %s26
      %s30 = sphi 0, %s29
      %s46 = sphi 0, %s30
      %s50 = sphi 0, %s50
      %s52 = sphi 0, %s50
      %s53 = sphi 0, %s52
      %s67 = sphi 0, %s53
      %s71 = sphi 0, %s71
      %s73 = sphi 0, %s71
      %s74 = sphi 0, %s73
      %s88 = sphi 0, %s74
      %s94 = sphi 0, %s96
      %s97 = sphi 0, %s94
      %s98 = sphi 0, %s97
      %s114 = sphi 0, %s98
      %s118 = sphi 0, %s118
      %s120 = sphi 0, %s118
      %s121 = sphi 0, %s120
      %s135 = sphi 0, %s121
      %s141 = sphi 0, %s143
      %s144 = sphi 0, %s141
      %s145 = sphi 0, %s144
      %s161 = sphi 0, %s145
      %s167 = sphi 0, %s169
      %s170 = sphi 0, %s167
      %s171 = sphi 0, %s170
      %s187 = sphi 0, %s171
    $region4: #{forward.23} parent=1 // loop_header_branch
      %19 = sbr.rel (%p17) target = $region8
    $region5: #{forward.23} parent=1 // loop_body
      %s21 = ssub.s32 %s16, 1
      %s22 = ssub.s32 %s16, 2
      %s23 = sadd.s32 %s16, 1
      %s24 = ssub.s32 %s16, %s23
      %p25 = scmp.eq.s32.totalorder %s24, 0
      %s27 = sadd.s32 %s26, 1
      %s28 = scalar_select %p25, %s26, %s27
      %p31 = pneg %p25
      %p32 = scmp.eq.s32.totalorder %s16, 1
      %p33 = por %p31, %p32
      %p34 = scmp.ne.s32.totalorder %s26, %s29
      %p35 = scmp.eq.s32.totalorder %s16, 0
      %p36 = por %p34, %p35
      %p37 = scmp.ne.s32.totalorder %s26, %s29
      %p38 = scmp.eq.s32.totalorder %s21, 1
      %p39 = por %p37, %p38
      %p40 = scmp.ne.s32.totalorder %s29, %s30
      %p41 = scmp.eq.s32.totalorder %s21, 0
      %p42 = por %p40, %p41
      %p43 = scmp.ne.s32.totalorder %s29, %s30
      %p44 = scmp.eq.s32.totalorder %s22, 1
      %p45 = por %p43, %p44
      %p47 = scmp.ne.s32.totalorder %s30, %s46
      %p48 = scmp.eq.s32.totalorder %s22, 0
      %p49 = por %p47, %p48
      %s51 = sadd.s32 %s50, 1
      %p54 = scmp.eq.s32.totalorder %s16, 1
      %p55 = scmp.ne.s32.totalorder %s50, %s52
      %p56 = scmp.eq.s32.totalorder %s16, 0
      %p57 = por %p55, %p56
      %p58 = scmp.ne.s32.totalorder %s50, %s52
      %p59 = scmp.eq.s32.totalorder %s21, 1
      %p60 = por %p58, %p59
      %p61 = scmp.ne.s32.totalorder %s52, %s53
      %p62 = scmp.eq.s32.totalorder %s21, 0
      %p63 = por %p61, %p62
      %p64 = scmp.ne.s32.totalorder %s52, %s53
      %p65 = scmp.eq.s32.totalorder %s22, 1
      %p66 = por %p64, %p65
      %p68 = scmp.ne.s32.totalorder %s53, %s67
      %p69 = scmp.eq.s32.totalorder %s22, 0
      %p70 = por %p68, %p69
      %s72 = sadd.s32 %s71, 1
      %p75 = scmp.eq.s32.totalorder %s16, 1
      %p76 = scmp.ne.s32.totalorder %s71, %s73
      %p77 = scmp.eq.s32.totalorder %s16, 0
      %p78 = por %p76, %p77
      %p79 = scmp.ne.s32.totalorder %s71, %s73
      %p80 = scmp.eq.s32.totalorder %s21, 1
      %p81 = por %p79, %p80
      %p82 = scmp.ne.s32.totalorder %s73, %s74
      %p83 = scmp.eq.s32.totalorder %s21, 0
      %p84 = por %p82, %p83
      %p85 = scmp.ne.s32.totalorder %s73, %s74
      %p86 = scmp.eq.s32.totalorder %s22, 1
      %p87 = por %p85, %p86
      %p89 = scmp.ne.s32.totalorder %s74, %s88
      %p90 = scmp.eq.s32.totalorder %s22, 0
      %p91 = por %p89, %p90
      %s92 = ssub.s32 %s16, %s23
      %p93 = scmp.eq.s32.totalorder %s92, 0
      %s95 = sadd.s32 %s94, 1
      %s96 = scalar_select %p93, %s94, %s95
      %p99 = pneg %p93
      %p100 = scmp.eq.s32.totalorder %s16, 1
      %p101 = por %p99, %p100
      %p102 = scmp.ne.s32.totalorder %s94, %s97
      %p103 = scmp.eq.s32.totalorder %s16, 0
      %p104 = por %p102, %p103
      %p105 = scmp.ne.s32.totalorder %s94, %s97
      %p106 = scmp.eq.s32.totalorder %s21, 1
      %p107 = por %p105, %p106
      %p108 = scmp.ne.s32.totalorder %s97, %s98
      %p109 = scmp.eq.s32.totalorder %s21, 0
      %p110 = por %p108, %p109
      %p111 = scmp.ne.s32.totalorder %s97, %s98
      %p112 = scmp.eq.s32.totalorder %s22, 1
      %p113 = por %p111, %p112
      %p115 = scmp.ne.s32.totalorder %s98, %s114
      %p116 = scmp.eq.s32.totalorder %s22, 0
      %p117 = por %p115, %p116
      %s119 = sadd.s32 %s118, 1
      %p122 = scmp.eq.s32.totalorder %s16, 1
      %p123 = scmp.ne.s32.totalorder %s118, %s120
      %p124 = scmp.eq.s32.totalorder %s16, 0
      %p125 = por %p123, %p124
      %p126 = scmp.ne.s32.totalorder %s118, %s120
      %p127 = scmp.eq.s32.totalorder %s21, 1
      %p128 = por %p126, %p127
      %p129 = scmp.ne.s32.totalorder %s120, %s121
      %p130 = scmp.eq.s32.totalorder %s21, 0
      %p131 = por %p129, %p130
      %p132 = scmp.ne.s32.totalorder %s120, %s121
      %p133 = scmp.eq.s32.totalorder %s22, 1
      %p134 = por %p132, %p133
      %p136 = scmp.ne.s32.totalorder %s121, %s135
      %p137 = scmp.eq.s32.totalorder %s22, 0
      %p138 = por %p136, %p137
      %s139 = ssub.s32 %s16, %s23
      %p140 = scmp.eq.s32.totalorder %s139, 0
      %s142 = sadd.s32 %s141, 1
      %s143 = scalar_select %p140, %s141, %s142
      %p146 = pneg %p140
      %p147 = scmp.eq.s32.totalorder %s16, 1
      %p148 = por %p146, %p147
      %p149 = scmp.ne.s32.totalorder %s141, %s144
      %p150 = scmp.eq.s32.totalorder %s16, 0
      %p151 = por %p149, %p150
      %p152 = scmp.ne.s32.totalorder %s141, %s144
      %p153 = scmp.eq.s32.totalorder %s21, 1
      %p154 = por %p152, %p153
      %p155 = scmp.ne.s32.totalorder %s144, %s145
      %p156 = scmp.eq.s32.totalorder %s21, 0
      %p157 = por %p155, %p156
      %p158 = scmp.ne.s32.totalorder %s144, %s145
      %p159 = scmp.eq.s32.totalorder %s22, 1
      %p160 = por %p158, %p159
      %p162 = scmp.ne.s32.totalorder %s145, %s161
      %p163 = scmp.eq.s32.totalorder %s22, 0
      %p164 = por %p162, %p163
      %s165 = ssub.s32 %s16, %s23
      %p166 = scmp.eq.s32.totalorder %s165, 0
      %s168 = sadd.s32 %s167, 1
      %s169 = scalar_select %p166, %s167, %s168
      %p172 = pneg %p166
      %p173 = scmp.eq.s32.totalorder %s16, 1
      %p174 = por %p172, %p173
      %p175 = scmp.ne.s32.totalorder %s167, %s170
      %p176 = scmp.eq.s32.totalorder %s16, 0
      %p177 = por %p175, %p176
      %p178 = scmp.ne.s32.totalorder %s167, %s170
      %p179 = scmp.eq.s32.totalorder %s21, 1
      %p180 = por %p178, %p179
      %p181 = scmp.ne.s32.totalorder %s170, %s171
      %p182 = scmp.eq.s32.totalorder %s21, 0
      %p183 = por %p181, %p182
      %p184 = scmp.ne.s32.totalorder %s170, %s171
      %p185 = scmp.eq.s32.totalorder %s22, 1
      %p186 = por %p184, %p185
      %p188 = scmp.ne.s32.totalorder %s171, %s187
      %p189 = scmp.eq.s32.totalorder %s22, 0
      %p190 = por %p188, %p189
      %p191 = scmp.le.s32.totalorder 1, %s16
      %p192 = scmp.lt.s32.totalorder %s16, 3
      %p193 = pnand %p191, %p192
      %p194 = pneg %p193
      // Predicated region
      $region9: #{forward.23} parent=5 // pred_check
        _
      $region10: #{forward.23} parent=5 // pred_check_branch
        %196 = sbr.rel (%p193) target = $region12
      $region11: #{forward.23} parent=5 // pred_region
        %s197 = ssub.s32 %s16, 1
        // Predicated region
        $region13: #{forward.23} parent=11 // pred_check
          %p198 = pneg %p63
        $region14: #{forward.23} parent=11 // pred_check_branch
          %200 = sbr.rel (%p198) target = $region16
        $region15: #{forward.23} parent=11 // pred_region
          _
        $region16: #{forward.23} parent=11 // pred_fallthru
          _
        // Predicated region
        $region17: #{forward.23} parent=11 // pred_check
          %p201 = pneg %p84
        $region18: #{forward.23} parent=11 // pred_check_branch
          %203 = sbr.rel (%p201) target = $region20
        $region19: #{forward.23} parent=11 // pred_region
          _
        $region20: #{forward.23} parent=11 // pred_fallthru
          _
        // Predicated region
        $region21: #{forward.23} parent=11 // pred_check
          %p204 = pneg %p131
        $region22: #{forward.23} parent=11 // pred_check_branch
          %206 = sbr.rel (%p204) target = $region24
        $region23: #{forward.23} parent=11 // pred_region
          _
        $region24: #{forward.23} parent=11 // pred_fallthru
          _
      $region12: #{forward.23} parent=5 // pred_fallthru
        _
      %p207 = scmp.lt.s32.totalorder %s16, 2
      // Predicated region
      $region25: #{forward.23} parent=5 // pred_check
        %p208 = pneg %p207
      $region26: #{forward.23} parent=5 // pred_check_branch
        %210 = sbr.rel (%p208) target = $region28
      $region27: #{forward.23} parent=5 // pred_region
        // Predicated region
        $region29: #{forward.23} parent=27 // pred_check
          %p211 = pneg %p36
        $region30: #{forward.23} parent=27 // pred_check_branch
          %213 = sbr.rel (%p211) target = $region32
        $region31: #{forward.23} parent=27 // pred_region
          %s214 = smul.u32 2, %s16
          %p215 = scmp.lt.s32.totalorder %s214, 3
          %s216 = scalar_select %p215, %s214, 3
          %s217 = smul.addr %s216, 4
          %s218 = smul.addr %s217, 4
          %s219 = scalar_lea.vmem %s0, %s218
          %s220 = smul.u32 2, %s16
        $region32: #{forward.23} parent=27 // pred_fallthru
          _
        // Predicated region
        $region33: #{forward.23} parent=27 // pred_check
          %p221 = pneg %p104
        $region34: #{forward.23} parent=27 // pred_check_branch
          %223 = sbr.rel (%p221) target = $region36
        $region35: #{forward.23} parent=27 // pred_region
          %s224 = smul.u32 2, %s16
          %p225 = scmp.lt.s32.totalorder %s224, 3
          %s226 = scalar_select %p225, %s224, 3
          %s227 = smul.addr %s226, 8
          %s228 = scalar_lea.vmem %s3, %s227
          %s229 = smul.u32 2, %s16
        $region36: #{forward.23} parent=27 // pred_fallthru
          _
      $region28: #{forward.23} parent=5 // pred_fallthru
        _
      %p230 = scmp.le.s32.totalorder 1, %s16
      %p231 = scmp.lt.s32.totalorder %s16, 3
      %p232 = pnand %p230, %p231
      %p233 = pneg %p232
      // Predicated region
      $region37: #{forward.23} parent=5 // pred_check
        _
      $region38: #{forward.23} parent=5 // pred_check_branch
        %235 = sbr.rel (%p232) target = $region40
      $region39: #{forward.23} parent=5 // pred_region
        %s236 = ssub.s32 %s16, 1
        %s237 = smul.u32 2, %s21
        %p238 = scmp.lt.s32.totalorder %s237, 3
        %s239 = scalar_select %p238, %s237, 3
        %s240 = smul.addr %s239, 4
        %s241 = smul.addr %s240, 4
        %s242 = scalar_lea.vmem %s0, %s241
        %p243 = pneg %p42
        %p244 = pneg %p39
        %p245 = pneg %p63
        %p246 = pneg %p60
        %p247 = pneg %p84
        %p248 = pneg %p81
        %s249 = smul.u32 2, %s21
        %p250 = scmp.lt.s32.totalorder %s249, 3
        %s251 = scalar_select %p250, %s249, 3
        %s252 = smul.addr %s251, 8
        %s253 = scalar_lea.vmem %s3, %s252
        %p254 = pneg %p110
        %p255 = pneg %p107
        %p256 = pneg %p131
        %p257 = pneg %p128
        %p258 = pneg %p157
        %p259 = pneg %p154
        %s260 = smul.u32 2, %s21
        %p261 = scmp.lt.s32.totalorder %s260, 3
        %s262 = scalar_select %p261, %s260, 3
        %s263 = smul.addr %s262, 8
        %s264 = scalar_lea.vmem %s5, %s263
        %p265 = pneg %p183
        %p266 = pneg %p180
        %s267 = sand.u32 %s170, 1
        %s268 = scalar_lea.sflag [#allocation3], %s267
        %s269 = sand.u32 %s170, 1
        %s270 = smul.addr %s269, 16
        %s271 = scalar_lea.vmem [#allocation2], %s270
        %s272 = smul.u32 2, %s21
        %p273 = scmp.lt.s32.totalorder %s272, 3
        %s274 = scalar_select %p273, %s272, 3
        %s275 = smul.addr %s274, 4
        %s276 = smul.addr %s275, 4
        %s277 = scalar_lea.vmem %s0, %s276
        %s278 = smul.u32 2, %s21
        %s279 = smul.u32 2, %s21
        %p280 = scmp.lt.s32.totalorder %s279, 3
        %s281 = scalar_select %p280, %s279, 3
        %s282 = smul.addr %s281, 8
        %s283 = scalar_lea.vmem %s3, %s282
        %s284 = smul.u32 2, %s21
        %s285 = smul.u32 2, %s21
        %p286 = scmp.lt.s32.totalorder %s285, 3
        %s287 = scalar_select %p286, %s285, 3
        %s288 = smul.addr %s287, 8
        %s289 = scalar_lea.vmem %s5, %s288
        %s290 = smul.u32 2, %s21
        %s291 = smul.u32 2, %s21
        %v292 = vld [vmem:[%s277] sm:$0xff]
        %v293 = vld [vmem:[%s277 + $0x8] sm:$0xff]
        %v294 = vld [vmem:[%s277 + $0x10] sm:$0xff]
        %v295 = vld [vmem:[%s277 + $0x18] sm:$0xff]
        %v296 = vld [vmem:[%s1] sm:$0xf]
        %v297 = vld [vmem:[%s1 + $0x4] sm:$0xf]
        %v298 = vld [vmem:[%s1 + $0x8] sm:$0xf]
        %v299 = vld [vmem:[%s1 + $0xc] sm:$0xf]
        %v300 = vld [vmem:[%s1 + $0x10] sm:$0xf]
        %v301 = vld [vmem:[%s1 + $0x14] sm:$0xf]
        %v302 = vld [vmem:[%s1 + $0x18] sm:$0xf]
        %v303 = vld [vmem:[%s1 + $0x1c] sm:$0xf]
        %v304 = vld [vmem:[%s1 + $0x20] sm:$0xf]
        %v305 = vld [vmem:[%s1 + $0x24] sm:$0xf]
        %v306 = vld [vmem:[%s1 + $0x28] sm:$0xf]
        %v307 = vld [vmem:[%s1 + $0x2c] sm:$0xf]
        %v308 = vld [vmem:[%s1 + $0x30] sm:$0xf]
        %v309 = vld [vmem:[%s1 + $0x34] sm:$0xf]
        %v310 = vld [vmem:[%s1 + $0x38] sm:$0xf]
        %v311 = vld [vmem:[%s1 + $0x3c] sm:$0xf]
        %v312 = vld [vmem:[%s1 + $0x40] sm:$0xf]
        %v313 = vld [vmem:[%s1 + $0x44] sm:$0xf]
        %v314 = vld [vmem:[%s1 + $0x48] sm:$0xf]
        %v315 = vld [vmem:[%s1 + $0x4c] sm:$0xf]
        %v316 = vld [vmem:[%s1 + $0x50] sm:$0xf]
        %v317 = vld [vmem:[%s1 + $0x54] sm:$0xf]
        %v318 = vld [vmem:[%s1 + $0x58] sm:$0xf]
        %v319 = vld [vmem:[%s1 + $0x5c] sm:$0xf]
        %v320 = vld [vmem:[%s1 + $0x60] sm:$0xf]
        %v321 = vld [vmem:[%s1 + $0x64] sm:$0xf]
        %v322 = vld [vmem:[%s1 + $0x68] sm:$0xf]
        %v323 = vld [vmem:[%s1 + $0x6c] sm:$0xf]
        %v324 = vld [vmem:[%s1 + $0x70] sm:$0xf]
        %v325 = vld [vmem:[%s1 + $0x74] sm:$0xf]
        %v326 = vld [vmem:[%s1 + $0x78] sm:$0xf]
        %v327 = vld [vmem:[%s1 + $0x7c] sm:$0xf]
        %v328 = vld [vmem:[%s1 + $0x80] sm:$0xf]
        %v329 = vld [vmem:[%s1 + $0x84] sm:$0xf]
        %v330 = vld [vmem:[%s1 + $0x88] sm:$0xf]
        %v331 = vld [vmem:[%s1 + $0x8c] sm:$0xf]
        %v332 = vld [vmem:[%s1 + $0x90] sm:$0xf]
        %v333 = vld [vmem:[%s1 + $0x94] sm:$0xf]
        %v334 = vld [vmem:[%s1 + $0x98] sm:$0xf]
        %v335 = vld [vmem:[%s1 + $0x9c] sm:$0xf]
        %v336 = vld [vmem:[%s1 + $0xa0] sm:$0xf]
        %v337 = vld [vmem:[%s1 + $0xa4] sm:$0xf]
        %v338 = vld [vmem:[%s1 + $0xa8] sm:$0xf]
        %v339 = vld [vmem:[%s1 + $0xac] sm:$0xf]
        %v340 = vld [vmem:[%s1 + $0xb0] sm:$0xf]
        %v341 = vld [vmem:[%s1 + $0xb4] sm:$0xf]
        %v342 = vld [vmem:[%s1 + $0xb8] sm:$0xf]
        %v343 = vld [vmem:[%s1 + $0xbc] sm:$0xf]
        %v344 = vld [vmem:[%s1 + $0xc0] sm:$0xf]
        %v345 = vld [vmem:[%s1 + $0xc4] sm:$0xf]
        %v346 = vld [vmem:[%s1 + $0xc8] sm:$0xf]
        %v347 = vld [vmem:[%s1 + $0xcc] sm:$0xf]
        %v348 = vld [vmem:[%s1 + $0xd0] sm:$0xf]
        %v349 = vld [vmem:[%s1 + $0xd4] sm:$0xf]
        %v350 = vld [vmem:[%s1 + $0xd8] sm:$0xf]
        %v351 = vld [vmem:[%s1 + $0xdc] sm:$0xf]
        %v352 = vld [vmem:[%s1 + $0xe0] sm:$0xf]
        %v353 = vld [vmem:[%s1 + $0xe4] sm:$0xf]
        %v354 = vld [vmem:[%s1 + $0xe8] sm:$0xf]
        %v355 = vld [vmem:[%s1 + $0xec] sm:$0xf]
        %v356 = vld [vmem:[%s1 + $0xf0] sm:$0xf]
        %v357 = vld [vmem:[%s1 + $0xf4] sm:$0xf]
        %v358 = vld [vmem:[%s1 + $0xf8] sm:$0xf]
        %v359 = vld [vmem:[%s1 + $0xfc] sm:$0xf]
        %v360 = vld [vmem:[%s2] sm:$0x1]
        %v362 = vperm.slane %v360, 0
        %v368 = vunpack.c.l.b16 %v292
        %v369 = vunpack.c.h.b16 %v292
        %v370 = vunpack.c.l.b16 %v293
        %v371 = vunpack.c.h.b16 %v293
        %v372 = vunpack.c.l.b16 %v294
        %v373 = vunpack.c.h.b16 %v294
        %v374 = vunpack.c.l.b16 %v295
        %v375 = vunpack.c.h.b16 %v295
        %v376 = vpack.c.b16 %v372, %v368
        %v377 = vpack.c.b16 %v373, %v369
        %v378 = vpack.c.b16 %v374, %v370
        %v379 = vpack.c.b16 %v375, %v371
        %v448 = vunpack.c.l.b16 %v296
        %v449 = vunpack.c.l.b16 %v297
        %v450 = vunpack.c.l.b16 %v298
        %v451 = vunpack.c.l.b16 %v299
        %v452 = vunpack.c.l.b16 %v300
        %v453 = vunpack.c.l.b16 %v301
        %v454 = vunpack.c.l.b16 %v302
        %v455 = vunpack.c.l.b16 %v303
        %v456 = vunpack.c.l.b16 %v304
        %v457 = vunpack.c.l.b16 %v305
        %v458 = vunpack.c.l.b16 %v306
        %v459 = vunpack.c.l.b16 %v307
        %v460 = vunpack.c.l.b16 %v308
        %v461 = vunpack.c.l.b16 %v309
        %v462 = vunpack.c.l.b16 %v310
        %v463 = vunpack.c.l.b16 %v311
        %v464 = vunpack.c.l.b16 %v312
        %v465 = vunpack.c.l.b16 %v313
        %v466 = vunpack.c.l.b16 %v314
        %v467 = vunpack.c.l.b16 %v315
        %v468 = vunpack.c.l.b16 %v316
        %v469 = vunpack.c.l.b16 %v317
        %v470 = vunpack.c.l.b16 %v318
        %v471 = vunpack.c.l.b16 %v319
        %v472 = vunpack.c.l.b16 %v320
        %v473 = vunpack.c.l.b16 %v321
        %v474 = vunpack.c.l.b16 %v322
        %v475 = vunpack.c.l.b16 %v323
        %v476 = vunpack.c.l.b16 %v324
        %v477 = vunpack.c.l.b16 %v325
        %v478 = vunpack.c.l.b16 %v326
        %v479 = vunpack.c.l.b16 %v327
        %v480 = vunpack.c.l.b16 %v328
        %v481 = vunpack.c.l.b16 %v329
        %v482 = vunpack.c.l.b16 %v330
        %v483 = vunpack.c.l.b16 %v331
        %v484 = vunpack.c.l.b16 %v332
        %v485 = vunpack.c.l.b16 %v333
        %v486 = vunpack.c.l.b16 %v334
        %v487 = vunpack.c.l.b16 %v335
        %v488 = vunpack.c.l.b16 %v336
        %v489 = vunpack.c.l.b16 %v337
        %v490 = vunpack.c.l.b16 %v338
        %v491 = vunpack.c.l.b16 %v339
        %v492 = vunpack.c.l.b16 %v340
        %v493 = vunpack.c.l.b16 %v341
        %v494 = vunpack.c.l.b16 %v342
        %v495 = vunpack.c.l.b16 %v343
        %v496 = vunpack.c.l.b16 %v344
        %v497 = vunpack.c.l.b16 %v345
        %v498 = vunpack.c.l.b16 %v346
        %v499 = vunpack.c.l.b16 %v347
        %v500 = vunpack.c.l.b16 %v348
        %v501 = vunpack.c.l.b16 %v349
        %v502 = vunpack.c.l.b16 %v350
        %v503 = vunpack.c.l.b16 %v351
        %v504 = vunpack.c.l.b16 %v352
        %v505 = vunpack.c.l.b16 %v353
        %v506 = vunpack.c.l.b16 %v354
        %v507 = vunpack.c.l.b16 %v355
        %v508 = vunpack.c.l.b16 %v356
        %v509 = vunpack.c.l.b16 %v357
        %v510 = vunpack.c.l.b16 %v358
        %v511 = vunpack.c.l.b16 %v359
        %v512 = vpack.c.b16 %v449, %v448
        %v513 = vpack.c.b16 %v451, %v450
        %v514 = vpack.c.b16 %v453, %v452
        %v515 = vpack.c.b16 %v455, %v454
        %v516 = vpack.c.b16 %v457, %v456
        %v517 = vpack.c.b16 %v459, %v458
        %v518 = vpack.c.b16 %v461, %v460
        %v519 = vpack.c.b16 %v463, %v462
        %v520 = vpack.c.b16 %v465, %v464
        %v521 = vpack.c.b16 %v467, %v466
        %v522 = vpack.c.b16 %v469, %v468
        %v523 = vpack.c.b16 %v471, %v470
        %v524 = vpack.c.b16 %v473, %v472
        %v525 = vpack.c.b16 %v475, %v474
        %v526 = vpack.c.b16 %v477, %v476
        %v527 = vpack.c.b16 %v479, %v478
        %v528 = vpack.c.b16 %v481, %v480
        %v529 = vpack.c.b16 %v483, %v482
        %v530 = vpack.c.b16 %v485, %v484
        %v531 = vpack.c.b16 %v487, %v486
        %v532 = vpack.c.b16 %v489, %v488
        %v533 = vpack.c.b16 %v491, %v490
        %v534 = vpack.c.b16 %v493, %v492
        %v535 = vpack.c.b16 %v495, %v494
        %v536 = vpack.c.b16 %v497, %v496
        %v537 = vpack.c.b16 %v499, %v498
        %v538 = vpack.c.b16 %v501, %v500
        %v539 = vpack.c.b16 %v503, %v502
        %v540 = vpack.c.b16 %v505, %v504
        %v541 = vpack.c.b16 %v507, %v506
        %v542 = vpack.c.b16 %v509, %v508
        %v543 = vpack.c.b16 %v511, %v510
        %576 = vmatpush.bf16.msra.mxu0 %v519
        %577 = vmatpush.bf16.msra.mxu0 %v518
        %578 = vmatpush.bf16.msra.mxu0 %v517
        %579 = vmatpush.bf16.msra.mxu0 %v516
        %580 = vmatpush.bf16.msra.mxu0 %v515
        %581 = vmatpush.bf16.msra.mxu0 %v514
        %582 = vmatpush.bf16.msra.mxu0 %v513
        %583 = vmatpush.bf16.msra.mxu0 %v512
        %584 = vmatmul.bf16.gmra.mxu0 %v376
        %v585 = vpop.f32.mrf.mxu0
        %v586 = vadd.f32 %v362, %v585
        %v587 = vpop.f32.mrf.mxu0
        %v588 = vadd.f32 %v362, %v587
        %589 = vdwg.mxu0
        %590 = vmatpush.bf16.msra.mxu0 %v527
        %591 = vmatpush.bf16.msra.mxu0 %v526
        %592 = vmatpush.bf16.msra.mxu0 %v525
        %593 = vmatpush.bf16.msra.mxu0 %v524
        %594 = vmatpush.bf16.msra.mxu0 %v523
        %595 = vmatpush.bf16.msra.mxu0 %v522
        %596 = vmatpush.bf16.msra.mxu0 %v521
        %597 = vmatpush.bf16.msra.mxu0 %v520
        %598 = vmatmul.bf16.gmra.mxu0 %v377
        %v599 = vpop.f32.mrf.mxu0
        %v600 = vadd.f32 %v586, %v599
        %v601 = vpop.f32.mrf.mxu0
        %v602 = vadd.f32 %v588, %v601
        %603 = vdwg.mxu0
        %604 = vmatpush.bf16.msra.mxu0 %v535
        %605 = vmatpush.bf16.msra.mxu0 %v534
        %606 = vmatpush.bf16.msra.mxu0 %v533
        %607 = vmatpush.bf16.msra.mxu0 %v532
        %608 = vmatpush.bf16.msra.mxu0 %v531
        %609 = vmatpush.bf16.msra.mxu0 %v530
        %610 = vmatpush.bf16.msra.mxu0 %v529
        %611 = vmatpush.bf16.msra.mxu0 %v528
        %612 = vmatmul.bf16.gmra.mxu0 %v378
        %v613 = vpop.f32.mrf.mxu0
        %v614 = vadd.f32 %v600, %v613
        %v615 = vpop.f32.mrf.mxu0
        %v616 = vadd.f32 %v602, %v615
        %617 = vdwg.mxu0
        %618 = vmatpush.bf16.msra.mxu0 %v543
        %619 = vmatpush.bf16.msra.mxu0 %v542
        %620 = vmatpush.bf16.msra.mxu0 %v541
        %621 = vmatpush.bf16.msra.mxu0 %v540
        %622 = vmatpush.bf16.msra.mxu0 %v539
        %623 = vmatpush.bf16.msra.mxu0 %v538
        %624 = vmatpush.bf16.msra.mxu0 %v537
        %625 = vmatpush.bf16.msra.mxu0 %v536
        %626 = vmatmul.bf16.gmra.mxu0 %v379
        %v627 = vpop.f32.mrf.mxu0
        %v628 = vadd.f32 %v614, %v627
        %v629 = vpop.f32.mrf.mxu0
        %v630 = vadd.f32 %v616, %v629
        %631 = vdwg.mxu0
        %v632 = vmul.f32 %v628, 1.442695
        %v633 = vpow.pop %v632
        %v634 = vmul.f32 %v630, 1.442695
        %v635 = vpow.pop %v634
        %v636 = vld [vmem:[%s4] sm:$0x1]
        %v638 = vperm.slane %v636, 0
        %v640 = vadd.f32 %v633, %v638
        %v641 = vadd.f32 %v635, %v638
        %v642 = vmax.f32 %v640, 0.11
        %v643 = vmax.f32 %v641, 0.11
        %v644 = vrcp.pop %v642
        %v645 = vrcp.pop %v643
        %v646 = vld [vmem:[%s283] sm:$0xff]
        %v647 = vld [vmem:[%s283 + $0x8] sm:$0xff]
        %v648 = vround.ne.pseudo %v646
        %v649 = vround.ne.pseudo %v647
        %v650 = vand.u32 2147483647, %v648
        %v651 = vand.u32 2147483647, %v649
        %v652 = vsub.f32 0.5, %v650
        %v653 = vsub.f32 0.5, %v651
        %v654 = vmul.f32 %v652, %v644
        %v655 = vmul.f32 %v653, %v645
        %v656 = vsub.f32 0.0, %v654
        %v657 = vsub.f32 0.0, %v655
        %v658 = vmul.f32 %v656, 0.70710677
        %v659 = vmul.f32 %v657, 0.70710677
        %v660 = vand.u32 2147483647, %v658
        %v661 = vand.u32 2147483647, %v659
        %v662 = vmul.f32 %v660, 0.3275911
        %v663 = vmul.f32 %v661, 0.3275911
        %v664 = vadd.f32 %v662, 1.0
        %v665 = vadd.f32 %v663, 1.0
        %v666 = vrcp.pop %v664
        %v667 = vrcp.pop %v665
        %v668 = vmul.f32 %v666, 1.0614054
        %v669 = vmul.f32 %v667, 1.0614054
        %v670 = vadd.f32 %v668, -1.4531521
        %v671 = vadd.f32 %v669, -1.4531521
        %v672 = vmul.f32 %v666, %v670
        %v673 = vmul.f32 %v667, %v671
        %v674 = vadd.f32 %v672, 1.4214138
        %v675 = vadd.f32 %v673, 1.4214138
        %v676 = vmul.f32 %v666, %v674
        %v677 = vmul.f32 %v667, %v675
        %v678 = vadd.f32 %v676, -0.28449672
        %v679 = vadd.f32 %v677, -0.28449672
        %v680 = vmul.f32 %v666, %v678
        %v681 = vmul.f32 %v667, %v679
        %v682 = vadd.f32 %v680, 0.2548296
        %v683 = vadd.f32 %v681, 0.2548296
        %v684 = vmul.f32 %v666, %v682
        %v685 = vmul.f32 %v667, %v683
        %v686 = vsub.f32 0.0, %v660
        %v687 = vsub.f32 0.0, %v661
        %v688 = vmul.f32 %v686, %v660
        %v689 = vmul.f32 %v687, %v661
        %v690 = vmul.f32 %v688, 1.442695
        %v691 = vpow.pop %v690
        %v692 = vmul.f32 %v689, 1.442695
        %v693 = vpow.pop %v692
        %v694 = vmul.f32 %v684, %v691
        %v695 = vmul.f32 %v685, %v693
        %vm696 = vcmp.ge.f32.partialorder %v658, 0.0
        %vm697 = vcmp.ge.f32.partialorder %v659, 0.0
        %v698 = vsub.f32 2.0, %v694
        %v699 = vsub.f32 2.0, %v695
        %v700 = vsel %vm696, %v694, %v698
        %v701 = vsel %vm697, %v695, %v699
        %v702 = vmul.f32 %v700, 0.5
        %v703 = vmul.f32 %v701, 0.5
        %v704 = vsub.f32 -0.5, %v650
        %v705 = vsub.f32 -0.5, %v651
        %v706 = vmul.f32 %v704, %v644
        %v707 = vmul.f32 %v705, %v645
        %v708 = vsub.f32 0.0, %v706
        %v709 = vsub.f32 0.0, %v707
        %v710 = vmul.f32 %v708, 0.70710677
        %v711 = vmul.f32 %v709, 0.70710677
        %v712 = vmul.f32 %v710, 0.3275911
        %v713 = vmul.f32 %v711, 0.3275911
        %v714 = vadd.f32 %v712, 1.0
        %v715 = vadd.f32 %v713, 1.0
        %v716 = vrcp.pop %v714
        %v717 = vrcp.pop %v715
        %v718 = vmul.f32 %v716, 1.0614054
        %v719 = vmul.f32 %v717, 1.0614054
        %v720 = vadd.f32 %v718, -1.4531521
        %v721 = vadd.f32 %v719, -1.4531521
        %v722 = vmul.f32 %v716, %v720
        %v723 = vmul.f32 %v717, %v721
        %v724 = vadd.f32 %v722, 1.4214138
        %v725 = vadd.f32 %v723, 1.4214138
        %v726 = vmul.f32 %v716, %v724
        %v727 = vmul.f32 %v717, %v725
        %v728 = vadd.f32 %v726, -0.28449672
        %v729 = vadd.f32 %v727, -0.28449672
        %v730 = vmul.f32 %v716, %v728
        %v731 = vmul.f32 %v717, %v729
        %v732 = vadd.f32 %v730, 0.2548296
        %v733 = vadd.f32 %v731, 0.2548296
        %v734 = vmul.f32 %v716, %v732
        %v735 = vmul.f32 %v717, %v733
        %v736 = vsub.f32 0.0, %v710
        %v737 = vsub.f32 0.0, %v711
        %v738 = vmul.f32 %v736, %v710
        %v739 = vmul.f32 %v737, %v711
        %v740 = vmul.f32 %v738, 1.442695
        %v741 = vpow.pop %v740
        %v742 = vmul.f32 %v739, 1.442695
        %v743 = vpow.pop %v742
        %v744 = vmul.f32 %v734, %v741
        %v745 = vmul.f32 %v735, %v743
        %v746 = vmul.f32 %v744, 0.5
        %v747 = vmul.f32 %v745, 0.5
        %v748 = vsub.f32 %v702, %v746
        %v749 = vsub.f32 %v703, %v747
        %v750 = vmax.f32 %v748, 1e-09
        %v751 = vmax.f32 %v749, 1e-09
        %v752 = vmin.f32 %v750, 1.0
        %v753 = vmin.f32 %v751, 1.0
        %vm754 = vcmask 130048
        %755 = vst.msk [vmem:[%s289] sm:$0xff] %vm754, %v648
        %756 = vst.msk [vmem:[%s289 + $0x8] sm:$0xff] %vm754, %v649
        %757 = vst.msk [vmem:[%s271] sm:$0xff] %vm754, %v752
        %758 = vst.msk [vmem:[%s271 + $0x8] sm:$0xff] %vm754, %v753
        %s759 = smul.u32 2, %s21
        %p760 = scmp.lt.s32.totalorder %s759, 3
        %s761 = scalar_select %p760, %s759, 3
        %s762 = smul.addr %s761, 8
        %s763 = scalar_lea.vmem %s5, %s762
        %s764 = sand.u32 %s170, 1
        %s765 = scalar_lea.sflag [#allocation3], %s764
        %s766 = sand.u32 %s170, 1
        %s767 = smul.addr %s766, 16
        %s768 = scalar_lea.vmem [#allocation2], %s767
        // Predicated region
        $region41: #{forward.23} parent=39 // pred_check
          %p769 = pneg %p154
        $region42: #{forward.23} parent=39 // pred_check_branch
          %771 = sbr.rel (%p769) target = $region44
        $region43: #{forward.23} parent=39 // pred_region
          %s772 = smul.u32 2, %s21
        $region44: #{forward.23} parent=39 // pred_fallthru
          _
        // Predicated region
        $region45: #{forward.23} parent=39 // pred_check
          %p773 = pneg %p180
        $region46: #{forward.23} parent=39 // pred_check_branch
          %775 = sbr.rel (%p773) target = $region48
        $region47: #{forward.23} parent=39 // pred_region
          %s776 = smul.u32 2, %s21
          %778 = vsyncadd %s765, 0
          %s779 = smul.addr %s776, 8
          %s780 = scalar_lea.hbm %s6, %s779
          %s781 = sshll.u32 %s768, 4
          %s782 = int_to_ptr.vmem [resolvable:$true] %s781
          %s783 = sshll.u32 %s780, 4
          %s784 = int_to_ptr.hbm [resolvable:$true] %s783
          %789 = dma.vmem_to_hbm [thread:$0]  %s782, 256, %s784, %s765, 128, 128, 8
        $region48: #{forward.23} parent=39 // pred_fallthru
          _
      $region40: #{forward.23} parent=5 // pred_fallthru
        _
      %p790 = scmp.le.s32.totalorder 2, %s16
      // Predicated region
      $region49: #{forward.23} parent=5 // pred_check
        %p791 = pneg %p790
      $region50: #{forward.23} parent=5 // pred_check_branch
        %793 = sbr.rel (%p791) target = $region52
      $region51: #{forward.23} parent=5 // pred_region
        %s794 = ssub.s32 %s16, 2
        // Predicated region
        $region53: #{forward.23} parent=51 // pred_check
          %p795 = pneg %p160
        $region54: #{forward.23} parent=51 // pred_check_branch
          %797 = sbr.rel (%p795) target = $region56
        $region55: #{forward.23} parent=51 // pred_region
          %s798 = smul.u32 2, %s22
          %p799 = scmp.lt.s32.totalorder %s798, 3
          %s800 = scalar_select %p799, %s798, 3
          %s801 = smul.addr %s800, 8
          %s802 = scalar_lea.vmem %s5, %s801
        $region56: #{forward.23} parent=51 // pred_fallthru
          _
        // Predicated region
        $region57: #{forward.23} parent=51 // pred_check
          %p803 = pneg %p186
        $region58: #{forward.23} parent=51 // pred_check_branch
          %805 = sbr.rel (%p803) target = $region60
        $region59: #{forward.23} parent=51 // pred_region
          %s806 = sand.u32 %s171, 1
          %s807 = scalar_lea.sflag [#allocation3], %s806
          %s808 = sand.u32 %s171, 1
          %s809 = smul.addr %s808, 16
          %s810 = scalar_lea.vmem [#allocation2], %s809
          %812 = dma.done %s807, 256
        $region60: #{forward.23} parent=51 // pred_fallthru
          _
      $region52: #{forward.23} parent=5 // pred_fallthru
        _
    $region6: #{forward.23} parent=1 // loop_footer
      %s20 = sadd.s32 1, %s16
    $region7: #{forward.23} parent=1 // loop_footer_branch
      %15 = sbr.rel target = $region3
    $region8: #{forward.23} parent=1 // loop_exit
      _
    %813 = vsyncpa [#allocation3], 1
    %s814 = scalar_lea.sflag [#allocation3], 1
    %815 = vsyncpa %s814, 1

// kernel: forward.27
$region0: #{forward.27}
  #allocation0 [shape = 'u32[]', space=smem, size = 0x4, offset = 0x4, fixed_abs, tag = 'smem constant byte address 0x4 - core index']
  #allocation1 [shape = 'u32[72,128]{1,0:T(1,128)}', space=vmem, size = 0x9000, scoped, tag = 'internal scratch']
  %s0 = inlined_call_operand.vmem [shape: bf16[32,128], index: 0, kind: input, shape index: {}]
  %s1 = inlined_call_operand.vmem [shape: bf16[128,16], index: 1, kind: input, shape index: {}]
  %s2 = inlined_call_operand.vmem [shape: f32[1,16], index: 2, kind: input, shape index: {}]
  %s3 = inlined_call_operand.vmem [shape: bf16[32,16], index: 3, kind: output, shape index: {}]
  %s4 = sld [smem:[#allocation0]]
  $region45: #{forward.27} parent=0
    _
  %s6 = ssub.s32 1, %s4
  %s7 = scalar_select 0, %s6, %s4
  loop: start=0, step=1, limit=4
  $region2: #{forward.27} parent=0 // loop_pre_header
    _
  $region3: #{forward.27} parent=0 // loop_header
    %s9 = sphi 0, %s13
    %p10 = scmp.ge.s32.totalorder %s9, 4
    %s19 = sphi 0, %s21
    %s22 = sphi 0, %s19
    %s23 = sphi 0, %s22
    %s39 = sphi 0, %s23
    %s43 = sphi 0, %s43
    %s45 = sphi 0, %s43
    %s46 = sphi 0, %s45
    %s60 = sphi 0, %s46
    %s64 = sphi 0, %s64
    %s66 = sphi 0, %s64
    %s67 = sphi 0, %s66
    %s81 = sphi 0, %s67
    %s87 = sphi 0, %s89
    %s90 = sphi 0, %s87
    %s91 = sphi 0, %s90
    %s107 = sphi 0, %s91
  $region4: #{forward.27} parent=0 // loop_header_branch
    %12 = sbr.rel (%p10) target = $region8
  $region5: #{forward.27} parent=0 // loop_body
    %s14 = ssub.s32 %s9, 1
    %s15 = ssub.s32 %s9, 2
    %s16 = sadd.s32 %s9, 1
    %s17 = ssub.s32 %s9, %s16
    %p18 = scmp.eq.s32.totalorder %s17, 0
    %s20 = sadd.s32 %s19, 1
    %s21 = scalar_select %p18, %s19, %s20
    %p24 = pneg %p18
    %p25 = scmp.eq.s32.totalorder %s9, 1
    %p26 = por %p24, %p25
    %p27 = scmp.ne.s32.totalorder %s19, %s22
    %p28 = scmp.eq.s32.totalorder %s9, 0
    %p29 = por %p27, %p28
    %p30 = scmp.ne.s32.totalorder %s19, %s22
    %p31 = scmp.eq.s32.totalorder %s14, 1
    %p32 = por %p30, %p31
    %p33 = scmp.ne.s32.totalorder %s22, %s23
    %p34 = scmp.eq.s32.totalorder %s14, 0
    %p35 = por %p33, %p34
    %p36 = scmp.ne.s32.totalorder %s22, %s23
    %p37 = scmp.eq.s32.totalorder %s15, 1
    %p38 = por %p36, %p37
    %p40 = scmp.ne.s32.totalorder %s23, %s39
    %p41 = scmp.eq.s32.totalorder %s15, 0
    %p42 = por %p40, %p41
    %s44 = sadd.s32 %s43, 1
    %p47 = scmp.eq.s32.totalorder %s9, 1
    %p48 = scmp.ne.s32.totalorder %s43, %s45
    %p49 = scmp.eq.s32.totalorder %s9, 0
    %p50 = por %p48, %p49
    %p51 = scmp.ne.s32.totalorder %s43, %s45
    %p52 = scmp.eq.s32.totalorder %s14, 1
    %p53 = por %p51, %p52
    %p54 = scmp.ne.s32.totalorder %s45, %s46
    %p55 = scmp.eq.s32.totalorder %s14, 0
    %p56 = por %p54, %p55
    %p57 = scmp.ne.s32.totalorder %s45, %s46
    %p58 = scmp.eq.s32.totalorder %s15, 1
    %p59 = por %p57, %p58
    %p61 = scmp.ne.s32.totalorder %s46, %s60
    %p62 = scmp.eq.s32.totalorder %s15, 0
    %p63 = por %p61, %p62
    %s65 = sadd.s32 %s64, 1
    %p68 = scmp.eq.s32.totalorder %s9, 1
    %p69 = scmp.ne.s32.totalorder %s64, %s66
    %p70 = scmp.eq.s32.totalorder %s9, 0
    %p71 = por %p69, %p70
    %p72 = scmp.ne.s32.totalorder %s64, %s66
    %p73 = scmp.eq.s32.totalorder %s14, 1
    %p74 = por %p72, %p73
    %p75 = scmp.ne.s32.totalorder %s66, %s67
    %p76 = scmp.eq.s32.totalorder %s14, 0
    %p77 = por %p75, %p76
    %p78 = scmp.ne.s32.totalorder %s66, %s67
    %p79 = scmp.eq.s32.totalorder %s15, 1
    %p80 = por %p78, %p79
    %p82 = scmp.ne.s32.totalorder %s67, %s81
    %p83 = scmp.eq.s32.totalorder %s15, 0
    %p84 = por %p82, %p83
    %s85 = ssub.s32 %s9, %s16
    %p86 = scmp.eq.s32.totalorder %s85, 0
    %s88 = sadd.s32 %s87, 1
    %s89 = scalar_select %p86, %s87, %s88
    %p92 = pneg %p86
    %p93 = scmp.eq.s32.totalorder %s9, 1
    %p94 = por %p92, %p93
    %p95 = scmp.ne.s32.totalorder %s87, %s90
    %p96 = scmp.eq.s32.totalorder %s9, 0
    %p97 = por %p95, %p96
    %p98 = scmp.ne.s32.totalorder %s87, %s90
    %p99 = scmp.eq.s32.totalorder %s14, 1
    %p100 = por %p98, %p99
    %p101 = scmp.ne.s32.totalorder %s90, %s91
    %p102 = scmp.eq.s32.totalorder %s14, 0
    %p103 = por %p101, %p102
    %p104 = scmp.ne.s32.totalorder %s90, %s91
    %p105 = scmp.eq.s32.totalorder %s15, 1
    %p106 = por %p104, %p105
    %p108 = scmp.ne.s32.totalorder %s91, %s107
    %p109 = scmp.eq.s32.totalorder %s15, 0
    %p110 = por %p108, %p109
    %p111 = scmp.le.s32.totalorder 1, %s9
    %p112 = scmp.lt.s32.totalorder %s9, 3
    %p113 = pnand %p111, %p112
    %p114 = pneg %p113
    // Predicated region
    $region9: #{forward.27} parent=5 // pred_check
      _
    $region10: #{forward.27} parent=5 // pred_check_branch
      %116 = sbr.rel (%p113) target = $region12
    $region11: #{forward.27} parent=5 // pred_region
      %s117 = ssub.s32 %s9, 1
      // Predicated region
      $region13: #{forward.27} parent=11 // pred_check
        %p118 = pneg %p56
      $region14: #{forward.27} parent=11 // pred_check_branch
        %120 = sbr.rel (%p118) target = $region16
      $region15: #{forward.27} parent=11 // pred_region
        _
      $region16: #{forward.27} parent=11 // pred_fallthru
        _
      // Predicated region
      $region17: #{forward.27} parent=11 // pred_check
        %p121 = pneg %p77
      $region18: #{forward.27} parent=11 // pred_check_branch
        %123 = sbr.rel (%p121) target = $region20
      $region19: #{forward.27} parent=11 // pred_region
        _
      $region20: #{forward.27} parent=11 // pred_fallthru
        _
    $region12: #{forward.27} parent=5 // pred_fallthru
      _
    %p124 = scmp.lt.s32.totalorder %s9, 2
    // Predicated region
    $region21: #{forward.27} parent=5 // pred_check
      %p125 = pneg %p124
    $region22: #{forward.27} parent=5 // pred_check_branch
      %127 = sbr.rel (%p125) target = $region24
    $region23: #{forward.27} parent=5 // pred_region
      // Predicated region
      $region25: #{forward.27} parent=23 // pred_check
        %p128 = pneg %p29
      $region26: #{forward.27} parent=23 // pred_check_branch
        %130 = sbr.rel (%p128) target = $region28
      $region27: #{forward.27} parent=23 // pred_region
        %s131 = smul.u32 2, %s9
        %p132 = scmp.lt.s32.totalorder %s131, 3
        %s133 = scalar_select %p132, %s131, 3
        %s134 = smul.addr %s133, 4
        %s135 = scalar_lea.vmem %s0, %s134
        %s136 = smul.u32 2, %s9
      $region28: #{forward.27} parent=23 // pred_fallthru
        _
    $region24: #{forward.27} parent=5 // pred_fallthru
      _
    %p137 = scmp.le.s32.totalorder 1, %s9
    %p138 = scmp.lt.s32.totalorder %s9, 3
    %p139 = pnand %p137, %p138
    %p140 = pneg %p139
    // Predicated region
    $region29: #{forward.27} parent=5 // pred_check
      _
    $region30: #{forward.27} parent=5 // pred_check_branch
      %142 = sbr.rel (%p139) target = $region32
    $region31: #{forward.27} parent=5 // pred_region
      %s143 = ssub.s32 %s9, 1
      %s144 = smul.u32 2, %s14
      %p145 = scmp.lt.s32.totalorder %s144, 3
      %s146 = scalar_select %p145, %s144, 3
      %s147 = smul.addr %s146, 4
      %s148 = scalar_lea.vmem %s0, %s147
      %p149 = pneg %p35
      %p150 = pneg %p32
      %p151 = pneg %p56
      %p152 = pneg %p53
      %p153 = pneg %p77
      %p154 = pneg %p74
      %p155 = pneg %p103
      %p156 = pneg %p100
      %s157 = smul.u32 2, %s14
      %p158 = scmp.lt.s32.totalorder %s157, 3
      %s159 = scalar_select %p158, %s157, 3
      %s160 = smul.addr %s159, 4
      %s161 = scalar_lea.vmem %s3, %s160
      %s162 = smul.u32 2, %s14
      %p163 = scmp.lt.s32.totalorder %s162, 3
      %s164 = scalar_select %p163, %s162, 3
      %s165 = smul.addr %s164, 4
      %s166 = scalar_lea.vmem %s0, %s165
      %s167 = smul.u32 2, %s14
      %s168 = smul.u32 2, %s14
      %p169 = scmp.lt.s32.totalorder %s168, 3
      %s170 = scalar_select %p169, %s168, 3
      %s171 = smul.addr %s170, 4
      %s172 = scalar_lea.vmem %s3, %s171
      %s173 = smul.u32 2, %s14
      %v174 = vld [vmem:[%s166] sm:$0xf]
      %v175 = vld [vmem:[%s166 + $0x4] sm:$0xf]
      %v176 = vld [vmem:[%s1] sm:$0xf]
      %v177 = vld [vmem:[%s1 + $0x4] sm:$0xf]
      %v178 = vld [vmem:[%s1 + $0x8] sm:$0xf]
      %v179 = vld [vmem:[%s1 + $0xc] sm:$0xf]
      %v180 = vld [vmem:[%s1 + $0x10] sm:$0xf]
      %v181 = vld [vmem:[%s1 + $0x14] sm:$0xf]
      %v182 = vld [vmem:[%s1 + $0x18] sm:$0xf]
      %v183 = vld [vmem:[%s1 + $0x1c] sm:$0xf]
      %v184 = vld [vmem:[%s1 + $0x20] sm:$0xf]
      %v185 = vld [vmem:[%s1 + $0x24] sm:$0xf]
      %v186 = vld [vmem:[%s1 + $0x28] sm:$0xf]
      %v187 = vld [vmem:[%s1 + $0x2c] sm:$0xf]
      %v188 = vld [vmem:[%s1 + $0x30] sm:$0xf]
      %v189 = vld [vmem:[%s1 + $0x34] sm:$0xf]
      %v190 = vld [vmem:[%s1 + $0x38] sm:$0xf]
      %v191 = vld [vmem:[%s1 + $0x3c] sm:$0xf]
      %v192 = vld [vmem:[%s2] sm:$0x1]
      %v194 = vperm.slane %v192, 0
      %v198 = vunpack.c.l.b16 %v174
      %v199 = vunpack.c.l.b16 %v175
      %v200 = vpack.c.b16 %v199, %v198
      %v218 = vunpack.c.l.b16 %v176
      %v219 = vunpack.c.l.b16 %v177
      %v220 = vunpack.c.l.b16 %v178
      %v221 = vunpack.c.l.b16 %v179
      %v222 = vunpack.c.l.b16 %v180
      %v223 = vunpack.c.l.b16 %v181
      %v224 = vunpack.c.l.b16 %v182
      %v225 = vunpack.c.l.b16 %v183
      %v226 = vunpack.c.l.b16 %v184
      %v227 = vunpack.c.l.b16 %v185
      %v228 = vunpack.c.l.b16 %v186
      %v229 = vunpack.c.l.b16 %v187
      %v230 = vunpack.c.l.b16 %v188
      %v231 = vunpack.c.l.b16 %v189
      %v232 = vunpack.c.l.b16 %v190
      %v233 = vunpack.c.l.b16 %v191
      %v234 = vpack.c.b16 %v219, %v218
      %v235 = vpack.c.b16 %v221, %v220
      %v236 = vpack.c.b16 %v223, %v222
      %v237 = vpack.c.b16 %v225, %v224
      %v238 = vpack.c.b16 %v227, %v226
      %v239 = vpack.c.b16 %v229, %v228
      %v240 = vpack.c.b16 %v231, %v230
      %v241 = vpack.c.b16 %v233, %v232
      %250 = vmatpush.bf16.msra.mxu0 %v241
      %251 = vmatpush.bf16.msra.mxu0 %v240
      %252 = vmatpush.bf16.msra.mxu0 %v239
      %253 = vmatpush.bf16.msra.mxu0 %v238
      %254 = vmatpush.bf16.msra.mxu0 %v237
      %255 = vmatpush.bf16.msra.mxu0 %v236
      %256 = vmatpush.bf16.msra.mxu0 %v235
      %257 = vmatpush.bf16.msra.mxu0 %v234
      %258 = vmatmul.bf16.gmra.mxu0 %v200
      %v259 = vpop.f32.mrf.mxu0
      %v260 = vadd.f32 %v194, %v259
      %v261 = vpop.f32.mrf.mxu0
      %v262 = vadd.f32 %v194, %v261
      %263 = vdwg.mxu0
      %v264 = vmax.f32 %v260, 0.0
      %v265 = vmax.f32 %v262, 0.0
      %v266 = vpack.c.bf16 %v264, %v264
      %v267 = vpack.c.bf16 %v265, %v265
      %vm268 = vcmask 125952
      %269 = vst.msk [vmem:[%s172] sm:$0xf] %vm268, %v266
      %270 = vst.msk [vmem:[%s172 + $0x4] sm:$0xf] %vm268, %v267
      %s271 = smul.u32 2, %s14
      %p272 = scmp.lt.s32.totalorder %s271, 3
      %s273 = scalar_select %p272, %s271, 3
      %s274 = smul.addr %s273, 4
      %s275 = scalar_lea.vmem %s3, %s274
      // Predicated region
      $region33: #{forward.27} parent=31 // pred_check
        %p276 = pneg %p100
      $region34: #{forward.27} parent=31 // pred_check_branch
        %278 = sbr.rel (%p276) target = $region36
      $region35: #{forward.27} parent=31 // pred_region
        %s279 = smul.u32 2, %s14
      $region36: #{forward.27} parent=31 // pred_fallthru
        _
    $region32: #{forward.27} parent=5 // pred_fallthru
      _
    %p280 = scmp.le.s32.totalorder 2, %s9
    // Predicated region
    $region37: #{forward.27} parent=5 // pred_check
      %p281 = pneg %p280
    $region38: #{forward.27} parent=5 // pred_check_branch
      %283 = sbr.rel (%p281) target = $region40
    $region39: #{forward.27} parent=5 // pred_region
      %s284 = ssub.s32 %s9, 2
      // Predicated region
      $region41: #{forward.27} parent=39 // pred_check
        %p285 = pneg %p106
      $region42: #{forward.27} parent=39 // pred_check_branch
        %287 = sbr.rel (%p285) target = $region44
      $region43: #{forward.27} parent=39 // pred_region
        %s288 = smul.u32 2, %s15
        %p289 = scmp.lt.s32.totalorder %s288, 3
        %s290 = scalar_select %p289, %s288, 3
        %s291 = smul.addr %s290, 4
        %s292 = scalar_lea.vmem %s3, %s291
      $region44: #{forward.27} parent=39 // pred_fallthru
        _
    $region40: #{forward.27} parent=5 // pred_fallthru
      _
  $region6: #{forward.27} parent=0 // loop_footer
    %s13 = sadd.s32 1, %s9
  $region7: #{forward.27} parent=0 // loop_footer_branch
    %8 = sbr.rel target = $region3
  $region8: #{forward.27} parent=0 // loop_exit
    _

// kernel: forward.30
$region0: #{forward.30}
  #allocation0 [shape = 'u32[]', space=smem, size = 0x4, offset = 0x4, fixed_abs, tag = 'smem constant byte address 0x4 - core index']
  #allocation1 [shape = 'u32[72,128]{1,0:T(1,128)}', space=vmem, size = 0x9000, scoped, tag = 'internal scratch']
  %s0 = inlined_call_operand.vmem [shape: bf16[128,256], index: 0, kind: input, shape index: {}]
  %s1 = inlined_call_operand.vmem [shape: bf16[256,8], index: 1, kind: input, shape index: {}]
  %s2 = inlined_call_operand.vmem [shape: f32[1,8], index: 2, kind: input, shape index: {}]
  %s3 = inlined_call_operand.vmem [shape: f32[128,8], index: 3, kind: output, shape index: {}]
  %s4 = sld [smem:[#allocation0]]
  $region45: #{forward.30} parent=0
    _
  %s6 = ssub.s32 1, %s4
  %s7 = scalar_select 0, %s6, %s4
  loop: start=0, step=1, limit=4
  $region2: #{forward.30} parent=0 // loop_pre_header
    _
  $region3: #{forward.30} parent=0 // loop_header
    %s9 = sphi 0, %s13
    %p10 = scmp.ge.s32.totalorder %s9, 4
    %s19 = sphi 0, %s21
    %s22 = sphi 0, %s19
    %s23 = sphi 0, %s22
    %s39 = sphi 0, %s23
    %s43 = sphi 0, %s43
    %s45 = sphi 0, %s43
    %s46 = sphi 0, %s45
    %s60 = sphi 0, %s46
    %s64 = sphi 0, %s64
    %s66 = sphi 0, %s64
    %s67 = sphi 0, %s66
    %s81 = sphi 0, %s67
    %s87 = sphi 0, %s89
    %s90 = sphi 0, %s87
    %s91 = sphi 0, %s90
    %s107 = sphi 0, %s91
  $region4: #{forward.30} parent=0 // loop_header_branch
    %12 = sbr.rel (%p10) target = $region8
  $region5: #{forward.30} parent=0 // loop_body
    %s14 = ssub.s32 %s9, 1
    %s15 = ssub.s32 %s9, 2
    %s16 = sadd.s32 %s9, 1
    %s17 = ssub.s32 %s9, %s16
    %p18 = scmp.eq.s32.totalorder %s17, 0
    %s20 = sadd.s32 %s19, 1
    %s21 = scalar_select %p18, %s19, %s20
    %p24 = pneg %p18
    %p25 = scmp.eq.s32.totalorder %s9, 1
    %p26 = por %p24, %p25
    %p27 = scmp.ne.s32.totalorder %s19, %s22
    %p28 = scmp.eq.s32.totalorder %s9, 0
    %p29 = por %p27, %p28
    %p30 = scmp.ne.s32.totalorder %s19, %s22
    %p31 = scmp.eq.s32.totalorder %s14, 1
    %p32 = por %p30, %p31
    %p33 = scmp.ne.s32.totalorder %s22, %s23
    %p34 = scmp.eq.s32.totalorder %s14, 0
    %p35 = por %p33, %p34
    %p36 = scmp.ne.s32.totalorder %s22, %s23
    %p37 = scmp.eq.s32.totalorder %s15, 1
    %p38 = por %p36, %p37
    %p40 = scmp.ne.s32.totalorder %s23, %s39
    %p41 = scmp.eq.s32.totalorder %s15, 0
    %p42 = por %p40, %p41
    %s44 = sadd.s32 %s43, 1
    %p47 = scmp.eq.s32.totalorder %s9, 1
    %p48 = scmp.ne.s32.totalorder %s43, %s45
    %p49 = scmp.eq.s32.totalorder %s9, 0
    %p50 = por %p48, %p49
    %p51 = scmp.ne.s32.totalorder %s43, %s45
    %p52 = scmp.eq.s32.totalorder %s14, 1
    %p53 = por %p51, %p52
    %p54 = scmp.ne.s32.totalorder %s45, %s46
    %p55 = scmp.eq.s32.totalorder %s14, 0
    %p56 = por %p54, %p55
    %p57 = scmp.ne.s32.totalorder %s45, %s46
    %p58 = scmp.eq.s32.totalorder %s15, 1
    %p59 = por %p57, %p58
    %p61 = scmp.ne.s32.totalorder %s46, %s60
    %p62 = scmp.eq.s32.totalorder %s15, 0
    %p63 = por %p61, %p62
    %s65 = sadd.s32 %s64, 1
    %p68 = scmp.eq.s32.totalorder %s9, 1
    %p69 = scmp.ne.s32.totalorder %s64, %s66
    %p70 = scmp.eq.s32.totalorder %s9, 0
    %p71 = por %p69, %p70
    %p72 = scmp.ne.s32.totalorder %s64, %s66
    %p73 = scmp.eq.s32.totalorder %s14, 1
    %p74 = por %p72, %p73
    %p75 = scmp.ne.s32.totalorder %s66, %s67
    %p76 = scmp.eq.s32.totalorder %s14, 0
    %p77 = por %p75, %p76
    %p78 = scmp.ne.s32.totalorder %s66, %s67
    %p79 = scmp.eq.s32.totalorder %s15, 1
    %p80 = por %p78, %p79
    %p82 = scmp.ne.s32.totalorder %s67, %s81
    %p83 = scmp.eq.s32.totalorder %s15, 0
    %p84 = por %p82, %p83
    %s85 = ssub.s32 %s9, %s16
    %p86 = scmp.eq.s32.totalorder %s85, 0
    %s88 = sadd.s32 %s87, 1
    %s89 = scalar_select %p86, %s87, %s88
    %p92 = pneg %p86
    %p93 = scmp.eq.s32.totalorder %s9, 1
    %p94 = por %p92, %p93
    %p95 = scmp.ne.s32.totalorder %s87, %s90
    %p96 = scmp.eq.s32.totalorder %s9, 0
    %p97 = por %p95, %p96
    %p98 = scmp.ne.s32.totalorder %s87, %s90
    %p99 = scmp.eq.s32.totalorder %s14, 1
    %p100 = por %p98, %p99
    %p101 = scmp.ne.s32.totalorder %s90, %s91
    %p102 = scmp.eq.s32.totalorder %s14, 0
    %p103 = por %p101, %p102
    %p104 = scmp.ne.s32.totalorder %s90, %s91
    %p105 = scmp.eq.s32.totalorder %s15, 1
    %p106 = por %p104, %p105
    %p108 = scmp.ne.s32.totalorder %s91, %s107
    %p109 = scmp.eq.s32.totalorder %s15, 0
    %p110 = por %p108, %p109
    %p111 = scmp.le.s32.totalorder 1, %s9
    %p112 = scmp.lt.s32.totalorder %s9, 3
    %p113 = pnand %p111, %p112
    %p114 = pneg %p113
    // Predicated region
    $region9: #{forward.30} parent=5 // pred_check
      _
    $region10: #{forward.30} parent=5 // pred_check_branch
      %116 = sbr.rel (%p113) target = $region12
    $region11: #{forward.30} parent=5 // pred_region
      %s117 = ssub.s32 %s9, 1
      // Predicated region
      $region13: #{forward.30} parent=11 // pred_check
        %p118 = pneg %p56
      $region14: #{forward.30} parent=11 // pred_check_branch
        %120 = sbr.rel (%p118) target = $region16
      $region15: #{forward.30} parent=11 // pred_region
        _
      $region16: #{forward.30} parent=11 // pred_fallthru
        _
      // Predicated region
      $region17: #{forward.30} parent=11 // pred_check
        %p121 = pneg %p77
      $region18: #{forward.30} parent=11 // pred_check_branch
        %123 = sbr.rel (%p121) target = $region20
      $region19: #{forward.30} parent=11 // pred_region
        _
      $region20: #{forward.30} parent=11 // pred_fallthru
        _
    $region12: #{forward.30} parent=5 // pred_fallthru
      _
    %p124 = scmp.lt.s32.totalorder %s9, 2
    // Predicated region
    $region21: #{forward.30} parent=5 // pred_check
      %p125 = pneg %p124
    $region22: #{forward.30} parent=5 // pred_check_branch
      %127 = sbr.rel (%p125) target = $region24
    $region23: #{forward.30} parent=5 // pred_region
      // Predicated region
      $region25: #{forward.30} parent=23 // pred_check
        %p128 = pneg %p29
      $region26: #{forward.30} parent=23 // pred_check_branch
        %130 = sbr.rel (%p128) target = $region28
      $region27: #{forward.30} parent=23 // pred_region
        %s131 = smul.u32 8, %s9
        %p132 = scmp.lt.s32.totalorder %s131, 15
        %s133 = scalar_select %p132, %s131, 15
        %s134 = smul.addr %s133, 2
        %s135 = smul.addr %s134, 4
        %s136 = scalar_lea.vmem %s0, %s135
        %s137 = smul.u32 8, %s9
      $region28: #{forward.30} parent=23 // pred_fallthru
        _
    $region24: #{forward.30} parent=5 // pred_fallthru
      _
    %p138 = scmp.le.s32.totalorder 1, %s9
    %p139 = scmp.lt.s32.totalorder %s9, 3
    %p140 = pnand %p138, %p139
    %p141 = pneg %p140
    // Predicated region
    $region29: #{forward.30} parent=5 // pred_check
      _
    $region30: #{forward.30} parent=5 // pred_check_branch
      %143 = sbr.rel (%p140) target = $region32
    $region31: #{forward.30} parent=5 // pred_region
      %s144 = ssub.s32 %s9, 1
      %s145 = smul.u32 8, %s14
      %p146 = scmp.lt.s32.totalorder %s145, 15
      %s147 = scalar_select %p146, %s145, 15
      %s148 = smul.addr %s147, 2
      %s149 = smul.addr %s148, 4
      %s150 = scalar_lea.vmem %s0, %s149
      %p151 = pneg %p35
      %p152 = pneg %p32
      %p153 = pneg %p56
      %p154 = pneg %p53
      %p155 = pneg %p77
      %p156 = pneg %p74
      %p157 = pneg %p103
      %p158 = pneg %p100
      %s159 = smul.u32 8, %s14
      %p160 = scmp.lt.s32.totalorder %s159, 15
      %s161 = scalar_select %p160, %s159, 15
      %s162 = smul.addr %s161, 8
      %s163 = scalar_lea.vmem %s3, %s162
      %s164 = smul.u32 8, %s14
      %p165 = scmp.lt.s32.totalorder %s164, 15
      %s166 = scalar_select %p165, %s164, 15
      %s167 = smul.addr %s166, 2
      %s168 = smul.addr %s167, 4
      %s169 = scalar_lea.vmem %s0, %s168
      %s170 = smul.u32 8, %s14
      %s171 = smul.u32 8, %s14
      %p172 = scmp.lt.s32.totalorder %s171, 15
      %s173 = scalar_select %p172, %s171, 15
      %s174 = smul.addr %s173, 8
      %s175 = scalar_lea.vmem %s3, %s174
      %s176 = smul.u32 8, %s14
      %v177 = vld [vmem:[%s169] sm:$0xff]
      %v178 = vld [vmem:[%s169 + $0x8] sm:$0xff]
      %v179 = vld [vmem:[%s169 + $0x10] sm:$0xff]
      %v180 = vld [vmem:[%s169 + $0x18] sm:$0xff]
      %v181 = vld [vmem:[%s169 + $0x20] sm:$0xff]
      %v182 = vld [vmem:[%s169 + $0x28] sm:$0xff]
      %v183 = vld [vmem:[%s169 + $0x30] sm:$0xff]
      %v184 = vld [vmem:[%s169 + $0x38] sm:$0xff]
      %v185 = vld [vmem:[%s1] sm:$0xf]
      %v186 = vld [vmem:[%s1 + $0x4] sm:$0xf]
      %v187 = vld [vmem:[%s1 + $0x8] sm:$0xf]
      %v188 = vld [vmem:[%s1 + $0xc] sm:$0xf]
      %v189 = vld [vmem:[%s1 + $0x10] sm:$0xf]
      %v190 = vld [vmem:[%s1 + $0x14] sm:$0xf]
      %v191 = vld [vmem:[%s1 + $0x18] sm:$0xf]
      %v192 = vld [vmem:[%s1 + $0x1c] sm:$0xf]
      %v193 = vld [vmem:[%s1 + $0x20] sm:$0xf]
      %v194 = vld [vmem:[%s1 + $0x24] sm:$0xf]
      %v195 = vld [vmem:[%s1 + $0x28] sm:$0xf]
      %v196 = vld [vmem:[%s1 + $0x2c] sm:$0xf]
      %v197 = vld [vmem:[%s1 + $0x30] sm:$0xf]
      %v198 = vld [vmem:[%s1 + $0x34] sm:$0xf]
      %v199 = vld [vmem:[%s1 + $0x38] sm:$0xf]
      %v200 = vld [vmem:[%s1 + $0x3c] sm:$0xf]
      %v201 = vld [vmem:[%s1 + $0x40] sm:$0xf]
      %v202 = vld [vmem:[%s1 + $0x44] sm:$0xf]
      %v203 = vld [vmem:[%s1 + $0x48] sm:$0xf]
      %v204 = vld [vmem:[%s1 + $0x4c] sm:$0xf]
      %v205 = vld [vmem:[%s1 + $0x50] sm:$0xf]
      %v206 = vld [vmem:[%s1 + $0x54] sm:$0xf]
      %v207 = vld [vmem:[%s1 + $0x58] sm:$0xf]
      %v208 = vld [vmem:[%s1 + $0x5c] sm:$0xf]
      %v209 = vld [vmem:[%s1 + $0x60] sm:$0xf]
      %v210 = vld [vmem:[%s1 + $0x64] sm:$0xf]
      %v211 = vld [vmem:[%s1 + $0x68] sm:$0xf]
      %v212 = vld [vmem:[%s1 + $0x6c] sm:$0xf]
      %v213 = vld [vmem:[%s1 + $0x70] sm:$0xf]
      %v214 = vld [vmem:[%s1 + $0x74] sm:$0xf]
      %v215 = vld [vmem:[%s1 + $0x78] sm:$0xf]
      %v216 = vld [vmem:[%s1 + $0x7c] sm:$0xf]
      %v217 = vld [vmem:[%s2] sm:$0x1]
      %v219 = vperm.slane %v217, 0
      %v229 = vunpack.c.l.b16 %v177
      %v230 = vunpack.c.h.b16 %v177
      %v231 = vunpack.c.l.b16 %v178
      %v232 = vunpack.c.h.b16 %v178
      %v233 = vunpack.c.l.b16 %v179
      %v234 = vunpack.c.h.b16 %v179
      %v235 = vunpack.c.l.b16 %v180
      %v236 = vunpack.c.h.b16 %v180
      %v237 = vunpack.c.l.b16 %v181
      %v238 = vunpack.c.h.b16 %v181
      %v239 = vunpack.c.l.b16 %v182
      %v240 = vunpack.c.h.b16 %v182
      %v241 = vunpack.c.l.b16 %v183
      %v242 = vunpack.c.h.b16 %v183
      %v243 = vunpack.c.l.b16 %v184
      %v244 = vunpack.c.h.b16 %v184
      %v245 = vpack.c.b16 %v231, %v229
      %v246 = vpack.c.b16 %v232, %v230
      %v247 = vpack.c.b16 %v235, %v233
      %v248 = vpack.c.b16 %v236, %v234
      %v249 = vpack.c.b16 %v239, %v237
      %v250 = vpack.c.b16 %v240, %v238
      %v251 = vpack.c.b16 %v243, %v241
      %v252 = vpack.c.b16 %v244, %v242
      %v293 = vunpack.c.l.b16 %v185
      %v294 = vunpack.c.l.b16 %v186
      %v295 = vunpack.c.l.b16 %v187
      %v296 = vunpack.c.l.b16 %v188
      %v297 = vunpack.c.l.b16 %v189
      %v298 = vunpack.c.l.b16 %v190
      %v299 = vunpack.c.l.b16 %v191
      %v300 = vunpack.c.l.b16 %v192
      %v301 = vunpack.c.l.b16 %v193
      %v302 = vunpack.c.l.b16 %v194
      %v303 = vunpack.c.l.b16 %v195
      %v304 = vunpack.c.l.b16 %v196
      %v305 = vunpack.c.l.b16 %v197
      %v306 = vunpack.c.l.b16 %v198
      %v307 = vunpack.c.l.b16 %v199
      %v308 = vunpack.c.l.b16 %v200
      %v309 = vunpack.c.l.b16 %v201
      %v310 = vunpack.c.l.b16 %v202
      %v311 = vunpack.c.l.b16 %v203
      %v312 = vunpack.c.l.b16 %v204
      %v313 = vunpack.c.l.b16 %v205
      %v314 = vunpack.c.l.b16 %v206
      %v315 = vunpack.c.l.b16 %v207
      %v316 = vunpack.c.l.b16 %v208
      %v317 = vunpack.c.l.b16 %v209
      %v318 = vunpack.c.l.b16 %v210
      %v319 = vunpack.c.l.b16 %v211
      %v320 = vunpack.c.l.b16 %v212
      %v321 = vunpack.c.l.b16 %v213
      %v322 = vunpack.c.l.b16 %v214
      %v323 = vunpack.c.l.b16 %v215
      %v324 = vunpack.c.l.b16 %v216
      %v325 = vpack.c.b16 %v294, %v293
      %v326 = vpack.c.b16 %v296, %v295
      %v327 = vpack.c.b16 %v298, %v297
      %v328 = vpack.c.b16 %v300, %v299
      %v329 = vpack.c.b16 %v302, %v301
      %v330 = vpack.c.b16 %v304, %v303
      %v331 = vpack.c.b16 %v306, %v305
      %v332 = vpack.c.b16 %v308, %v307
      %v333 = vpack.c.b16 %v310, %v309
      %v334 = vpack.c.b16 %v312, %v311
      %v335 = vpack.c.b16 %v314, %v313
      %v336 = vpack.c.b16 %v316, %v315
      %v337 = vpack.c.b16 %v318, %v317
      %v338 = vpack.c.b16 %v320, %v319
      %v339 = vpack.c.b16 %v322, %v321
      %v340 = vpack.c.b16 %v324, %v323
      %357 = vmatpush.bf16.msra.mxu0 %v332
      %358 = vmatpush.bf16.msra.mxu0 %v331
      %359 = vmatpush.bf16.msra.mxu0 %v330
      %360 = vmatpush.bf16.msra.mxu0 %v329
      %361 = vmatpush.bf16.msra.mxu0 %v328
      %362 = vmatpush.bf16.msra.mxu0 %v327
      %363 = vmatpush.bf16.msra.mxu0 %v326
      %364 = vmatpush.bf16.msra.mxu0 %v325
      %365 = vmatmul.bf16.gmra.mxu0 %v245
      %v366 = vpop.f32.mrf.mxu0
      %v367 = vadd.f32 %v219, %v366
      %v368 = vpop.f32.mrf.mxu0
      %v369 = vadd.f32 %v219, %v368
      %370 = vmatmul.bf16.gmra.mxu0 %v247
      %v371 = vpop.f32.mrf.mxu0
      %v372 = vadd.f32 %v219, %v371
      %v373 = vpop.f32.mrf.mxu0
      %v374 = vadd.f32 %v219, %v373
      %375 = vmatmul.bf16.gmra.mxu0 %v249
      %v376 = vpop.f32.mrf.mxu0
      %v377 = vadd.f32 %v219, %v376
      %v378 = vpop.f32.mrf.mxu0
      %v379 = vadd.f32 %v219, %v378
      %380 = vmatmul.bf16.gmra.mxu0 %v251
      %v381 = vpop.f32.mrf.mxu0
      %v382 = vadd.f32 %v219, %v381
      %v383 = vpop.f32.mrf.mxu0
      %v384 = vadd.f32 %v219, %v383
      %385 = vdwg.mxu0
      %386 = vmatpush.bf16.msra.mxu0 %v340
      %387 = vmatpush.bf16.msra.mxu0 %v339
      %388 = vmatpush.bf16.msra.mxu0 %v338
      %389 = vmatpush.bf16.msra.mxu0 %v337
      %390 = vmatpush.bf16.msra.mxu0 %v336
      %391 = vmatpush.bf16.msra.mxu0 %v335
      %392 = vmatpush.bf16.msra.mxu0 %v334
      %393 = vmatpush.bf16.msra.mxu0 %v333
      %394 = vmatmul.bf16.gmra.mxu0 %v246
      %v395 = vpop.f32.mrf.mxu0
      %v396 = vadd.f32 %v367, %v395
      %v397 = vpop.f32.mrf.mxu0
      %v398 = vadd.f32 %v369, %v397
      %399 = vmatmul.bf16.gmra.mxu0 %v248
      %v400 = vpop.f32.mrf.mxu0
      %v401 = vadd.f32 %v372, %v400
      %v402 = vpop.f32.mrf.mxu0
      %v403 = vadd.f32 %v374, %v402
      %404 = vmatmul.bf16.gmra.mxu0 %v250
      %v405 = vpop.f32.mrf.mxu0
      %v406 = vadd.f32 %v377, %v405
      %v407 = vpop.f32.mrf.mxu0
      %v408 = vadd.f32 %v379, %v407
      %409 = vmatmul.bf16.gmra.mxu0 %v252
      %v410 = vpop.f32.mrf.mxu0
      %v411 = vadd.f32 %v382, %v410
      %v412 = vpop.f32.mrf.mxu0
      %v413 = vadd.f32 %v384, %v412
      %414 = vdwg.mxu0
      %vm415 = vcmask 64512
      %416 = vst.msk [vmem:[%s175] sm:$0xff] %vm415, %v396
      %417 = vst.msk [vmem:[%s175 + $0x8] sm:$0xff] %vm415, %v398
      %418 = vst.msk [vmem:[%s175 + $0x10] sm:$0xff] %vm415, %v401
      %419 = vst.msk [vmem:[%s175 + $0x18] sm:$0xff] %vm415, %v403
      %420 = vst.msk [vmem:[%s175 + $0x20] sm:$0xff] %vm415, %v406
      %421 = vst.msk [vmem:[%s175 + $0x28] sm:$0xff] %vm415, %v408
      %422 = vst.msk [vmem:[%s175 + $0x30] sm:$0xff] %vm415, %v411
      %423 = vst.msk [vmem:[%s175 + $0x38] sm:$0xff] %vm415, %v413
      %s424 = smul.u32 8, %s14
      %p425 = scmp.lt.s32.totalorder %s424, 15
      %s426 = scalar_select %p425, %s424, 15
      %s427 = smul.addr %s426, 8
      %s428 = scalar_lea.vmem %s3, %s427
      // Predicated region
      $region33: #{forward.30} parent=31 // pred_check
        %p429 = pneg %p100
      $region34: #{forward.30} parent=31 // pred_check_branch
        %431 = sbr.rel (%p429) target = $region36
      $region35: #{forward.30} parent=31 // pred_region
        %s432 = smul.u32 8, %s14
      $region36: #{forward.30} parent=31 // pred_fallthru
        _
    $region32: #{forward.30} parent=5 // pred_fallthru
      _
    %p433 = scmp.le.s32.totalorder 2, %s9
    // Predicated region
    $region37: #{forward.30} parent=5 // pred_check
      %p434 = pneg %p433
    $region38: #{forward.30} parent=5 // pred_check_branch
      %436 = sbr.rel (%p434) target = $region40
    $region39: #{forward.30} parent=5 // pred_region
      %s437 = ssub.s32 %s9, 2
      // Predicated region
      $region41: #{forward.30} parent=39 // pred_check
        %p438 = pneg %p106
      $region42: #{forward.30} parent=39 // pred_check_branch
        %440 = sbr.rel (%p438) target = $region44
      $region43: #{forward.30} parent=39 // pred_region
        %s441 = smul.u32 8, %s15
        %p442 = scmp.lt.s32.totalorder %s441, 15
        %s443 = scalar_select %p442, %s441, 15
        %s444 = smul.addr %s443, 8
        %s445 = scalar_lea.vmem %s3, %s444
      $region44: #{forward.30} parent=39 // pred_fallthru
        _
    $region40: #{forward.30} parent=5 // pred_fallthru
      _
  $region6: #{forward.30} parent=0 // loop_footer
    %s13 = sadd.s32 1, %s9
  $region7: #{forward.30} parent=0 // loop_footer_branch
    %8 = sbr.rel target = $region3
  $region8: #{forward.30} parent=0 // loop_exit
    _

// kernel: forward.31
$region0: #{forward.31}
  #allocation0 [shape = 'u32[]', space=smem, size = 0x4, offset = 0x4, fixed_abs, tag = 'smem constant byte address 0x4 - core index']
  #allocation1 [shape = 'u32[72,128]{1,0:T(1,128)}', space=vmem, size = 0x9000, scoped, tag = 'internal scratch']
  %s0 = inlined_call_operand.vmem [shape: bf16[128,128], index: 0, kind: input, shape index: {}]
  %s1 = inlined_call_operand.vmem [shape: bf16[128,8], index: 1, kind: input, shape index: {}]
  %s2 = inlined_call_operand.vmem [shape: f32[1,8], index: 2, kind: input, shape index: {}]
  %s3 = inlined_call_operand.vmem [shape: f32[128,8], index: 3, kind: output, shape index: {}]
  %s4 = sld [smem:[#allocation0]]
  $region45: #{forward.31} parent=0
    _
  %s6 = ssub.s32 1, %s4
  %s7 = scalar_select 0, %s6, %s4
  loop: start=0, step=1, limit=4
  $region2: #{forward.31} parent=0 // loop_pre_header
    _
  $region3: #{forward.31} parent=0 // loop_header
    %s9 = sphi 0, %s13
    %p10 = scmp.ge.s32.totalorder %s9, 4
    %s19 = sphi 0, %s21
    %s22 = sphi 0, %s19
    %s23 = sphi 0, %s22
    %s39 = sphi 0, %s23
    %s43 = sphi 0, %s43
    %s45 = sphi 0, %s43
    %s46 = sphi 0, %s45
    %s60 = sphi 0, %s46
    %s64 = sphi 0, %s64
    %s66 = sphi 0, %s64
    %s67 = sphi 0, %s66
    %s81 = sphi 0, %s67
    %s87 = sphi 0, %s89
    %s90 = sphi 0, %s87
    %s91 = sphi 0, %s90
    %s107 = sphi 0, %s91
  $region4: #{forward.31} parent=0 // loop_header_branch
    %12 = sbr.rel (%p10) target = $region8
  $region5: #{forward.31} parent=0 // loop_body
    %s14 = ssub.s32 %s9, 1
    %s15 = ssub.s32 %s9, 2
    %s16 = sadd.s32 %s9, 1
    %s17 = ssub.s32 %s9, %s16
    %p18 = scmp.eq.s32.totalorder %s17, 0
    %s20 = sadd.s32 %s19, 1
    %s21 = scalar_select %p18, %s19, %s20
    %p24 = pneg %p18
    %p25 = scmp.eq.s32.totalorder %s9, 1
    %p26 = por %p24, %p25
    %p27 = scmp.ne.s32.totalorder %s19, %s22
    %p28 = scmp.eq.s32.totalorder %s9, 0
    %p29 = por %p27, %p28
    %p30 = scmp.ne.s32.totalorder %s19, %s22
    %p31 = scmp.eq.s32.totalorder %s14, 1
    %p32 = por %p30, %p31
    %p33 = scmp.ne.s32.totalorder %s22, %s23
    %p34 = scmp.eq.s32.totalorder %s14, 0
    %p35 = por %p33, %p34
    %p36 = scmp.ne.s32.totalorder %s22, %s23
    %p37 = scmp.eq.s32.totalorder %s15, 1
    %p38 = por %p36, %p37
    %p40 = scmp.ne.s32.totalorder %s23, %s39
    %p41 = scmp.eq.s32.totalorder %s15, 0
    %p42 = por %p40, %p41
    %s44 = sadd.s32 %s43, 1
    %p47 = scmp.eq.s32.totalorder %s9, 1
    %p48 = scmp.ne.s32.totalorder %s43, %s45
    %p49 = scmp.eq.s32.totalorder %s9, 0
    %p50 = por %p48, %p49
    %p51 = scmp.ne.s32.totalorder %s43, %s45
    %p52 = scmp.eq.s32.totalorder %s14, 1
    %p53 = por %p51, %p52
    %p54 = scmp.ne.s32.totalorder %s45, %s46
    %p55 = scmp.eq.s32.totalorder %s14, 0
    %p56 = por %p54, %p55
    %p57 = scmp.ne.s32.totalorder %s45, %s46
    %p58 = scmp.eq.s32.totalorder %s15, 1
    %p59 = por %p57, %p58
    %p61 = scmp.ne.s32.totalorder %s46, %s60
    %p62 = scmp.eq.s32.totalorder %s15, 0
    %p63 = por %p61, %p62
    %s65 = sadd.s32 %s64, 1
    %p68 = scmp.eq.s32.totalorder %s9, 1
    %p69 = scmp.ne.s32.totalorder %s64, %s66
    %p70 = scmp.eq.s32.totalorder %s9, 0
    %p71 = por %p69, %p70
    %p72 = scmp.ne.s32.totalorder %s64, %s66
    %p73 = scmp.eq.s32.totalorder %s14, 1
    %p74 = por %p72, %p73
    %p75 = scmp.ne.s32.totalorder %s66, %s67
    %p76 = scmp.eq.s32.totalorder %s14, 0
    %p77 = por %p75, %p76
    %p78 = scmp.ne.s32.totalorder %s66, %s67
    %p79 = scmp.eq.s32.totalorder %s15, 1
    %p80 = por %p78, %p79
    %p82 = scmp.ne.s32.totalorder %s67, %s81
    %p83 = scmp.eq.s32.totalorder %s15, 0
    %p84 = por %p82, %p83
    %s85 = ssub.s32 %s9, %s16
    %p86 = scmp.eq.s32.totalorder %s85, 0
    %s88 = sadd.s32 %s87, 1
    %s89 = scalar_select %p86, %s87, %s88
    %p92 = pneg %p86
    %p93 = scmp.eq.s32.totalorder %s9, 1
    %p94 = por %p92, %p93
    %p95 = scmp.ne.s32.totalorder %s87, %s90
    %p96 = scmp.eq.s32.totalorder %s9, 0
    %p97 = por %p95, %p96
    %p98 = scmp.ne.s32.totalorder %s87, %s90
    %p99 = scmp.eq.s32.totalorder %s14, 1
    %p100 = por %p98, %p99
    %p101 = scmp.ne.s32.totalorder %s90, %s91
    %p102 = scmp.eq.s32.totalorder %s14, 0
    %p103 = por %p101, %p102
    %p104 = scmp.ne.s32.totalorder %s90, %s91
    %p105 = scmp.eq.s32.totalorder %s15, 1
    %p106 = por %p104, %p105
    %p108 = scmp.ne.s32.totalorder %s91, %s107
    %p109 = scmp.eq.s32.totalorder %s15, 0
    %p110 = por %p108, %p109
    %p111 = scmp.le.s32.totalorder 1, %s9
    %p112 = scmp.lt.s32.totalorder %s9, 3
    %p113 = pnand %p111, %p112
    %p114 = pneg %p113
    // Predicated region
    $region9: #{forward.31} parent=5 // pred_check
      _
    $region10: #{forward.31} parent=5 // pred_check_branch
      %116 = sbr.rel (%p113) target = $region12
    $region11: #{forward.31} parent=5 // pred_region
      %s117 = ssub.s32 %s9, 1
      // Predicated region
      $region13: #{forward.31} parent=11 // pred_check
        %p118 = pneg %p56
      $region14: #{forward.31} parent=11 // pred_check_branch
        %120 = sbr.rel (%p118) target = $region16
      $region15: #{forward.31} parent=11 // pred_region
        _
      $region16: #{forward.31} parent=11 // pred_fallthru
        _
      // Predicated region
      $region17: #{forward.31} parent=11 // pred_check
        %p121 = pneg %p77
      $region18: #{forward.31} parent=11 // pred_check_branch
        %123 = sbr.rel (%p121) target = $region20
      $region19: #{forward.31} parent=11 // pred_region
        _
      $region20: #{forward.31} parent=11 // pred_fallthru
        _
    $region12: #{forward.31} parent=5 // pred_fallthru
      _
    %p124 = scmp.lt.s32.totalorder %s9, 2
    // Predicated region
    $region21: #{forward.31} parent=5 // pred_check
      %p125 = pneg %p124
    $region22: #{forward.31} parent=5 // pred_check_branch
      %127 = sbr.rel (%p125) target = $region24
    $region23: #{forward.31} parent=5 // pred_region
      // Predicated region
      $region25: #{forward.31} parent=23 // pred_check
        %p128 = pneg %p29
      $region26: #{forward.31} parent=23 // pred_check_branch
        %130 = sbr.rel (%p128) target = $region28
      $region27: #{forward.31} parent=23 // pred_region
        %s131 = smul.u32 8, %s9
        %p132 = scmp.lt.s32.totalorder %s131, 15
        %s133 = scalar_select %p132, %s131, 15
        %s134 = smul.addr %s133, 4
        %s135 = scalar_lea.vmem %s0, %s134
        %s136 = smul.u32 8, %s9
      $region28: #{forward.31} parent=23 // pred_fallthru
        _
    $region24: #{forward.31} parent=5 // pred_fallthru
      _
    %p137 = scmp.le.s32.totalorder 1, %s9
    %p138 = scmp.lt.s32.totalorder %s9, 3
    %p139 = pnand %p137, %p138
    %p140 = pneg %p139
    // Predicated region
    $region29: #{forward.31} parent=5 // pred_check
      _
    $region30: #{forward.31} parent=5 // pred_check_branch
      %142 = sbr.rel (%p139) target = $region32
    $region31: #{forward.31} parent=5 // pred_region
      %s143 = ssub.s32 %s9, 1
      %s144 = smul.u32 8, %s14
      %p145 = scmp.lt.s32.totalorder %s144, 15
      %s146 = scalar_select %p145, %s144, 15
      %s147 = smul.addr %s146, 4
      %s148 = scalar_lea.vmem %s0, %s147
      %p149 = pneg %p35
      %p150 = pneg %p32
      %p151 = pneg %p56
      %p152 = pneg %p53
      %p153 = pneg %p77
      %p154 = pneg %p74
      %p155 = pneg %p103
      %p156 = pneg %p100
      %s157 = smul.u32 8, %s14
      %p158 = scmp.lt.s32.totalorder %s157, 15
      %s159 = scalar_select %p158, %s157, 15
      %s160 = smul.addr %s159, 8
      %s161 = scalar_lea.vmem %s3, %s160
      %s162 = smul.u32 8, %s14
      %p163 = scmp.lt.s32.totalorder %s162, 15
      %s164 = scalar_select %p163, %s162, 15
      %s165 = smul.addr %s164, 4
      %s166 = scalar_lea.vmem %s0, %s165
      %s167 = smul.u32 8, %s14
      %s168 = smul.u32 8, %s14
      %p169 = scmp.lt.s32.totalorder %s168, 15
      %s170 = scalar_select %p169, %s168, 15
      %s171 = smul.addr %s170, 8
      %s172 = scalar_lea.vmem %s3, %s171
      %s173 = smul.u32 8, %s14
      %v174 = vld [vmem:[%s166] sm:$0xf]
      %v175 = vld [vmem:[%s166 + $0x4] sm:$0xf]
      %v176 = vld [vmem:[%s166 + $0x8] sm:$0xf]
      %v177 = vld [vmem:[%s166 + $0xc] sm:$0xf]
      %v178 = vld [vmem:[%s166 + $0x10] sm:$0xf]
      %v179 = vld [vmem:[%s166 + $0x14] sm:$0xf]
      %v180 = vld [vmem:[%s166 + $0x18] sm:$0xf]
      %v181 = vld [vmem:[%s166 + $0x1c] sm:$0xf]
      %v182 = vld [vmem:[%s1] sm:$0xf]
      %v183 = vld [vmem:[%s1 + $0x4] sm:$0xf]
      %v184 = vld [vmem:[%s1 + $0x8] sm:$0xf]
      %v185 = vld [vmem:[%s1 + $0xc] sm:$0xf]
      %v186 = vld [vmem:[%s1 + $0x10] sm:$0xf]
      %v187 = vld [vmem:[%s1 + $0x14] sm:$0xf]
      %v188 = vld [vmem:[%s1 + $0x18] sm:$0xf]
      %v189 = vld [vmem:[%s1 + $0x1c] sm:$0xf]
      %v190 = vld [vmem:[%s1 + $0x20] sm:$0xf]
      %v191 = vld [vmem:[%s1 + $0x24] sm:$0xf]
      %v192 = vld [vmem:[%s1 + $0x28] sm:$0xf]
      %v193 = vld [vmem:[%s1 + $0x2c] sm:$0xf]
      %v194 = vld [vmem:[%s1 + $0x30] sm:$0xf]
      %v195 = vld [vmem:[%s1 + $0x34] sm:$0xf]
      %v196 = vld [vmem:[%s1 + $0x38] sm:$0xf]
      %v197 = vld [vmem:[%s1 + $0x3c] sm:$0xf]
      %v198 = vld [vmem:[%s2] sm:$0x1]
      %v200 = vperm.slane %v198, 0
      %v210 = vunpack.c.l.b16 %v174
      %v211 = vunpack.c.l.b16 %v175
      %v212 = vunpack.c.l.b16 %v176
      %v213 = vunpack.c.l.b16 %v177
      %v214 = vunpack.c.l.b16 %v178
      %v215 = vunpack.c.l.b16 %v179
      %v216 = vunpack.c.l.b16 %v180
      %v217 = vunpack.c.l.b16 %v181
      %v218 = vpack.c.b16 %v211, %v210
      %v219 = vpack.c.b16 %v213, %v212
      %v220 = vpack.c.b16 %v215, %v214
      %v221 = vpack.c.b16 %v217, %v216
      %v242 = vunpack.c.l.b16 %v182
      %v243 = vunpack.c.l.b16 %v183
      %v244 = vunpack.c.l.b16 %v184
      %v245 = vunpack.c.l.b16 %v185
      %v246 = vunpack.c.l.b16 %v186
      %v247 = vunpack.c.l.b16 %v187
      %v248 = vunpack.c.l.b16 %v188
      %v249 = vunpack.c.l.b16 %v189
      %v250 = vunpack.c.l.b16 %v190
      %v251 = vunpack.c.l.b16 %v191
      %v252 = vunpack.c.l.b16 %v192
      %v253 = vunpack.c.l.b16 %v193
      %v254 = vunpack.c.l.b16 %v194
      %v255 = vunpack.c.l.b16 %v195
      %v256 = vunpack.c.l.b16 %v196
      %v257 = vunpack.c.l.b16 %v197
      %v258 = vpack.c.b16 %v243, %v242
      %v259 = vpack.c.b16 %v245, %v244
      %v260 = vpack.c.b16 %v247, %v246
      %v261 = vpack.c.b16 %v249, %v248
      %v262 = vpack.c.b16 %v251, %v250
      %v263 = vpack.c.b16 %v253, %v252
      %v264 = vpack.c.b16 %v255, %v254
      %v265 = vpack.c.b16 %v257, %v256
      %274 = vmatpush.bf16.msra.mxu0 %v265
      %275 = vmatpush.bf16.msra.mxu0 %v264
      %276 = vmatpush.bf16.msra.mxu0 %v263
      %277 = vmatpush.bf16.msra.mxu0 %v262
      %278 = vmatpush.bf16.msra.mxu0 %v261
      %279 = vmatpush.bf16.msra.mxu0 %v260
      %280 = vmatpush.bf16.msra.mxu0 %v259
      %281 = vmatpush.bf16.msra.mxu0 %v258
      %282 = vmatmul.bf16.gmra.mxu0 %v218
      %v283 = vpop.f32.mrf.mxu0
      %v284 = vadd.f32 %v200, %v283
      %v285 = vpop.f32.mrf.mxu0
      %v286 = vadd.f32 %v200, %v285
      %287 = vmatmul.bf16.gmra.mxu0 %v219
      %v288 = vpop.f32.mrf.mxu0
      %v289 = vadd.f32 %v200, %v288
      %v290 = vpop.f32.mrf.mxu0
      %v291 = vadd.f32 %v200, %v290
      %292 = vmatmul.bf16.gmra.mxu0 %v220
      %v293 = vpop.f32.mrf.mxu0
      %v294 = vadd.f32 %v200, %v293
      %v295 = vpop.f32.mrf.mxu0
      %v296 = vadd.f32 %v200, %v295
      %297 = vmatmul.bf16.gmra.mxu0 %v221
      %v298 = vpop.f32.mrf.mxu0
      %v299 = vadd.f32 %v200, %v298
      %v300 = vpop.f32.mrf.mxu0
      %v301 = vadd.f32 %v200, %v300
      %302 = vdwg.mxu0
      %vm303 = vcmask 64512
      %304 = vst.msk [vmem:[%s172] sm:$0xff] %vm303, %v284
      %305 = vst.msk [vmem:[%s172 + $0x8] sm:$0xff] %vm303, %v286
      %306 = vst.msk [vmem:[%s172 + $0x10] sm:$0xff] %vm303, %v289
      %307 = vst.msk [vmem:[%s172 + $0x18] sm:$0xff] %vm303, %v291
      %308 = vst.msk [vmem:[%s172 + $0x20] sm:$0xff] %vm303, %v294
      %309 = vst.msk [vmem:[%s172 + $0x28] sm:$0xff] %vm303, %v296
      %310 = vst.msk [vmem:[%s172 + $0x30] sm:$0xff] %vm303, %v299
      %311 = vst.msk [vmem:[%s172 + $0x38] sm:$0xff] %vm303, %v301
      %s312 = smul.u32 8, %s14
      %p313 = scmp.lt.s32.totalorder %s312, 15
      %s314 = scalar_select %p313, %s312, 15
      %s315 = smul.addr %s314, 8
      %s316 = scalar_lea.vmem %s3, %s315
      // Predicated region
      $region33: #{forward.31} parent=31 // pred_check
        %p317 = pneg %p100
      $region34: #{forward.31} parent=31 // pred_check_branch
        %319 = sbr.rel (%p317) target = $region36
      $region35: #{forward.31} parent=31 // pred_region
        %s320 = smul.u32 8, %s14
      $region36: #{forward.31} parent=31 // pred_fallthru
        _
    $region32: #{forward.31} parent=5 // pred_fallthru
      _
    %p321 = scmp.le.s32.totalorder 2, %s9
    // Predicated region
    $region37: #{forward.31} parent=5 // pred_check
      %p322 = pneg %p321
    $region38: #{forward.31} parent=5 // pred_check_branch
      %324 = sbr.rel (%p322) target = $region40
    $region39: #{forward.31} parent=5 // pred_region
      %s325 = ssub.s32 %s9, 2
      // Predicated region
      $region41: #{forward.31} parent=39 // pred_check
        %p326 = pneg %p106
      $region42: #{forward.31} parent=39 // pred_check_branch
        %328 = sbr.rel (%p326) target = $region44
      $region43: #{forward.31} parent=39 // pred_region
        %s329 = smul.u32 8, %s15
        %p330 = scmp.lt.s32.totalorder %s329, 15
        %s331 = scalar_select %p330, %s329, 15
        %s332 = smul.addr %s331, 8
        %s333 = scalar_lea.vmem %s3, %s332
      $region44: #{forward.31} parent=39 // pred_fallthru
        _
    $region40: #{forward.31} parent=5 // pred_fallthru
      _
  $region6: #{forward.31} parent=0 // loop_footer
    %s13 = sadd.s32 1, %s9
  $region7: #{forward.31} parent=0 // loop_footer_branch
    %8 = sbr.rel target = $region3
  $region8: #{forward.31} parent=0 // loop_exit
    _

</llo_original>
